<compile_context>
chip_gen: v6e
topology: v6e:2x2x1
jax: 0.10.0
libtpu: 0.0.40
codegen_flags: <defaults>
</compile_context>

<pallas_src>
import functools
import math

import jax
import jax.numpy as jnp
from jax.experimental import pallas as pl
from jax.experimental.pallas import tpu as pltpu


def _round_up(v, m):
    return (v + m - 1) // m * m


def _fused_block_kernel(num_layers, heads, head_dim, batch_tile,
                        x_ref, y_ref,
                        wq_ref, wkv_ref, wo_ref, w1_ref, w2_ref, pv_ref,
                        out_ref, aw_ref,
                        x_carry):
    layer = pl.program_id(1)
    Lq, E = x_ref.shape[1], x_ref.shape[2]
    Lk = y_ref.shape[1]
    H = w1_ref.shape[2]
    Mq = batch_tile * Lq
    Mk = batch_tile * Lk

    # Initialize the carried hidden state for this batch tile at the first layer.
    @pl.when(layer == 0)
    def _():
        x_carry[...] = x_ref[...].reshape(Mq, E).astype(jnp.float32)

    x = x_carry[...]                                        # (Mq, E) f32 hidden state
    y_bf = y_ref[...].reshape(Mk, E).astype(jnp.bfloat16)   # key/value source

    # Packed per-layer small params: one lane-padded row per vector.
    pv = pv_ref[0]                                          # (9, PAD) f32
    bq  = pv[0:1, :E]          # 1/sqrt(head_dim) already folded into wq & bq
    bkv = pv[1:2, :2 * E]
    bo  = pv[2:3, :E]
    g1  = pv[3:4, :E]
    bt1 = pv[4:5, :E]
    g2  = pv[5:6, :E]
    bt2 = pv[6:7, :E]
    b1  = pv[7:8, :H]
    b2  = pv[8:9, :E]

    x_bf = x.astype(jnp.bfloat16)

    # Full-width fused projections: single MXU pushes (bf16 in, f32 accum).
    q = jnp.dot(x_bf, wq_ref[0], preferred_element_type=jnp.float32) + bq     # (Mq, E)
    kv = jnp.dot(y_bf, wkv_ref[0], preferred_element_type=jnp.float32) + bkv  # (Mk, 2E)
    k = kv[:, :E]
    v = kv[:, E:]

    # Split heads only for the score / context einsums.
    def split_heads(t, L):
        return (t.reshape(batch_tile, L, heads, head_dim)
                 .transpose(0, 2, 1, 3)
                 .reshape(batch_tile * heads, L, head_dim))

    qh = split_heads(q, Lq).astype(jnp.bfloat16)
    kh = split_heads(k, Lk).astype(jnp.bfloat16)
    vh = split_heads(v, Lk).astype(jnp.bfloat16)

    s = jnp.einsum('bqd,bkd->bqk', qh, kh,
                   preferred_element_type=jnp.float32)      # (B_tile*heads, Lq, Lk)
    s = s - jnp.max(s, axis=-1, keepdims=True)
    e = jnp.exp(s)
    p = e / jnp.sum(e, axis=-1, keepdims=True)              # exact softmax (f32)

    ctx = jnp.einsum('bqk,bkd->bqd', p.astype(jnp.bfloat16), vh,
                     preferred_element_type=jnp.float32)    # (B_tile*heads, Lq, Dh)
    # Merge heads back -> (Mq, E), then ONE (E,E) out-projection matmul.
    ctx = (ctx.reshape(batch_tile, heads, Lq, head_dim)
              .transpose(0, 2, 1, 3)
              .reshape(Mq, E))
    attn = jnp.dot(ctx.astype(jnp.bfloat16), wo_ref[0],
                   preferred_element_type=jnp.float32) + bo  # (Mq, E)

    def _layer_norm(z, gamma, beta):
        mu = jnp.mean(z, axis=-1, keepdims=True)
        var = jnp.mean((z - mu) ** 2, axis=-1, keepdims=True)
        return (z - mu) * jax.lax.rsqrt(var + 1e-5) * gamma + beta

    # residual + norm1  (dropout == identity in eval mode)
    h1 = _layer_norm(attn + x, g1, bt1)

    # feed-forward: Linear -> ReLU -> Linear (bf16 matmuls, f32 accum)
    ff = jnp.dot(h1.astype(jnp.bfloat16), w1_ref[0],
                 preferred_element_type=jnp.float32) + b1
    ff = jnp.maximum(ff, 0.0)
    ff = jnp.dot(ff.astype(jnp.bfloat16), w2_ref[0],
                 preferred_element_type=jnp.float32) + b2

    # residual + norm2
    out = _layer_norm(ff + h1, g2, bt2)
    x_carry[...] = out

    # Only the last layer's output and head-averaged attention weights leave VMEM.
    @pl.when(layer == num_layers - 1)
    def _():
        out_ref[...] = out.reshape(batch_tile, Lq, E).astype(out_ref.dtype)
        aw = jnp.mean(p.reshape(batch_tile, heads, Lq, Lk), axis=1)
        aw_ref[...] = aw.astype(aw_ref.dtype)


def correlation_attention_block(x, y, stacked_params, heads, *, batch_tile=None):
    """Equivalent of CorrelationAttentionBlock.forward (mask=None, eval mode).

    stacked_params = (wq, wkv, wo, w1, w2, pvec), each with leading num_layers axis
    (kernel layout, see pack_layer_params).  Returns (out, last-layer attn weights).

    batch_tile: batch elements per grid step.  Larger -> fewer weight re-streams and
    bigger matmul M; smaller (e.g. B/2) -> the parallel batch axis can be split across
    v7x's two TensorCores.
    """
    # TODO(synk): key_padding_mask is not supported (module example passes mask=None).
    # TODO(synk): training-mode dropout not implemented (eval-mode identity).
    B, Lq, E = x.shape
    _, Lk, _ = y.shape
    assert E % heads == 0, "embed_size must be divisible by heads"
    head_dim = E // heads

    wq, wkv, wo, w1, w2, pv = stacked_params
    num_layers = wq.shape[0]
    H = w1.shape[2]
    PAD = pv.shape[2]

    if batch_tile is None:
        batch_tile = B            # demo sizes: weights streamed exactly once per layer
    assert B % batch_tile == 0
    n_btiles = B // batch_tile

    # Explicit VMEM budget: double-buffered bf16 weight stream + packed vec
    # + double-buffered activations + carry; cap at 64 MiB for v7x portability.
    w_bytes = 2 * 2 * (E * E + E * 2 * E + E * E + E * H + H * E) + 2 * 4 * 9 * PAD
    a_bytes = 4 * (2 * batch_tile * (Lq + Lk) * E            # x, y blocks (dbl-buf)
                   + 2 * batch_tile * Lq * (E + Lk)          # out, aw blocks
                   + batch_tile * Lq * E)                    # carry
    vmem_limit = int(min(64 * 2 ** 20, max(32 * 2 ** 20, 4 * (w_bytes + a_bytes))))

    in_specs = [
        pl.BlockSpec((batch_tile, Lq, E), lambda b, l: (b, 0, 0)),   # x
        pl.BlockSpec((batch_tile, Lk, E), lambda b, l: (b, 0, 0)),   # y
        pl.BlockSpec((1, E, E),     lambda b, l: (l, 0, 0)),         # wq (scale folded)
        pl.BlockSpec((1, E, 2 * E), lambda b, l: (l, 0, 0)),         # wkv
        pl.BlockSpec((1, E, E),     lambda b, l: (l, 0, 0)),         # wo
        pl.BlockSpec((1, E, H),     lambda b, l: (l, 0, 0)),         # w1
        pl.BlockSpec((1, H, E),     lambda b, l: (l, 0, 0)),         # w2
        pl.BlockSpec((1, 9, PAD),   lambda b, l: (l, 0, 0)),         # packed biases / LN
    ]
    out_specs = (
        pl.BlockSpec((batch_tile, Lq, E), lambda b, l: (b, 0, 0)),
        # TODO(synk): aw block is lane-sparse for small Lk; pad Lk or gate behind a
        # flag for callers that do not need attention weights.
        pl.BlockSpec((batch_tile, Lq, Lk), lambda b, l: (b, 0, 0)),
    )
    out_shape = (
        jax.ShapeDtypeStruct((B, Lq, E), jnp.float32),
        jax.ShapeDtypeStruct((B, Lq, Lk), jnp.float32),
    )

    kernel = functools.partial(_fused_block_kernel,
                               num_layers, heads, head_dim, batch_tile)

    return pl.pallas_call(
        kernel,
        out_shape=out_shape,
        grid_spec=pltpu.PrefetchScalarGridSpec(
            num_scalar_prefetch=0,
            grid=(n_btiles, num_layers),
            in_specs=in_specs,
            out_specs=out_specs,
            scratch_shapes=[pltpu.VMEM((batch_tile * Lq, E), jnp.float32)],
        ),
        compiler_params=pltpu.CompilerParams(
            dimension_semantics=("parallel", "arbitrary"),
            vmem_limit_bytes=vmem_limit),
    )(x, y, wq, wkv, wo, w1, w2, pv)


# ----------------------------------------------------------------------------------
# Parameter construction (mirrors the PyTorch module's parameterization).
# ----------------------------------------------------------------------------------
def init_layer_params(key, embed_size, heads, forward_expansion):
    """PyTorch-layout parameters for one CorrelationAttentionLayer (f32)."""
    E = embed_size
    H = forward_expansion * E
    ks = jax.random.split(key, 8)
    scale = 0.02
    return dict(
        in_proj_w=jax.random.normal(ks[0], (3 * E, E), jnp.float32) * scale,
        in_proj_b=jax.random.normal(ks[1], (3 * E,), jnp.float32) * scale,
        out_proj_w=jax.random.normal(ks[2], (E, E), jnp.float32) * scale,
        out_proj_b=jax.random.normal(ks[3], (E,), jnp.float32) * scale,
        w1=jax.random.normal(ks[4], (H, E), jnp.float32) * scale,   # torch Linear(E,H)
        b1=jax.random.normal(ks[5], (H,), jnp.float32) * scale,
        w2=jax.random.normal(ks[6], (E, H), jnp.float32) * scale,   # torch Linear(H,E)
        b2=jax.random.normal(ks[7], (E,), jnp.float32) * scale,
        g1=jnp.ones((E,), jnp.float32), bt1=jnp.zeros((E,), jnp.float32),
        g2=jnp.ones((E,), jnp.float32), bt2=jnp.zeros((E,), jnp.float32),
    )


def pack_layer_params(p, embed_size, heads, forward_expansion):
    """Convert PyTorch-layout layer params to the kernel layout:
    bf16 matmul weights (pre-transposed, K|V fused, 1/sqrt(Dh) folded into Q) and
    one lane-padded f32 (9, PAD) block holding all small vectors."""
    E = embed_size
    Dh = E // heads
    H = forward_expansion * E
    scale = 1.0 / math.sqrt(Dh)

    wq = (p['in_proj_w'][0:E].T * scale).astype(jnp.bfloat16)              # (E, E)
    wkv = jnp.concatenate([p['in_proj_w'][E:2 * E].T,
                           p['in_proj_w'][2 * E:3 * E].T], axis=1).astype(jnp.bfloat16)
    wo = p['out_proj_w'].T.astype(jnp.bfloat16)                            # (E, E)
    w1 = p['w1'].T.astype(jnp.bfloat16)                                    # (E, H)
    w2 = p['w2'].T.astype(jnp.bfloat16)                                    # (H, E)

    PAD = _round_up(max(2 * E, H), 128)
    rows = [p['in_proj_b'][0:E] * scale,        # bq (scaled)
            p['in_proj_b'][E:3 * E],            # bkv
            p['out_proj_b'],                    # bo
            p['g1'], p['bt1'], p['g2'], p['bt2'],
            p['b1'], p['b2']]
    pv = jnp.stack([jnp.pad(r, (0, PAD - r.shape[0])) for r in rows], axis=0)  # (9, PAD)
    return wq, wkv, wo, w1, w2, pv


def stack_layer_params(per_layer_kernel_params):
    """Stack each kernel-format parameter over layers along a new leading axis."""
    return tuple(jnp.stack(arrs, axis=0) for arrs in zip(*per_layer_kernel_params))


# ----------------------------------------------------------------------------------
# Pure-JAX f32 reference (mirrors PyTorch forward) for a sanity check.
# ----------------------------------------------------------------------------------
def reference_block(x, y, layer_params, heads):
    E = x.shape[-1]
    Dh = E // heads
    aw = None
    for p in layer_params:
        B, Lq, _ = x.shape
        Lk = y.shape[1]
        q = x @ p['in_proj_w'][0:E].T + p['in_proj_b'][0:E]
        k = y @ p['in_proj_w'][E:2 * E].T + p['in_proj_b'][E:2 * E]
        v = y @ p['in_proj_w'][2 * E:].T + p['in_proj_b'][2 * E:]
        q = q.reshape(B, Lq, heads, Dh).transpose(0, 2, 1, 3)
        k = k.reshape(B, Lk, heads, Dh).transpose(0, 2, 1, 3)
        v = v.reshape(B, Lk, heads, Dh).transpose(0, 2, 1, 3)
        s = (q / math.sqrt(Dh)) @ k.transpose(0, 1, 3, 2)
        pw = jax.nn.softmax(s, axis=-1)
        ctx = (pw @ v).transpose(0, 2, 1, 3).reshape(B, Lq, E)
        attn = ctx @ p['out_proj_w'].T + p['out_proj_b']

        def ln(z, g, b):
            mu = z.mean(-1, keepdims=True)
            var = ((z - mu) ** 2).mean(-1, keepdims=True)
            return (z - mu) / jnp.sqrt(var + 1e-5) * g + b

        h1 = ln(attn + x, p['g1'], p['bt1'])
        ff = jnp.maximum(h1 @ p['w1'].T + p['b1'], 0.0) @ p['w2'].T + p['b2']
        x = ln(ff + h1, p['g2'], p['bt2'])
        aw = pw.mean(axis=1)
    return x, aw


if __name__ == "__main__":
    embed_size = 32
    heads = 4
    num_layers = 2
    forward_expansion = 2
    B, Lq, Lk = 2, 8, 8

    root = jax.random.PRNGKey(0)
    kx, ky, kp = jax.random.split(root, 3)

    x = jax.random.normal(kx, (B, Lq, embed_size), jnp.float32)
    y = jax.random.normal(ky, (B, Lk, embed_size), jnp.float32)

    layer_keys = jax.random.split(kp, num_layers)
    torch_layout = [init_layer_params(k, embed_size, heads, forward_expansion)
                    for k in layer_keys]
    stacked = stack_layer_params(
        [pack_layer_params(p, embed_size, heads, forward_expansion)
         for p in torch_layout])

    out, attn_w = correlation_attention_block(x, y, stacked, heads)
    jax.block_until_ready(out)
    jax.block_until_ready(attn_w)

    assert out.shape == (B, Lq, embed_size)
    assert attn_w.shape == (B, Lq, Lk)

    # Sanity check vs. pure-JAX f32 reference (kernel uses bf16 matmul operands).
    ref_out, ref_aw = reference_block(x, y, torch_layout, heads)
    assert jnp.max(jnp.abs(out - ref_out)) < 5e-2
    assert jnp.max(jnp.abs(attn_w - ref_aw)) < 5e-2

    print("KERNEL_OK")
</pallas_src>

<mosaic_0001>
module attributes {stable_mosaic.version = 11 : i64} {
  func.func @_fused_block_kernel(%arg0: i32, %arg1: i32, %arg2: memref<2x8x32xf32, #tpu.memory_space<vmem>>, %arg3: memref<2x8x32xf32, #tpu.memory_space<vmem>>, %arg4: memref<1x32x32xbf16, #tpu.memory_space<vmem>>, %arg5: memref<1x32x64xbf16, #tpu.memory_space<vmem>>, %arg6: memref<1x32x32xbf16, #tpu.memory_space<vmem>>, %arg7: memref<1x32x64xbf16, #tpu.memory_space<vmem>>, %arg8: memref<1x64x32xbf16, #tpu.memory_space<vmem>>, %arg9: memref<1x9x128xf32, #tpu.memory_space<vmem>>, %arg10: memref<2x8x32xf32, #tpu.memory_space<vmem>>, %arg11: memref<2x8x8xf32, #tpu.memory_space<vmem>>, %arg12: memref<16x32xf32, #tpu.memory_space<vmem>>) attributes {dimension_semantics = [#tpu.dimension_semantics<parallel>, #tpu.dimension_semantics<arbitrary>], iteration_bounds = array<i64: 1, 2>, scalar_prefetch = 0 : i64, scratch_operands = 1 : i64, tpu.core_type = #tpu.core_type<tc>, window_params = [{transform_indices = @transform_0, window_bounds = array<i64: 2, 8, 32>}, {transform_indices = @transform_1, window_bounds = array<i64: 2, 8, 32>}, {transform_indices = @transform_2, window_bounds = array<i64: 1, 32, 32>}, {transform_indices = @transform_3, window_bounds = array<i64: 1, 32, 64>}, {transform_indices = @transform_4, window_bounds = array<i64: 1, 32, 32>}, {transform_indices = @transform_5, window_bounds = array<i64: 1, 32, 64>}, {transform_indices = @transform_6, window_bounds = array<i64: 1, 64, 32>}, {transform_indices = @transform_7, window_bounds = array<i64: 1, 9, 128>}, {transform_indices = @transform_8, window_bounds = array<i64: 2, 8, 32>}, {transform_indices = @transform_9, window_bounds = array<i64: 2, 8, 8>}]} {
    %c0_i32 = arith.constant 0 : i32
    %0 = arith.cmpi eq, %arg1, %c0_i32 : i32
    %1 = arith.extui %0 : i1 to i32
    %c0_i32_0 = arith.constant 0 : i32
    %2 = arith.cmpi ne, %1, %c0_i32_0 : i32
    scf.if %2 {
      %c0_45 = arith.constant 0 : index
      %c0_46 = arith.constant 0 : index
      %c0_47 = arith.constant 0 : index
      %128 = vector.load %arg2[%c0_45, %c0_46, %c0_47] : memref<2x8x32xf32, #tpu.memory_space<vmem>>, vector<2x8x32xf32>
      %129 = vector.shape_cast %128 : vector<2x8x32xf32> to vector<16x32xf32>
      %c0_48 = arith.constant 0 : index
      %c0_49 = arith.constant 0 : index
      %130 = vector.load %arg12[%c0_48, %c0_49] : memref<16x32xf32, #tpu.memory_space<vmem>>, vector<16x32xf32>
      tpu.vector_store %arg12[%c0_48, %c0_49], %129 {strides = array<i32>} : memref<16x32xf32, #tpu.memory_space<vmem>>, vector<16x32xf32>,
    } else {
    }
    %c0 = arith.constant 0 : index
    %c0_1 = arith.constant 0 : index
    %3 = vector.load %arg12[%c0, %c0_1] : memref<16x32xf32, #tpu.memory_space<vmem>>, vector<16x32xf32>
    %c0_2 = arith.constant 0 : index
    %c0_3 = arith.constant 0 : index
    %c0_4 = arith.constant 0 : index
    %4 = vector.load %arg3[%c0_2, %c0_3, %c0_4] : memref<2x8x32xf32, #tpu.memory_space<vmem>>, vector<2x8x32xf32>
    %5 = vector.shape_cast %4 : vector<2x8x32xf32> to vector<16x32xf32>
    %6 = arith.truncf %5 : vector<16x32xf32> to vector<16x32xbf16>
    %c0_5 = arith.constant 0 : index
    %c0_6 = arith.constant 0 : index
    %c0_7 = arith.constant 0 : index
    %7 = vector.load %arg9[%c0_5, %c0_6, %c0_7] : memref<1x9x128xf32, #tpu.memory_space<vmem>>, vector<1x9x128xf32>
    %8 = vector.shape_cast %7 : vector<1x9x128xf32> to vector<9x128xf32>
    %9 = vector.extract_strided_slice %8 {offsets = [0, 0], sizes = [1, 32], strides = [1, 1]} : vector<9x128xf32> to vector<1x32xf32>
    %10 = vector.extract_strided_slice %8 {offsets = [1, 0], sizes = [1, 64], strides = [1, 1]} : vector<9x128xf32> to vector<1x64xf32>
    %11 = vector.extract_strided_slice %8 {offsets = [2, 0], sizes = [1, 32], strides = [1, 1]} : vector<9x128xf32> to vector<1x32xf32>
    %12 = vector.extract_strided_slice %8 {offsets = [3, 0], sizes = [1, 32], strides = [1, 1]} : vector<9x128xf32> to vector<1x32xf32>
    %13 = vector.extract_strided_slice %8 {offsets = [4, 0], sizes = [1, 32], strides = [1, 1]} : vector<9x128xf32> to vector<1x32xf32>
    %14 = vector.extract_strided_slice %8 {offsets = [5, 0], sizes = [1, 32], strides = [1, 1]} : vector<9x128xf32> to vector<1x32xf32>
    %15 = vector.extract_strided_slice %8 {offsets = [6, 0], sizes = [1, 32], strides = [1, 1]} : vector<9x128xf32> to vector<1x32xf32>
    %16 = vector.extract_strided_slice %8 {offsets = [7, 0], sizes = [1, 64], strides = [1, 1]} : vector<9x128xf32> to vector<1x64xf32>
    %17 = vector.extract_strided_slice %8 {offsets = [8, 0], sizes = [1, 32], strides = [1, 1]} : vector<9x128xf32> to vector<1x32xf32>
    %18 = arith.truncf %3 : vector<16x32xf32> to vector<16x32xbf16>
    %c0_8 = arith.constant 0 : index
    %c0_9 = arith.constant 0 : index
    %c0_10 = arith.constant 0 : index
    %19 = vector.load %arg4[%c0_8, %c0_9, %c0_10] : memref<1x32x32xbf16, #tpu.memory_space<vmem>>, vector<1x32x32xbf16>
    %20 = vector.shape_cast %19 : vector<1x32x32xbf16> to vector<32x32xbf16>
    %cst = arith.constant dense<0.000000e+00> : vector<16x32xf32>
    %21 = tpu.matmul %18, %20, %cst {dimension_numbers = #tpu.dot_dimension_numbers<[1], [0], [0], [1], [0, 0, 1, 1], [], []>} : vector<16x32xbf16>, vector<32x32xbf16>, vector<16x32xf32> -> vector<16x32xf32>
    %22 = vector.broadcast %9 : vector<1x32xf32> to vector<16x32xf32>
    %23 = arith.addf %21, %22 : vector<16x32xf32>
    %c0_11 = arith.constant 0 : index
    %c0_12 = arith.constant 0 : index
    %c0_13 = arith.constant 0 : index
    %24 = vector.load %arg5[%c0_11, %c0_12, %c0_13] : memref<1x32x64xbf16, #tpu.memory_space<vmem>>, vector<1x32x64xbf16>
    %25 = vector.shape_cast %24 : vector<1x32x64xbf16> to vector<32x64xbf16>
    %cst_14 = arith.constant dense<0.000000e+00> : vector<16x64xf32>
    %26 = tpu.matmul %6, %25, %cst_14 {dimension_numbers = #tpu.dot_dimension_numbers<[1], [0], [0], [1], [0, 0, 1, 1], [], []>} : vector<16x32xbf16>, vector<32x64xbf16>, vector<16x64xf32> -> vector<16x64xf32>
    %27 = vector.broadcast %10 : vector<1x64xf32> to vector<16x64xf32>
    %28 = arith.addf %26, %27 : vector<16x64xf32>
    %29 = vector.extract_strided_slice %28 {offsets = [0, 0], sizes = [16, 32], strides = [1, 1]} : vector<16x64xf32> to vector<16x32xf32>
    %30 = vector.extract_strided_slice %28 {offsets = [0, 32], sizes = [16, 32], strides = [1, 1]} : vector<16x64xf32> to vector<16x32xf32>
    %31 = vector.shape_cast %23 : vector<16x32xf32> to vector<2x8x4x8xf32>
    %32 = tpu.transpose %31, [0, 2, 1, 3] : vector<2x8x4x8xf32> -> vector<2x4x8x8xf32>
    %33 = vector.shape_cast %32 : vector<2x4x8x8xf32> to vector<8x8x8xf32>
    %34 = arith.truncf %33 : vector<8x8x8xf32> to vector<8x8x8xbf16>
    %35 = vector.shape_cast %29 : vector<16x32xf32> to vector<2x8x4x8xf32>
    %36 = tpu.transpose %35, [0, 2, 1, 3] : vector<2x8x4x8xf32> -> vector<2x4x8x8xf32>
    %37 = vector.shape_cast %36 : vector<2x4x8x8xf32> to vector<8x8x8xf32>
    %38 = arith.truncf %37 : vector<8x8x8xf32> to vector<8x8x8xbf16>
    %39 = vector.shape_cast %30 : vector<16x32xf32> to vector<2x8x4x8xf32>
    %40 = tpu.transpose %39, [0, 2, 1, 3] : vector<2x8x4x8xf32> -> vector<2x4x8x8xf32>
    %41 = vector.shape_cast %40 : vector<2x4x8x8xf32> to vector<8x8x8xf32>
    %42 = arith.truncf %41 : vector<8x8x8xf32> to vector<8x8x8xbf16>
    "tpu.trace_start"() <{level = 10 : i32, message = "bqd,bkd->bqk"}> : () -> ()
    %cst_15 = arith.constant dense<0.000000e+00> : vector<8x8x8xf32>
    %43 = tpu.matmul %34, %38, %cst_15 {dimension_numbers = #tpu.dot_dimension_numbers<[2], [2], [1], [1], [0, 0, 0, 1, 1, 1], [0], [0]>} : vector<8x8x8xbf16>, vector<8x8x8xbf16>, vector<8x8x8xf32> -> vector<8x8x8xf32>
    "tpu.trace_stop"() : () -> ()
    %cst_16 = arith.constant dense<0xFF800000> : vector<8x8xf32>
    %44 = vector.multi_reduction <maximumf>, %43, %cst_16 [2] : vector<8x8x8xf32> to vector<8x8xf32>
    %45 = vector.shape_cast %44 : vector<8x8xf32> to vector<8x8x1xf32>
    %46 = vector.broadcast %45 : vector<8x8x1xf32> to vector<8x8x8xf32>
    %47 = arith.subf %43, %46 : vector<8x8x8xf32>
    %48 = math.exp %47 : vector<8x8x8xf32>
    %cst_17 = arith.constant dense<0.000000e+00> : vector<8x8xf32>
    %49 = vector.multi_reduction <add>, %48, %cst_17 [2] : vector<8x8x8xf32> to vector<8x8xf32>
    %50 = vector.shape_cast %49 : vector<8x8xf32> to vector<8x8x1xf32>
    %51 = vector.broadcast %50 : vector<8x8x1xf32> to vector<8x8x8xf32>
    %52 = arith.divf %48, %51 : vector<8x8x8xf32>
    %53 = arith.truncf %52 : vector<8x8x8xf32> to vector<8x8x8xbf16>
    "tpu.trace_start"() <{level = 10 : i32, message = "bqk,bkd->bqd"}> : () -> ()
    %cst_18 = arith.constant dense<0.000000e+00> : vector<8x8x8xf32>
    %54 = tpu.matmul %53, %42, %cst_18 {dimension_numbers = #tpu.dot_dimension_numbers<[2], [1], [1], [2], [0, 0, 0, 1, 1, 2], [0], [0]>} : vector<8x8x8xbf16>, vector<8x8x8xbf16>, vector<8x8x8xf32> -> vector<8x8x8xf32>
    "tpu.trace_stop"() : () -> ()
    %55 = vector.shape_cast %54 : vector<8x8x8xf32> to vector<2x4x8x8xf32>
    %56 = tpu.transpose %55, [0, 2, 1, 3] : vector<2x4x8x8xf32> -> vector<2x8x4x8xf32>
    %57 = vector.shape_cast %56 : vector<2x8x4x8xf32> to vector<16x32xf32>
    %58 = arith.truncf %57 : vector<16x32xf32> to vector<16x32xbf16>
    %c0_19 = arith.constant 0 : index
    %c0_20 = arith.constant 0 : index
    %c0_21 = arith.constant 0 : index
    %59 = vector.load %arg6[%c0_19, %c0_20, %c0_21] : memref<1x32x32xbf16, #tpu.memory_space<vmem>>, vector<1x32x32xbf16>
    %60 = vector.shape_cast %59 : vector<1x32x32xbf16> to vector<32x32xbf16>
    %cst_22 = arith.constant dense<0.000000e+00> : vector<16x32xf32>
    %61 = tpu.matmul %58, %60, %cst_22 {dimension_numbers = #tpu.dot_dimension_numbers<[1], [0], [0], [1], [0, 0, 1, 1], [], []>} : vector<16x32xbf16>, vector<32x32xbf16>, vector<16x32xf32> -> vector<16x32xf32>
    %62 = vector.broadcast %11 : vector<1x32xf32> to vector<16x32xf32>
    %63 = arith.addf %61, %62 : vector<16x32xf32>
    %64 = arith.addf %63, %3 : vector<16x32xf32>
    %cst_23 = arith.constant dense<0.000000e+00> : vector<16xf32>
    %65 = vector.multi_reduction <add>, %64, %cst_23 [1] : vector<16x32xf32> to vector<16xf32>
    %66 = vector.shape_cast %65 : vector<16xf32> to vector<16x1xf32>
    %cst_24 = arith.constant 3.200000e+01 : f32
    %67 = vector.broadcast %cst_24 : f32 to vector<16x1xf32>
    %68 = arith.divf %66, %67 : vector<16x1xf32>
    %69 = vector.broadcast %68 : vector<16x1xf32> to vector<16x32xf32>
    %70 = arith.subf %64, %69 : vector<16x32xf32>
    %71 = arith.mulf %70, %70 : vector<16x32xf32>
    %cst_25 = arith.constant dense<0.000000e+00> : vector<16xf32>
    %72 = vector.multi_reduction <add>, %71, %cst_25 [1] : vector<16x32xf32> to vector<16xf32>
    %73 = vector.shape_cast %72 : vector<16xf32> to vector<16x1xf32>
    %cst_26 = arith.constant 3.200000e+01 : f32
    %74 = vector.broadcast %cst_26 : f32 to vector<16x1xf32>
    %75 = arith.divf %73, %74 : vector<16x1xf32>
    %76 = vector.broadcast %68 : vector<16x1xf32> to vector<16x32xf32>
    %77 = arith.subf %64, %76 : vector<16x32xf32>
    %cst_27 = arith.constant 9.99999974E-6 : f32
    %78 = vector.broadcast %cst_27 : f32 to vector<16x1xf32>
    %79 = arith.addf %75, %78 : vector<16x1xf32>
    %80 = math.rsqrt %79 : vector<16x1xf32>
    %81 = vector.broadcast %80 : vector<16x1xf32> to vector<16x32xf32>
    %82 = arith.mulf %77, %81 : vector<16x32xf32>
    %83 = vector.broadcast %12 : vector<1x32xf32> to vector<16x32xf32>
    %84 = arith.mulf %82, %83 : vector<16x32xf32>
    %85 = vector.broadcast %13 : vector<1x32xf32> to vector<16x32xf32>
    %86 = arith.addf %84, %85 : vector<16x32xf32>
    %87 = arith.truncf %86 : vector<16x32xf32> to vector<16x32xbf16>
    %c0_28 = arith.constant 0 : index
    %c0_29 = arith.constant 0 : index
    %c0_30 = arith.constant 0 : index
    %88 = vector.load %arg7[%c0_28, %c0_29, %c0_30] : memref<1x32x64xbf16, #tpu.memory_space<vmem>>, vector<1x32x64xbf16>
    %89 = vector.shape_cast %88 : vector<1x32x64xbf16> to vector<32x64xbf16>
    %cst_31 = arith.constant dense<0.000000e+00> : vector<16x64xf32>
    %90 = tpu.matmul %87, %89, %cst_31 {dimension_numbers = #tpu.dot_dimension_numbers<[1], [0], [0], [1], [0, 0, 1, 1], [], []>} : vector<16x32xbf16>, vector<32x64xbf16>, vector<16x64xf32> -> vector<16x64xf32>
    %91 = vector.broadcast %16 : vector<1x64xf32> to vector<16x64xf32>
    %92 = arith.addf %90, %91 : vector<16x64xf32>
    %cst_32 = arith.constant 0.000000e+00 : f32
    %93 = vector.broadcast %cst_32 : f32 to vector<16x64xf32>
    %94 = arith.maximumf %92, %93 : vector<16x64xf32>
    %95 = arith.truncf %94 : vector<16x64xf32> to vector<16x64xbf16>
    %c0_33 = arith.constant 0 : index
    %c0_34 = arith.constant 0 : index
    %c0_35 = arith.constant 0 : index
    %96 = vector.load %arg8[%c0_33, %c0_34, %c0_35] : memref<1x64x32xbf16, #tpu.memory_space<vmem>>, vector<1x64x32xbf16>
    %97 = vector.shape_cast %96 : vector<1x64x32xbf16> to vector<64x32xbf16>
    %cst_36 = arith.constant dense<0.000000e+00> : vector<16x32xf32>
    %98 = tpu.matmul %95, %97, %cst_36 {dimension_numbers = #tpu.dot_dimension_numbers<[1], [0], [0], [1], [0, 0, 1, 1], [], []>} : vector<16x64xbf16>, vector<64x32xbf16>, vector<16x32xf32> -> vector<16x32xf32>
    %99 = vector.broadcast %17 : vector<1x32xf32> to vector<16x32xf32>
    %100 = arith.addf %98, %99 : vector<16x32xf32>
    %101 = arith.addf %100, %86 : vector<16x32xf32>
    %cst_37 = arith.constant dense<0.000000e+00> : vector<16xf32>
    %102 = vector.multi_reduction <add>, %101, %cst_37 [1] : vector<16x32xf32> to vector<16xf32>
    %103 = vector.shape_cast %102 : vector<16xf32> to vector<16x1xf32>
    %cst_38 = arith.constant 3.200000e+01 : f32
    %104 = vector.broadcast %cst_38 : f32 to vector<16x1xf32>
    %105 = arith.divf %103, %104 : vector<16x1xf32>
    %106 = vector.broadcast %105 : vector<16x1xf32> to vector<16x32xf32>
    %107 = arith.subf %101, %106 : vector<16x32xf32>
    %108 = arith.mulf %107, %107 : vector<16x32xf32>
    %cst_39 = arith.constant dense<0.000000e+00> : vector<16xf32>
    %109 = vector.multi_reduction <add>, %108, %cst_39 [1] : vector<16x32xf32> to vector<16xf32>
    %110 = vector.shape_cast %109 : vector<16xf32> to vector<16x1xf32>
    %cst_40 = arith.constant 3.200000e+01 : f32
    %111 = vector.broadcast %cst_40 : f32 to vector<16x1xf32>
    %112 = arith.divf %110, %111 : vector<16x1xf32>
    %113 = vector.broadcast %105 : vector<16x1xf32> to vector<16x32xf32>
    %114 = arith.subf %101, %113 : vector<16x32xf32>
    %cst_41 = arith.constant 9.99999974E-6 : f32
    %115 = vector.broadcast %cst_41 : f32 to vector<16x1xf32>
    %116 = arith.addf %112, %115 : vector<16x1xf32>
    %117 = math.rsqrt %116 : vector<16x1xf32>
    %118 = vector.broadcast %117 : vector<16x1xf32> to vector<16x32xf32>
    %119 = arith.mulf %114, %118 : vector<16x32xf32>
    %120 = vector.broadcast %14 : vector<1x32xf32> to vector<16x32xf32>
    %121 = arith.mulf %119, %120 : vector<16x32xf32>
    %122 = vector.broadcast %15 : vector<1x32xf32> to vector<16x32xf32>
    %123 = arith.addf %121, %122 : vector<16x32xf32>
    %c0_42 = arith.constant 0 : index
    %c0_43 = arith.constant 0 : index
    %124 = vector.load %arg12[%c0_42, %c0_43] : memref<16x32xf32, #tpu.memory_space<vmem>>, vector<16x32xf32>
    tpu.vector_store %arg12[%c0_42, %c0_43], %123 {strides = array<i32>} : memref<16x32xf32, #tpu.memory_space<vmem>>, vector<16x32xf32>,
    %c1_i32 = arith.constant 1 : i32
    %125 = arith.cmpi eq, %arg1, %c1_i32 : i32
    %126 = arith.extui %125 : i1 to i32
    %c0_i32_44 = arith.constant 0 : i32
    %127 = arith.cmpi ne, %126, %c0_i32_44 : i32
    scf.if %127 {
      %128 = vector.shape_cast %123 : vector<16x32xf32> to vector<2x8x32xf32>
      %c0_45 = arith.constant 0 : index
      %c0_46 = arith.constant 0 : index
      %c0_47 = arith.constant 0 : index
      %129 = vector.load %arg10[%c0_45, %c0_46, %c0_47] : memref<2x8x32xf32, #tpu.memory_space<vmem>>, vector<2x8x32xf32>
      tpu.vector_store %arg10[%c0_45, %c0_46, %c0_47], %128 {strides = array<i32>} : memref<2x8x32xf32, #tpu.memory_space<vmem>>, vector<2x8x32xf32>,
      %130 = vector.shape_cast %52 : vector<8x8x8xf32> to vector<2x4x8x8xf32>
      %cst_48 = arith.constant dense<0.000000e+00> : vector<2x8x8xf32>
      %131 = vector.multi_reduction <add>, %130, %cst_48 [1] : vector<2x4x8x8xf32> to vector<2x8x8xf32>
      %cst_49 = arith.constant 4.000000e+00 : f32
      %132 = vector.broadcast %cst_49 : f32 to vector<2x8x8xf32>
      %133 = arith.divf %131, %132 : vector<2x8x8xf32>
      %c0_50 = arith.constant 0 : index
      %c0_51 = arith.constant 0 : index
      %c0_52 = arith.constant 0 : index
      %134 = vector.load %arg11[%c0_50, %c0_51, %c0_52] : memref<2x8x8xf32, #tpu.memory_space<vmem>>, vector<2x8x8xf32>
      tpu.vector_store %arg11[%c0_50, %c0_51, %c0_52], %133 {strides = array<i32>} : memref<2x8x8xf32, #tpu.memory_space<vmem>>, vector<2x8x8xf32>,
    } else {
    }
    return
  }
  func.func @transform_0(%arg0: i32, %arg1: i32) -> (i32, i32, i32) {
    %c0_i32 = arith.constant 0 : i32
    %c0_i32_0 = arith.constant 0 : i32
    %c0_i32_1 = arith.constant 0 : i32
    return %arg0, %c0_i32, %c0_i32_0 : i32, i32, i32
  }
  func.func @transform_1(%arg0: i32, %arg1: i32) -> (i32, i32, i32) {
    %c0_i32 = arith.constant 0 : i32
    %c0_i32_0 = arith.constant 0 : i32
    %c0_i32_1 = arith.constant 0 : i32
    return %arg0, %c0_i32, %c0_i32_0 : i32, i32, i32
  }
  func.func @transform_2(%arg0: i32, %arg1: i32) -> (i32, i32, i32) {
    %c0_i32 = arith.constant 0 : i32
    %c0_i32_0 = arith.constant 0 : i32
    %c0_i32_1 = arith.constant 0 : i32
    return %arg1, %c0_i32, %c0_i32_0 : i32, i32, i32
  }
  func.func @transform_3(%arg0: i32, %arg1: i32) -> (i32, i32, i32) {
    %c0_i32 = arith.constant 0 : i32
    %c0_i32_0 = arith.constant 0 : i32
    %c0_i32_1 = arith.constant 0 : i32
    return %arg1, %c0_i32, %c0_i32_0 : i32, i32, i32
  }
  func.func @transform_4(%arg0: i32, %arg1: i32) -> (i32, i32, i32) {
    %c0_i32 = arith.constant 0 : i32
    %c0_i32_0 = arith.constant 0 : i32
    %c0_i32_1 = arith.constant 0 : i32
    return %arg1, %c0_i32, %c0_i32_0 : i32, i32, i32
  }
  func.func @transform_5(%arg0: i32, %arg1: i32) -> (i32, i32, i32) {
    %c0_i32 = arith.constant 0 : i32
    %c0_i32_0 = arith.constant 0 : i32
    %c0_i32_1 = arith.constant 0 : i32
    return %arg1, %c0_i32, %c0_i32_0 : i32, i32, i32
  }
  func.func @transform_6(%arg0: i32, %arg1: i32) -> (i32, i32, i32) {
    %c0_i32 = arith.constant 0 : i32
    %c0_i32_0 = arith.constant 0 : i32
    %c0_i32_1 = arith.constant 0 : i32
    return %arg1, %c0_i32, %c0_i32_0 : i32, i32, i32
  }
  func.func @transform_7(%arg0: i32, %arg1: i32) -> (i32, i32, i32) {
    %c0_i32 = arith.constant 0 : i32
    %c0_i32_0 = arith.constant 0 : i32
    %c0_i32_1 = arith.constant 0 : i32
    return %arg1, %c0_i32, %c0_i32_0 : i32, i32, i32
  }
  func.func @transform_8(%arg0: i32, %arg1: i32) -> (i32, i32, i32) {
    %c0_i32 = arith.constant 0 : i32
    %c0_i32_0 = arith.constant 0 : i32
    %c0_i32_1 = arith.constant 0 : i32
    return %arg0, %c0_i32, %c0_i32_0 : i32, i32, i32
  }
  func.func @transform_9(%arg0: i32, %arg1: i32) -> (i32, i32, i32) {
    %c0_i32 = arith.constant 0 : i32
    %c0_i32_0 = arith.constant 0 : i32
    %c0_i32_1 = arith.constant 0 : i32
    return %arg0, %c0_i32, %c0_i32_0 : i32, i32, i32
  }
}

</mosaic_0001>

<llo_original>
// kernel: tpu_custom_call.1
$region0: #{tpu_custom_call.1}
  #allocation0 [shape = 'u32[]', space=smem, size = 0x4, offset = 0x4, fixed_abs, tag = 'smem constant byte address 0x4 - core index']
  #allocation1 [shape = 'u32[144,128]{1,0:T(1,128)}', space=vmem, size = 0x12000, scoped, tag = 'internal scratch']
  #allocation2 [shape = 'f32[16,32]{1,0:T(8,128)}', space=vmem, size = 0x2000, scoped, tag = 'scratch operand']
  %s0 = inlined_call_operand.vmem [shape: f32[2,8,32], index: 0, kind: input, shape index: {}]
  %s1 = inlined_call_operand.hbm [shape: f32[2,8,32], index: 1, kind: input, shape index: {}]
  %s2 = inlined_call_operand.vmem [shape: bf16[2,32,32], index: 2, kind: input, shape index: {}]
  %s3 = inlined_call_operand.vmem [shape: bf16[2,32,64], index: 3, kind: input, shape index: {}]
  %s4 = inlined_call_operand.vmem [shape: bf16[2,32,32], index: 4, kind: input, shape index: {}]
  %s5 = inlined_call_operand.vmem [shape: bf16[2,32,64], index: 5, kind: input, shape index: {}]
  %s6 = inlined_call_operand.vmem [shape: bf16[2,64,32], index: 6, kind: input, shape index: {}]
  %s7 = inlined_call_operand.vmem [shape: f32[2,9,128], index: 7, kind: input, shape index: {}]
  %s8 = inlined_call_operand.hbm [shape: f32[2,8,32], index: 8, kind: output, shape index: {0}]
  %s9 = inlined_call_operand.hbm [shape: f32[2,8,8], index: 9, kind: output, shape index: {1}]
  %10 = xla_tuple %s8, %s9
  %s11 = sld [smem:[#allocation0]]
  $region85: #{tpu_custom_call.1} parent=0
    _
  %s13 = ssub.s32 1, %s11
  %s14 = scalar_select 0, %s13, %s11
  $region1: #{tpu_custom_call.1} parent=0
    #allocation3 [shape = 'u8[8192]{0}', space=vmem, size = 0x2000, scoped, tag = 'input window, operand 1, single buffered']
    #allocation4 [shape = 's32[2]{0}', space=sflag, size = 0x8, scoped, tag = 'scoped memory for tpu_custom_call.1']
    #allocation5 [shape = 's32[2]{0}', space=sflag, size = 0x8, scoped, tag = 'scoped memory for tpu_custom_call.1']
    #allocation6 [shape = 'u8[8192]{0}', space=vmem, size = 0x2000, scoped, tag = 'output window, operand 0, single buffered']
    #allocation7 [shape = 'u8[8192]{0}', space=vmem, size = 0x2000, scoped, tag = 'output window, operand 1, single buffered']
    #allocation8 [shape = 's32[1]{0}', space=sflag, size = 0x4, scoped, tag = 'scoped memory for tpu_custom_call.1']
    %15 = vsyncpa [#allocation4], 0
    %16 = vsyncpa [#allocation5], 0
    %17 = vsyncpa [#allocation8], 0
    loop: start=0, step=1, limit=4
    $region2: #{tpu_custom_call.1} parent=1 // loop_pre_header
      _
    $region3: #{tpu_custom_call.1} parent=1 // loop_header
      %s19 = sphi 0, %s23
      %p20 = scmp.ge.s32.totalorder %s19, 4
      %s26 = sphi 0, %s38
      %s27 = sphi 0, %s34
      %s28 = sphi 0, %s26
      %s29 = sphi 0, %s27
      %s30 = sphi 0, %s28
      %s31 = sphi 0, %s29
      %s41 = sphi 0, %s43
      %s44 = sphi 0, %s41
      %s45 = sphi 0, %s44
      %s61 = sphi 0, %s45
      %s67 = sphi 0, %s69
      %s70 = sphi 0, %s67
      %s71 = sphi 0, %s70
      %s87 = sphi 0, %s71
      %s93 = sphi 0, %s95
      %s96 = sphi 0, %s93
      %s97 = sphi 0, %s96
      %s113 = sphi 0, %s97
      %s119 = sphi 0, %s121
      %s122 = sphi 0, %s119
      %s123 = sphi 0, %s122
      %s139 = sphi 0, %s123
      %s145 = sphi 0, %s147
      %s148 = sphi 0, %s145
      %s149 = sphi 0, %s148
      %s165 = sphi 0, %s149
      %s171 = sphi 0, %s173
      %s174 = sphi 0, %s171
      %s175 = sphi 0, %s174
      %s191 = sphi 0, %s175
      %s197 = sphi 0, %s199
      %s200 = sphi 0, %s197
      %s201 = sphi 0, %s200
      %s217 = sphi 0, %s201
      %s223 = sphi 0, %s225
      %s226 = sphi 0, %s223
      %s227 = sphi 0, %s226
      %s243 = sphi 0, %s227
      %s249 = sphi 0, %s251
      %s252 = sphi 0, %s249
      %s253 = sphi 0, %s252
      %s269 = sphi 0, %s253
      %s275 = sphi 0, %s277
      %s278 = sphi 0, %s275
      %s279 = sphi 0, %s278
      %s295 = sphi 0, %s279
    $region4: #{tpu_custom_call.1} parent=1 // loop_header_branch
      %22 = sbr.rel (%p20) target = $region8
    $region5: #{tpu_custom_call.1} parent=1 // loop_body
      %s24 = ssub.s32 %s19, 1
      %s25 = ssub.s32 %s19, 2
      %s32 = sadd.s32 1, %s27
      %p33 = scmp.ge.s32.totalorder %s32, 2
      %s34 = scalar_select %p33, 0, %s32
      %s35 = sadd.s32 1, %s26
      %s36 = scalar_select %p33, %s35, %s26
      %p37 = scmp.ge.s32.totalorder %s36, 1
      %s38 = scalar_select %p37, 0, %s36
      %s39 = ssub.s32 %s26, %s38
      %p40 = scmp.eq.s32.totalorder %s39, 0
      %s42 = sadd.s32 %s41, 1
      %s43 = scalar_select %p40, %s41, %s42
      %p46 = pneg %p40
      %p47 = scmp.eq.s32.totalorder %s19, 1
      %p48 = por %p46, %p47
      %p49 = scmp.ne.s32.totalorder %s41, %s44
      %p50 = scmp.eq.s32.totalorder %s19, 0
      %p51 = por %p49, %p50
      %p52 = scmp.ne.s32.totalorder %s41, %s44
      %p53 = scmp.eq.s32.totalorder %s24, 1
      %p54 = por %p52, %p53
      %p55 = scmp.ne.s32.totalorder %s44, %s45
      %p56 = scmp.eq.s32.totalorder %s24, 0
      %p57 = por %p55, %p56
      %p58 = scmp.ne.s32.totalorder %s44, %s45
      %p59 = scmp.eq.s32.totalorder %s25, 1
      %p60 = por %p58, %p59
      %p62 = scmp.ne.s32.totalorder %s45, %s61
      %p63 = scmp.eq.s32.totalorder %s25, 0
      %p64 = por %p62, %p63
      %s65 = ssub.s32 %s26, %s38
      %p66 = scmp.eq.s32.totalorder %s65, 0
      %s68 = sadd.s32 %s67, 1
      %s69 = scalar_select %p66, %s67, %s68
      %p72 = pneg %p66
      %p73 = scmp.eq.s32.totalorder %s19, 1
      %p74 = por %p72, %p73
      %p75 = scmp.ne.s32.totalorder %s67, %s70
      %p76 = scmp.eq.s32.totalorder %s19, 0
      %p77 = por %p75, %p76
      %p78 = scmp.ne.s32.totalorder %s67, %s70
      %p79 = scmp.eq.s32.totalorder %s24, 1
      %p80 = por %p78, %p79
      %p81 = scmp.ne.s32.totalorder %s70, %s71
      %p82 = scmp.eq.s32.totalorder %s24, 0
      %p83 = por %p81, %p82
      %p84 = scmp.ne.s32.totalorder %s70, %s71
      %p85 = scmp.eq.s32.totalorder %s25, 1
      %p86 = por %p84, %p85
      %p88 = scmp.ne.s32.totalorder %s71, %s87
      %p89 = scmp.eq.s32.totalorder %s25, 0
      %p90 = por %p88, %p89
      %s91 = ssub.s32 %s27, %s34
      %p92 = scmp.eq.s32.totalorder %s91, 0
      %s94 = sadd.s32 %s93, 1
      %s95 = scalar_select %p92, %s93, %s94
      %p98 = pneg %p92
      %p99 = scmp.eq.s32.totalorder %s19, 1
      %p100 = por %p98, %p99
      %p101 = scmp.ne.s32.totalorder %s93, %s96
      %p102 = scmp.eq.s32.totalorder %s19, 0
      %p103 = por %p101, %p102
      %p104 = scmp.ne.s32.totalorder %s93, %s96
      %p105 = scmp.eq.s32.totalorder %s24, 1
      %p106 = por %p104, %p105
      %p107 = scmp.ne.s32.totalorder %s96, %s97
      %p108 = scmp.eq.s32.totalorder %s24, 0
      %p109 = por %p107, %p108
      %p110 = scmp.ne.s32.totalorder %s96, %s97
      %p111 = scmp.eq.s32.totalorder %s25, 1
      %p112 = por %p110, %p111
      %p114 = scmp.ne.s32.totalorder %s97, %s113
      %p115 = scmp.eq.s32.totalorder %s25, 0
      %p116 = por %p114, %p115
      %s117 = ssub.s32 %s27, %s34
      %p118 = scmp.eq.s32.totalorder %s117, 0
      %s120 = sadd.s32 %s119, 1
      %s121 = scalar_select %p118, %s119, %s120
      %p124 = pneg %p118
      %p125 = scmp.eq.s32.totalorder %s19, 1
      %p126 = por %p124, %p125
      %p127 = scmp.ne.s32.totalorder %s119, %s122
      %p128 = scmp.eq.s32.totalorder %s19, 0
      %p129 = por %p127, %p128
      %p130 = scmp.ne.s32.totalorder %s119, %s122
      %p131 = scmp.eq.s32.totalorder %s24, 1
      %p132 = por %p130, %p131
      %p133 = scmp.ne.s32.totalorder %s122, %s123
      %p134 = scmp.eq.s32.totalorder %s24, 0
      %p135 = por %p133, %p134
      %p136 = scmp.ne.s32.totalorder %s122, %s123
      %p137 = scmp.eq.s32.totalorder %s25, 1
      %p138 = por %p136, %p137
      %p140 = scmp.ne.s32.totalorder %s123, %s139
      %p141 = scmp.eq.s32.totalorder %s25, 0
      %p142 = por %p140, %p141
      %s143 = ssub.s32 %s27, %s34
      %p144 = scmp.eq.s32.totalorder %s143, 0
      %s146 = sadd.s32 %s145, 1
      %s147 = scalar_select %p144, %s145, %s146
      %p150 = pneg %p144
      %p151 = scmp.eq.s32.totalorder %s19, 1
      %p152 = por %p150, %p151
      %p153 = scmp.ne.s32.totalorder %s145, %s148
      %p154 = scmp.eq.s32.totalorder %s19, 0
      %p155 = por %p153, %p154
      %p156 = scmp.ne.s32.totalorder %s145, %s148
      %p157 = scmp.eq.s32.totalorder %s24, 1
      %p158 = por %p156, %p157
      %p159 = scmp.ne.s32.totalorder %s148, %s149
      %p160 = scmp.eq.s32.totalorder %s24, 0
      %p161 = por %p159, %p160
      %p162 = scmp.ne.s32.totalorder %s148, %s149
      %p163 = scmp.eq.s32.totalorder %s25, 1
      %p164 = por %p162, %p163
      %p166 = scmp.ne.s32.totalorder %s149, %s165
      %p167 = scmp.eq.s32.totalorder %s25, 0
      %p168 = por %p166, %p167
      %s169 = ssub.s32 %s27, %s34
      %p170 = scmp.eq.s32.totalorder %s169, 0
      %s172 = sadd.s32 %s171, 1
      %s173 = scalar_select %p170, %s171, %s172
      %p176 = pneg %p170
      %p177 = scmp.eq.s32.totalorder %s19, 1
      %p178 = por %p176, %p177
      %p179 = scmp.ne.s32.totalorder %s171, %s174
      %p180 = scmp.eq.s32.totalorder %s19, 0
      %p181 = por %p179, %p180
      %p182 = scmp.ne.s32.totalorder %s171, %s174
      %p183 = scmp.eq.s32.totalorder %s24, 1
      %p184 = por %p182, %p183
      %p185 = scmp.ne.s32.totalorder %s174, %s175
      %p186 = scmp.eq.s32.totalorder %s24, 0
      %p187 = por %p185, %p186
      %p188 = scmp.ne.s32.totalorder %s174, %s175
      %p189 = scmp.eq.s32.totalorder %s25, 1
      %p190 = por %p188, %p189
      %p192 = scmp.ne.s32.totalorder %s175, %s191
      %p193 = scmp.eq.s32.totalorder %s25, 0
      %p194 = por %p192, %p193
      %s195 = ssub.s32 %s27, %s34
      %p196 = scmp.eq.s32.totalorder %s195, 0
      %s198 = sadd.s32 %s197, 1
      %s199 = scalar_select %p196, %s197, %s198
      %p202 = pneg %p196
      %p203 = scmp.eq.s32.totalorder %s19, 1
      %p204 = por %p202, %p203
      %p205 = scmp.ne.s32.totalorder %s197, %s200
      %p206 = scmp.eq.s32.totalorder %s19, 0
      %p207 = por %p205, %p206
      %p208 = scmp.ne.s32.totalorder %s197, %s200
      %p209 = scmp.eq.s32.totalorder %s24, 1
      %p210 = por %p208, %p209
      %p211 = scmp.ne.s32.totalorder %s200, %s201
      %p212 = scmp.eq.s32.totalorder %s24, 0
      %p213 = por %p211, %p212
      %p214 = scmp.ne.s32.totalorder %s200, %s201
      %p215 = scmp.eq.s32.totalorder %s25, 1
      %p216 = por %p214, %p215
      %p218 = scmp.ne.s32.totalorder %s201, %s217
      %p219 = scmp.eq.s32.totalorder %s25, 0
      %p220 = por %p218, %p219
      %s221 = ssub.s32 %s27, %s34
      %p222 = scmp.eq.s32.totalorder %s221, 0
      %s224 = sadd.s32 %s223, 1
      %s225 = scalar_select %p222, %s223, %s224
      %p228 = pneg %p222
      %p229 = scmp.eq.s32.totalorder %s19, 1
      %p230 = por %p228, %p229
      %p231 = scmp.ne.s32.totalorder %s223, %s226
      %p232 = scmp.eq.s32.totalorder %s19, 0
      %p233 = por %p231, %p232
      %p234 = scmp.ne.s32.totalorder %s223, %s226
      %p235 = scmp.eq.s32.totalorder %s24, 1
      %p236 = por %p234, %p235
      %p237 = scmp.ne.s32.totalorder %s226, %s227
      %p238 = scmp.eq.s32.totalorder %s24, 0
      %p239 = por %p237, %p238
      %p240 = scmp.ne.s32.totalorder %s226, %s227
      %p241 = scmp.eq.s32.totalorder %s25, 1
      %p242 = por %p240, %p241
      %p244 = scmp.ne.s32.totalorder %s227, %s243
      %p245 = scmp.eq.s32.totalorder %s25, 0
      %p246 = por %p244, %p245
      %s247 = ssub.s32 %s26, %s38
      %p248 = scmp.eq.s32.totalorder %s247, 0
      %s250 = sadd.s32 %s249, 1
      %s251 = scalar_select %p248, %s249, %s250
      %p254 = pneg %p248
      %p255 = scmp.eq.s32.totalorder %s19, 1
      %p256 = por %p254, %p255
      %p257 = scmp.ne.s32.totalorder %s249, %s252
      %p258 = scmp.eq.s32.totalorder %s19, 0
      %p259 = por %p257, %p258
      %p260 = scmp.ne.s32.totalorder %s249, %s252
      %p261 = scmp.eq.s32.totalorder %s24, 1
      %p262 = por %p260, %p261
      %p263 = scmp.ne.s32.totalorder %s252, %s253
      %p264 = scmp.eq.s32.totalorder %s24, 0
      %p265 = por %p263, %p264
      %p266 = scmp.ne.s32.totalorder %s252, %s253
      %p267 = scmp.eq.s32.totalorder %s25, 1
      %p268 = por %p266, %p267
      %p270 = scmp.ne.s32.totalorder %s253, %s269
      %p271 = scmp.eq.s32.totalorder %s25, 0
      %p272 = por %p270, %p271
      %s273 = ssub.s32 %s26, %s38
      %p274 = scmp.eq.s32.totalorder %s273, 0
      %s276 = sadd.s32 %s275, 1
      %s277 = scalar_select %p274, %s275, %s276
      %p280 = pneg %p274
      %p281 = scmp.eq.s32.totalorder %s19, 1
      %p282 = por %p280, %p281
      %p283 = scmp.ne.s32.totalorder %s275, %s278
      %p284 = scmp.eq.s32.totalorder %s19, 0
      %p285 = por %p283, %p284
      %p286 = scmp.ne.s32.totalorder %s275, %s278
      %p287 = scmp.eq.s32.totalorder %s24, 1
      %p288 = por %p286, %p287
      %p289 = scmp.ne.s32.totalorder %s278, %s279
      %p290 = scmp.eq.s32.totalorder %s24, 0
      %p291 = por %p289, %p290
      %p292 = scmp.ne.s32.totalorder %s278, %s279
      %p293 = scmp.eq.s32.totalorder %s25, 1
      %p294 = por %p292, %p293
      %p296 = scmp.ne.s32.totalorder %s279, %s295
      %p297 = scmp.eq.s32.totalorder %s25, 0
      %p298 = por %p296, %p297
      %p299 = scmp.le.s32.totalorder 1, %s19
      %p300 = scmp.lt.s32.totalorder %s19, 3
      %p301 = pnand %p299, %p300
      %p302 = pneg %p301
      // Predicated region
      $region9: #{tpu_custom_call.1} parent=5 // pred_check
        _
      $region10: #{tpu_custom_call.1} parent=5 // pred_check_branch
        %304 = sbr.rel (%p301) target = $region12
      $region11: #{tpu_custom_call.1} parent=5 // pred_region
        %s305 = ssub.s32 %s19, 1
        // Predicated region
        $region13: #{tpu_custom_call.1} parent=11 // pred_check
          %p306 = pneg %p57
        $region14: #{tpu_custom_call.1} parent=11 // pred_check_branch
          %308 = sbr.rel (%p306) target = $region16
        $region15: #{tpu_custom_call.1} parent=11 // pred_region
          %s309 = smul.u32 2, %s28
          %p310 = scmp.lt.s32.totalorder %s309, 1
          %s311 = scalar_select %p310, %s309, 1
          %s312 = smul.addr %s311, 8
          %s313 = scalar_lea.vmem %s0, %s312
          %s314 = smul.u32 2, %s28
        $region16: #{tpu_custom_call.1} parent=11 // pred_fallthru
          _
        // Predicated region
        $region17: #{tpu_custom_call.1} parent=11 // pred_check
          %p315 = pneg %p83
        $region18: #{tpu_custom_call.1} parent=11 // pred_check_branch
          %317 = sbr.rel (%p315) target = $region20
        $region19: #{tpu_custom_call.1} parent=11 // pred_region
          %s318 = smul.u32 2, %s28
          %s320 = ssub.s32 256, 256
          %321 = vsyncadd [#allocation4], %s320
          %s322 = smul.addr %s318, 128
          %s323 = scalar_lea.hbm %s1, %s322
          %s324 = sshll.u32 [#allocation3], 4
          %s325 = int_to_ptr.vmem [resolvable:$true] %s324
          %330 = dma.hbm_to_vmem [thread:$0]  %s323, 256, %s325, [#allocation4], 128, 128, 8
        $region20: #{tpu_custom_call.1} parent=11 // pred_fallthru
          _
      $region12: #{tpu_custom_call.1} parent=5 // pred_fallthru
        _
      %p331 = scmp.lt.s32.totalorder %s19, 2
      // Predicated region
      $region21: #{tpu_custom_call.1} parent=5 // pred_check
        %p332 = pneg %p331
      $region22: #{tpu_custom_call.1} parent=5 // pred_check_branch
        %334 = sbr.rel (%p332) target = $region24
      $region23: #{tpu_custom_call.1} parent=5 // pred_region
        // Predicated region
        $region25: #{tpu_custom_call.1} parent=23 // pred_check
          %p335 = pneg %p103
        $region26: #{tpu_custom_call.1} parent=23 // pred_check_branch
          %337 = sbr.rel (%p335) target = $region28
        $region27: #{tpu_custom_call.1} parent=23 // pred_region
          %p338 = scmp.lt.s32.totalorder %s27, 1
          %s339 = scalar_select %p338, %s27, 1
          %s340 = smul.addr %s339, 4
          %s341 = smul.addr %s340, 4
          %s342 = scalar_lea.vmem %s2, %s341
        $region28: #{tpu_custom_call.1} parent=23 // pred_fallthru
          _
        // Predicated region
        $region29: #{tpu_custom_call.1} parent=23 // pred_check
          %p343 = pneg %p129
        $region30: #{tpu_custom_call.1} parent=23 // pred_check_branch
          %345 = sbr.rel (%p343) target = $region32
        $region31: #{tpu_custom_call.1} parent=23 // pred_region
          %p346 = scmp.lt.s32.totalorder %s27, 1
          %s347 = scalar_select %p346, %s27, 1
          %s348 = smul.addr %s347, 4
          %s349 = smul.addr %s348, 4
          %s350 = scalar_lea.vmem %s3, %s349
        $region32: #{tpu_custom_call.1} parent=23 // pred_fallthru
          _
        // Predicated region
        $region33: #{tpu_custom_call.1} parent=23 // pred_check
          %p351 = pneg %p155
        $region34: #{tpu_custom_call.1} parent=23 // pred_check_branch
          %353 = sbr.rel (%p351) target = $region36
        $region35: #{tpu_custom_call.1} parent=23 // pred_region
          %p354 = scmp.lt.s32.totalorder %s27, 1
          %s355 = scalar_select %p354, %s27, 1
          %s356 = smul.addr %s355, 4
          %s357 = smul.addr %s356, 4
          %s358 = scalar_lea.vmem %s4, %s357
        $region36: #{tpu_custom_call.1} parent=23 // pred_fallthru
          _
        // Predicated region
        $region37: #{tpu_custom_call.1} parent=23 // pred_check
          %p359 = pneg %p181
        $region38: #{tpu_custom_call.1} parent=23 // pred_check_branch
          %361 = sbr.rel (%p359) target = $region40
        $region39: #{tpu_custom_call.1} parent=23 // pred_region
          %p362 = scmp.lt.s32.totalorder %s27, 1
          %s363 = scalar_select %p362, %s27, 1
          %s364 = smul.addr %s363, 4
          %s365 = smul.addr %s364, 4
          %s366 = scalar_lea.vmem %s5, %s365
        $region40: #{tpu_custom_call.1} parent=23 // pred_fallthru
          _
        // Predicated region
        $region41: #{tpu_custom_call.1} parent=23 // pred_check
          %p367 = pneg %p207
        $region42: #{tpu_custom_call.1} parent=23 // pred_check_branch
          %369 = sbr.rel (%p367) target = $region44
        $region43: #{tpu_custom_call.1} parent=23 // pred_region
          %p370 = scmp.lt.s32.totalorder %s27, 1
          %s371 = scalar_select %p370, %s27, 1
          %s372 = smul.addr %s371, 8
          %s373 = smul.addr %s372, 4
          %s374 = scalar_lea.vmem %s6, %s373
        $region44: #{tpu_custom_call.1} parent=23 // pred_fallthru
          _
        // Predicated region
        $region45: #{tpu_custom_call.1} parent=23 // pred_check
          %p375 = pneg %p233
        $region46: #{tpu_custom_call.1} parent=23 // pred_check_branch
          %377 = sbr.rel (%p375) target = $region48
        $region47: #{tpu_custom_call.1} parent=23 // pred_region
          %p378 = scmp.lt.s32.totalorder %s27, 1
          %s379 = scalar_select %p378, %s27, 1
          %s380 = smul.addr %s379, 2
          %s381 = smul.addr %s380, 8
          %s382 = scalar_lea.vmem %s7, %s381
        $region48: #{tpu_custom_call.1} parent=23 // pred_fallthru
          _
      $region24: #{tpu_custom_call.1} parent=5 // pred_fallthru
        _
      %p383 = scmp.le.s32.totalorder 1, %s19
      %p384 = scmp.lt.s32.totalorder %s19, 3
      %p385 = pnand %p383, %p384
      %p386 = pneg %p385
      // Predicated region
      $region49: #{tpu_custom_call.1} parent=5 // pred_check
        _
      $region50: #{tpu_custom_call.1} parent=5 // pred_check_branch
        %388 = sbr.rel (%p385) target = $region52
      $region51: #{tpu_custom_call.1} parent=5 // pred_region
        %s389 = ssub.s32 %s19, 1
        // Predicated region
        $region53: #{tpu_custom_call.1} parent=51 // pred_check
          %p390 = pneg %p83
        $region54: #{tpu_custom_call.1} parent=51 // pred_check_branch
          %392 = sbr.rel (%p390) target = $region56
        $region55: #{tpu_custom_call.1} parent=51 // pred_region
          %393 = dma.done [#allocation4], 256
        $region56: #{tpu_custom_call.1} parent=51 // pred_fallthru
          _
        %s394 = smul.u32 2, %s28
        %p395 = scmp.lt.s32.totalorder %s394, 1
        %s396 = scalar_select %p395, %s394, 1
        %s397 = smul.addr %s396, 8
        %s398 = scalar_lea.vmem %s0, %s397
        %p399 = pneg %p57
        %p400 = pneg %p54
        %p401 = pneg %p83
        %p402 = pneg %p80
        %p403 = scmp.lt.s32.totalorder %s29, 1
        %s404 = scalar_select %p403, %s29, 1
        %s405 = smul.addr %s404, 4
        %s406 = smul.addr %s405, 4
        %s407 = scalar_lea.vmem %s2, %s406
        %p408 = pneg %p109
        %p409 = pneg %p106
        %p410 = scmp.lt.s32.totalorder %s29, 1
        %s411 = scalar_select %p410, %s29, 1
        %s412 = smul.addr %s411, 4
        %s413 = smul.addr %s412, 4
        %s414 = scalar_lea.vmem %s3, %s413
        %p415 = pneg %p135
        %p416 = pneg %p132
        %p417 = scmp.lt.s32.totalorder %s29, 1
        %s418 = scalar_select %p417, %s29, 1
        %s419 = smul.addr %s418, 4
        %s420 = smul.addr %s419, 4
        %s421 = scalar_lea.vmem %s4, %s420
        %p422 = pneg %p161
        %p423 = pneg %p158
        %p424 = scmp.lt.s32.totalorder %s29, 1
        %s425 = scalar_select %p424, %s29, 1
        %s426 = smul.addr %s425, 4
        %s427 = smul.addr %s426, 4
        %s428 = scalar_lea.vmem %s5, %s427
        %p429 = pneg %p187
        %p430 = pneg %p184
        %p431 = scmp.lt.s32.totalorder %s29, 1
        %s432 = scalar_select %p431, %s29, 1
        %s433 = smul.addr %s432, 8
        %s434 = smul.addr %s433, 4
        %s435 = scalar_lea.vmem %s6, %s434
        %p436 = pneg %p213
        %p437 = pneg %p210
        %p438 = scmp.lt.s32.totalorder %s29, 1
        %s439 = scalar_select %p438, %s29, 1
        %s440 = smul.addr %s439, 2
        %s441 = smul.addr %s440, 8
        %s442 = scalar_lea.vmem %s7, %s441
        %p443 = pneg %p239
        %p444 = pneg %p236
        %p445 = pneg %p265
        %p446 = pneg %p262
        %p447 = pneg %p291
        %p448 = pneg %p288
        %s449 = smul.u32 2, %s28
        %p450 = scmp.lt.s32.totalorder %s449, 1
        %s451 = scalar_select %p450, %s449, 1
        %s452 = smul.addr %s451, 8
        %s453 = scalar_lea.vmem %s0, %s452
        %s454 = smul.u32 2, %s28
        %s455 = smul.u32 2, %s28
        %p456 = scmp.lt.s32.totalorder %s29, 1
        %s457 = scalar_select %p456, %s29, 1
        %s458 = smul.addr %s457, 4
        %s459 = smul.addr %s458, 4
        %s460 = scalar_lea.vmem %s2, %s459
        %p461 = scmp.lt.s32.totalorder %s29, 1
        %s462 = scalar_select %p461, %s29, 1
        %s463 = smul.addr %s462, 4
        %s464 = smul.addr %s463, 4
        %s465 = scalar_lea.vmem %s3, %s464
        %p466 = scmp.lt.s32.totalorder %s29, 1
        %s467 = scalar_select %p466, %s29, 1
        %s468 = smul.addr %s467, 4
        %s469 = smul.addr %s468, 4
        %s470 = scalar_lea.vmem %s4, %s469
        %p471 = scmp.lt.s32.totalorder %s29, 1
        %s472 = scalar_select %p471, %s29, 1
        %s473 = smul.addr %s472, 4
        %s474 = smul.addr %s473, 4
        %s475 = scalar_lea.vmem %s5, %s474
        %p476 = scmp.lt.s32.totalorder %s29, 1
        %s477 = scalar_select %p476, %s29, 1
        %s478 = smul.addr %s477, 8
        %s479 = smul.addr %s478, 4
        %s480 = scalar_lea.vmem %s6, %s479
        %p481 = scmp.lt.s32.totalorder %s29, 1
        %s482 = scalar_select %p481, %s29, 1
        %s483 = smul.addr %s482, 2
        %s484 = smul.addr %s483, 8
        %s485 = scalar_lea.vmem %s7, %s484
        %s486 = smul.u32 2, %s28
        %s487 = smul.u32 2, %s28
        %p489 = scmp.eq.s32.totalorder %s29, 0
        // Predicated region
        $region57: #{tpu_custom_call.1} parent=51 // pred_check
          %p490 = pneg %p489
        $region58: #{tpu_custom_call.1} parent=51 // pred_check_branch
          %492 = sbr.rel (%p490) target = $region60
        $region59: #{tpu_custom_call.1} parent=51 // pred_region
          %v493 = vld [vmem:[%s453] sm:$0xff]
          %v494 = vld [vmem:[%s453 + $0x8] sm:$0xff]
          %vm495 = vcmask 261120
          %496 = vst.msk [vmem:[#allocation2] sm:$0xff] %vm495, %v493
          %497 = vst.msk [vmem:[#allocation2 + $0x8] sm:$0xff] %vm495, %v494
        $region60: #{tpu_custom_call.1} parent=51 // pred_fallthru
          _
        %v498 = vld [vmem:[#allocation2] sm:$0xff]
        %v499 = vld [vmem:[#allocation2 + $0x8] sm:$0xff]
        %v500 = vld [vmem:[#allocation3] sm:$0xff]
        %v501 = vld [vmem:[#allocation3 + $0x8] sm:$0xff]
        %v502 = vpack.c.bf16 %v501, %v500
        %v503 = vld [vmem:[%s485] sm:$0xff]
        %v504 = vld [vmem:[%s485 + $0x8] sm:$0x1]
        %v505 = vpack.c.bf16 %v499, %v498
        %v506 = vld [vmem:[%s460] sm:$0xf]
        %v507 = vld [vmem:[%s460 + $0x4] sm:$0xf]
        %v508 = vld [vmem:[%s460 + $0x8] sm:$0xf]
        %v509 = vld [vmem:[%s460 + $0xc] sm:$0xf]
        %v510 = vlaneseq
        %v511 = vshrl.u32 %v510, 7
        %v512 = vsub.s32 0, %v511
        %v513 = vrot.slane %v503, %v512
        %v518 = vunpack.c.l.b16 %v506
        %v519 = vunpack.c.l.b16 %v507
        %v520 = vunpack.c.l.b16 %v508
        %v521 = vunpack.c.l.b16 %v509
        %v522 = vpack.c.b16 %v519, %v518
        %v523 = vpack.c.b16 %v521, %v520
        %vm526 = vcmask 261120
        %v528 = vsel %vm526, %v505, 0
        %530 = vmatprep.subr.bf16.mxu0 0
        %531 = vmatpush1.bf16.msra.mxu0 0
        %532 = vmatprep.subr.bf16.mxu0 0
        %533 = vmatpush1.bf16.msra.mxu0 0
        %534 = vmatprep.subr.bf16.mxu0 0
        %535 = vmatpush1.bf16.msra.mxu0 0
        %536 = vmatprep.subr.bf16.mxu0 0
        %537 = vmatpush1.bf16.msra.mxu0 0
        %538 = vmatprep.subr.bf16.mxu0 0
        %539 = vmatpush1.bf16.msra.mxu0 0
        %540 = vmatprep.subr.bf16.mxu0 0
        %541 = vmatpush1.bf16.msra.mxu0 0
        %542 = vmatprep.subr.bf16.mxu0 0
        %543 = vmatpush1.bf16.msra.mxu0 %v523
        %544 = vmatprep.subr.bf16.mxu0 0
        %545 = vmatpush1.bf16.msra.mxu0 %v522
        %546 = vmatprep.subr.bf16.mxu0 0
        %547 = vmatpush2.bf16.msra.mxu0 0
        %548 = vmatprep.subr.bf16.mxu0 0
        %549 = vmatpush2.bf16.msra.mxu0 0
        %550 = vmatprep.subr.bf16.mxu0 0
        %551 = vmatpush2.bf16.msra.mxu0 0
        %552 = vmatprep.subr.bf16.mxu0 0
        %553 = vmatpush2.bf16.msra.mxu0 0
        %554 = vmatprep.subr.bf16.mxu0 0
        %555 = vmatpush2.bf16.msra.mxu0 0
        %556 = vmatprep.subr.bf16.mxu0 0
        %557 = vmatpush2.bf16.msra.mxu0 0
        %558 = vmatprep.subr.bf16.mxu0 0
        %559 = vmatpush2.bf16.msra.mxu0 0
        %560 = vmatprep.subr.bf16.mxu0 0
        %561 = vmatpush2.bf16.msra.mxu0 0
        %562 = vmatprep.mubr.bf16.mxu0 0
        %563 = vmatmul.mubr.bf16.gmra.mxu0 %v528
        %v564 = vpop.f32.mrf.mxu0
        %v565 = vadd.f32 %v513, %v564
        %v566 = vpop.f32.mrf.mxu0
        %v567 = vpop.f32.mrf.mxu0
        %v568 = vadd.f32 %v513, %v567
        %v569 = vpop.f32.mrf.mxu0
        %570 = vdwg.mxu0
        %v571 = vld [vmem:[%s465] sm:$0xf]
        %v572 = vld [vmem:[%s465 + $0x4] sm:$0xf]
        %v573 = vld [vmem:[%s465 + $0x8] sm:$0xf]
        %v574 = vld [vmem:[%s465 + $0xc] sm:$0xf]
        %v575 = vlaneseq
        %v576 = vshrl.u32 %v575, 7
        %v577 = vsub.s32 1, %v576
        %v578 = vrot.slane %v503, %v577
        %v583 = vunpack.c.l.b16 %v571
        %v584 = vunpack.c.l.b16 %v572
        %v585 = vunpack.c.l.b16 %v573
        %v586 = vunpack.c.l.b16 %v574
        %v587 = vpack.c.b16 %v584, %v583
        %v588 = vpack.c.b16 %v586, %v585
        %v592 = vsel %vm526, %v502, 0
        %594 = vmatprep.subr.bf16.mxu0 0
        %595 = vmatpush1.bf16.msra.mxu0 0
        %596 = vmatprep.subr.bf16.mxu0 0
        %597 = vmatpush1.bf16.msra.mxu0 0
        %598 = vmatprep.subr.bf16.mxu0 0
        %599 = vmatpush1.bf16.msra.mxu0 0
        %600 = vmatprep.subr.bf16.mxu0 0
        %601 = vmatpush1.bf16.msra.mxu0 0
        %602 = vmatprep.subr.bf16.mxu0 0
        %603 = vmatpush1.bf16.msra.mxu0 0
        %604 = vmatprep.subr.bf16.mxu0 0
        %605 = vmatpush1.bf16.msra.mxu0 0
        %606 = vmatprep.subr.bf16.mxu0 0
        %607 = vmatpush1.bf16.msra.mxu0 %v588
        %608 = vmatprep.subr.bf16.mxu0 0
        %609 = vmatpush1.bf16.msra.mxu0 %v587
        %610 = vmatprep.subr.bf16.mxu0 0
        %611 = vmatpush2.bf16.msra.mxu0 0
        %612 = vmatprep.subr.bf16.mxu0 0
        %613 = vmatpush2.bf16.msra.mxu0 0
        %614 = vmatprep.subr.bf16.mxu0 0
        %615 = vmatpush2.bf16.msra.mxu0 0
        %616 = vmatprep.subr.bf16.mxu0 0
        %617 = vmatpush2.bf16.msra.mxu0 0
        %618 = vmatprep.subr.bf16.mxu0 0
        %619 = vmatpush2.bf16.msra.mxu0 0
        %620 = vmatprep.subr.bf16.mxu0 0
        %621 = vmatpush2.bf16.msra.mxu0 0
        %622 = vmatprep.subr.bf16.mxu0 0
        %623 = vmatpush2.bf16.msra.mxu0 0
        %624 = vmatprep.subr.bf16.mxu0 0
        %625 = vmatpush2.bf16.msra.mxu0 0
        %626 = vmatprep.mubr.bf16.mxu0 0
        %627 = vmatmul.mubr.bf16.gmra.mxu0 %v592
        %v628 = vpop.f32.mrf.mxu0
        %v629 = vadd.f32 %v578, %v628
        %v630 = vpop.f32.mrf.mxu0
        %v631 = vpop.f32.mrf.mxu0
        %v632 = vadd.f32 %v578, %v631
        %v633 = vpop.f32.mrf.mxu0
        %634 = vdwg.mxu0
        %637 = vrot.lane.b32.xlu0 %v565, 120
        %v638 = vpop.permute.xlu0 %637
        %639 = vrot.lane.b32.xlu0 %v568, 120
        %v640 = vpop.permute.xlu0 %639
        %643 = vrot.lane.b32.xlu0 %v565, 112
        %v644 = vpop.permute.xlu0 %643
        %645 = vrot.lane.b32.xlu0 %v568, 112
        %v646 = vpop.permute.xlu0 %645
        %649 = vrot.lane.b32.xlu0 %v565, 104
        %v650 = vpop.permute.xlu0 %649
        %651 = vrot.lane.b32.xlu0 %v568, 104
        %v652 = vpop.permute.xlu0 %651
        %v655 = vcombine.low %v565, %v644
        %v656 = vcombine.high %v565, %v644
        %v658 = vunpack.c.l.s4 1983009808
        %v659 = vunpack.c.0.s8 %v658
        %v660 = vlaneseq
        %v661 = vshrl.u32 %v660, 7
        %v662 = vsub.s32 %v659, %v661
        %v663 = vrot.slane %v655, %v662
        %v665 = vunpack.c.l.s4 1983009808
        %v666 = vunpack.c.0.s8 %v665
        %v667 = vlaneseq
        %v668 = vshrl.u32 %v667, 7
        %v669 = vsub.s32 %v666, %v668
        %v670 = vrot.slane %v656, %v669
        %v671 = vcombine.low %v638, %v650
        %v672 = vcombine.high %v638, %v650
        %v674 = vunpack.c.l.s4 1983009808
        %v675 = vunpack.c.0.s8 %v674
        %v676 = vlaneseq
        %v677 = vshrl.u32 %v676, 7
        %v678 = vsub.s32 %v675, %v677
        %v679 = vrot.slane %v671, %v678
        %v681 = vunpack.c.l.s4 1983009808
        %v682 = vunpack.c.0.s8 %v681
        %v683 = vlaneseq
        %v684 = vshrl.u32 %v683, 7
        %v685 = vsub.s32 %v682, %v684
        %v686 = vrot.slane %v672, %v685
        %v687 = vcombine.low %v663, %v679
        %v688 = vcombine.high %v663, %v679
        %v690 = vunpack.c.l.s4 1934713408
        %v691 = vunpack.c.0.s8 %v690
        %v692 = vlaneseq
        %v693 = vshrl.u32 %v692, 7
        %v694 = vsub.s32 %v691, %v693
        %v695 = vrot.slane %v687, %v694
        %v697 = vunpack.c.l.s4 1934713408
        %v698 = vunpack.c.0.s8 %v697
        %v699 = vlaneseq
        %v700 = vshrl.u32 %v699, 7
        %v701 = vsub.s32 %v698, %v700
        %v702 = vrot.slane %v688, %v701
        %v703 = vcombine.low %v670, %v686
        %v704 = vcombine.high %v670, %v686
        %v706 = vunpack.c.l.s4 1934713408
        %v707 = vunpack.c.0.s8 %v706
        %v708 = vlaneseq
        %v709 = vshrl.u32 %v708, 7
        %v710 = vsub.s32 %v707, %v709
        %v711 = vrot.slane %v703, %v710
        %v713 = vunpack.c.l.s4 1934713408
        %v714 = vunpack.c.0.s8 %v713
        %v715 = vlaneseq
        %v716 = vshrl.u32 %v715, 7
        %v717 = vsub.s32 %v714, %v716
        %v718 = vrot.slane %v704, %v717
        %v719 = vcombine.high %v695, 0.0
        %v720 = vcombine.high %v702, 0.0
        %v721 = vcombine.high %v711, 0.0
        %v722 = vcombine.high %v718, 0.0
        %v723 = vcombine.low %v568, %v646
        %v724 = vcombine.high %v568, %v646
        %v726 = vunpack.c.l.s4 1983009808
        %v727 = vunpack.c.0.s8 %v726
        %v728 = vlaneseq
        %v729 = vshrl.u32 %v728, 7
        %v730 = vsub.s32 %v727, %v729
        %v731 = vrot.slane %v723, %v730
        %v733 = vunpack.c.l.s4 1983009808
        %v734 = vunpack.c.0.s8 %v733
        %v735 = vlaneseq
        %v736 = vshrl.u32 %v735, 7
        %v737 = vsub.s32 %v734, %v736
        %v738 = vrot.slane %v724, %v737
        %v739 = vcombine.low %v640, %v652
        %v740 = vcombine.high %v640, %v652
        %v742 = vunpack.c.l.s4 1983009808
        %v743 = vunpack.c.0.s8 %v742
        %v744 = vlaneseq
        %v745 = vshrl.u32 %v744, 7
        %v746 = vsub.s32 %v743, %v745
        %v747 = vrot.slane %v739, %v746
        %v749 = vunpack.c.l.s4 1983009808
        %v750 = vunpack.c.0.s8 %v749
        %v751 = vlaneseq
        %v752 = vshrl.u32 %v751, 7
        %v753 = vsub.s32 %v750, %v752
        %v754 = vrot.slane %v740, %v753
        %v755 = vcombine.low %v731, %v747
        %v756 = vcombine.high %v731, %v747
        %v758 = vunpack.c.l.s4 1934713408
        %v759 = vunpack.c.0.s8 %v758
        %v760 = vlaneseq
        %v761 = vshrl.u32 %v760, 7
        %v762 = vsub.s32 %v759, %v761
        %v763 = vrot.slane %v755, %v762
        %v765 = vunpack.c.l.s4 1934713408
        %v766 = vunpack.c.0.s8 %v765
        %v767 = vlaneseq
        %v768 = vshrl.u32 %v767, 7
        %v769 = vsub.s32 %v766, %v768
        %v770 = vrot.slane %v756, %v769
        %v771 = vcombine.low %v738, %v754
        %v772 = vcombine.high %v738, %v754
        %v774 = vunpack.c.l.s4 1934713408
        %v775 = vunpack.c.0.s8 %v774
        %v776 = vlaneseq
        %v777 = vshrl.u32 %v776, 7
        %v778 = vsub.s32 %v775, %v777
        %v779 = vrot.slane %v771, %v778
        %v781 = vunpack.c.l.s4 1934713408
        %v782 = vunpack.c.0.s8 %v781
        %v783 = vlaneseq
        %v784 = vshrl.u32 %v783, 7
        %v785 = vsub.s32 %v782, %v784
        %v786 = vrot.slane %v772, %v785
        %v787 = vcombine.high %v763, 0.0
        %v788 = vcombine.high %v770, 0.0
        %v789 = vcombine.high %v779, 0.0
        %v790 = vcombine.high %v786, 0.0
        %v791 = vcombine.low %v695, %v702
        %v793 = vunpack.c.l.s4 1983009808
        %v794 = vunpack.c.0.s8 %v793
        %v795 = vlaneseq
        %v796 = vshrl.u32 %v795, 7
        %v797 = vsub.s32 %v794, %v796
        %v798 = vrot.slane %v791, %v797
        %v799 = vcombine.low %v719, %v720
        %v801 = vunpack.c.l.s4 1983009808
        %v802 = vunpack.c.0.s8 %v801
        %v803 = vlaneseq
        %v804 = vshrl.u32 %v803, 7
        %v805 = vsub.s32 %v802, %v804
        %v806 = vrot.slane %v799, %v805
        %v807 = vcombine.low %v711, %v718
        %v809 = vunpack.c.l.s4 1983009808
        %v810 = vunpack.c.0.s8 %v809
        %v811 = vlaneseq
        %v812 = vshrl.u32 %v811, 7
        %v813 = vsub.s32 %v810, %v812
        %v814 = vrot.slane %v807, %v813
        %v815 = vcombine.low %v721, %v722
        %v817 = vunpack.c.l.s4 1983009808
        %v818 = vunpack.c.0.s8 %v817
        %v819 = vlaneseq
        %v820 = vshrl.u32 %v819, 7
        %v821 = vsub.s32 %v818, %v820
        %v822 = vrot.slane %v815, %v821
        %v823 = vcombine.low %v798, %v806
        %v824 = vcombine.high %v798, %v806
        %v826 = vunpack.c.l.s4 1934713408
        %v827 = vunpack.c.0.s8 %v826
        %v828 = vlaneseq
        %v829 = vshrl.u32 %v828, 7
        %v830 = vsub.s32 %v827, %v829
        %v831 = vrot.slane %v823, %v830
        %v833 = vunpack.c.l.s4 1934713408
        %v834 = vunpack.c.0.s8 %v833
        %v835 = vlaneseq
        %v836 = vshrl.u32 %v835, 7
        %v837 = vsub.s32 %v834, %v836
        %v838 = vrot.slane %v824, %v837
        %v839 = vcombine.low %v814, %v822
        %v840 = vcombine.high %v814, %v822
        %v842 = vunpack.c.l.s4 1934713408
        %v843 = vunpack.c.0.s8 %v842
        %v844 = vlaneseq
        %v845 = vshrl.u32 %v844, 7
        %v846 = vsub.s32 %v843, %v845
        %v847 = vrot.slane %v839, %v846
        %v849 = vunpack.c.l.s4 1934713408
        %v850 = vunpack.c.0.s8 %v849
        %v851 = vlaneseq
        %v852 = vshrl.u32 %v851, 7
        %v853 = vsub.s32 %v850, %v852
        %v854 = vrot.slane %v840, %v853
        %v855 = vcombine.low %v831, %v847
        %v856 = vcombine.high %v831, %v847
        %v857 = vcombine.low %v838, %v854
        %v858 = vcombine.high %v838, %v854
        %v859 = vcombine.low %v763, %v770
        %v861 = vunpack.c.l.s4 1983009808
        %v862 = vunpack.c.0.s8 %v861
        %v863 = vlaneseq
        %v864 = vshrl.u32 %v863, 7
        %v865 = vsub.s32 %v862, %v864
        %v866 = vrot.slane %v859, %v865
        %v867 = vcombine.low %v787, %v788
        %v869 = vunpack.c.l.s4 1983009808
        %v870 = vunpack.c.0.s8 %v869
        %v871 = vlaneseq
        %v872 = vshrl.u32 %v871, 7
        %v873 = vsub.s32 %v870, %v872
        %v874 = vrot.slane %v867, %v873
        %v875 = vcombine.low %v779, %v786
        %v877 = vunpack.c.l.s4 1983009808
        %v878 = vunpack.c.0.s8 %v877
        %v879 = vlaneseq
        %v880 = vshrl.u32 %v879, 7
        %v881 = vsub.s32 %v878, %v880
        %v882 = vrot.slane %v875, %v881
        %v883 = vcombine.low %v789, %v790
        %v885 = vunpack.c.l.s4 1983009808
        %v886 = vunpack.c.0.s8 %v885
        %v887 = vlaneseq
        %v888 = vshrl.u32 %v887, 7
        %v889 = vsub.s32 %v886, %v888
        %v890 = vrot.slane %v883, %v889
        %v891 = vcombine.low %v866, %v874
        %v892 = vcombine.high %v866, %v874
        %v894 = vunpack.c.l.s4 1934713408
        %v895 = vunpack.c.0.s8 %v894
        %v896 = vlaneseq
        %v897 = vshrl.u32 %v896, 7
        %v898 = vsub.s32 %v895, %v897
        %v899 = vrot.slane %v891, %v898
        %v901 = vunpack.c.l.s4 1934713408
        %v902 = vunpack.c.0.s8 %v901
        %v903 = vlaneseq
        %v904 = vshrl.u32 %v903, 7
        %v905 = vsub.s32 %v902, %v904
        %v906 = vrot.slane %v892, %v905
        %v907 = vcombine.low %v882, %v890
        %v908 = vcombine.high %v882, %v890
        %v910 = vunpack.c.l.s4 1934713408
        %v911 = vunpack.c.0.s8 %v910
        %v912 = vlaneseq
        %v913 = vshrl.u32 %v912, 7
        %v914 = vsub.s32 %v911, %v913
        %v915 = vrot.slane %v907, %v914
        %v917 = vunpack.c.l.s4 1934713408
        %v918 = vunpack.c.0.s8 %v917
        %v919 = vlaneseq
        %v920 = vshrl.u32 %v919, 7
        %v921 = vsub.s32 %v918, %v920
        %v922 = vrot.slane %v908, %v921
        %v923 = vcombine.low %v899, %v915
        %v924 = vcombine.high %v899, %v915
        %v925 = vcombine.low %v906, %v922
        %v926 = vcombine.high %v906, %v922
        %v927 = vpack.c.bf16 %v855, %v855
        %v928 = vpack.c.bf16 %v856, %v856
        %v929 = vpack.c.bf16 %v857, %v857
        %v930 = vpack.c.bf16 %v858, %v858
        %v931 = vpack.c.bf16 %v923, %v923
        %v932 = vpack.c.bf16 %v924, %v924
        %v933 = vpack.c.bf16 %v925, %v925
        %v934 = vpack.c.bf16 %v926, %v926
        %937 = vrot.lane.b32.xlu0 %v629, 120
        %v938 = vpop.permute.xlu0 %937
        %939 = vrot.lane.b32.xlu0 %v632, 120
        %v940 = vpop.permute.xlu0 %939
        %943 = vrot.lane.b32.xlu0 %v629, 112
        %v944 = vpop.permute.xlu0 %943
        %945 = vrot.lane.b32.xlu0 %v632, 112
        %v946 = vpop.permute.xlu0 %945
        %949 = vrot.lane.b32.xlu0 %v629, 104
        %v950 = vpop.permute.xlu0 %949
        %951 = vrot.lane.b32.xlu0 %v632, 104
        %v952 = vpop.permute.xlu0 %951
        %v955 = vcombine.low %v629, %v944
        %v956 = vcombine.high %v629, %v944
        %v958 = vunpack.c.l.s4 1983009808
        %v959 = vunpack.c.0.s8 %v958
        %v960 = vlaneseq
        %v961 = vshrl.u32 %v960, 7
        %v962 = vsub.s32 %v959, %v961
        %v963 = vrot.slane %v955, %v962
        %v965 = vunpack.c.l.s4 1983009808
        %v966 = vunpack.c.0.s8 %v965
        %v967 = vlaneseq
        %v968 = vshrl.u32 %v967, 7
        %v969 = vsub.s32 %v966, %v968
        %v970 = vrot.slane %v956, %v969
        %v971 = vcombine.low %v938, %v950
        %v972 = vcombine.high %v938, %v950
        %v974 = vunpack.c.l.s4 1983009808
        %v975 = vunpack.c.0.s8 %v974
        %v976 = vlaneseq
        %v977 = vshrl.u32 %v976, 7
        %v978 = vsub.s32 %v975, %v977
        %v979 = vrot.slane %v971, %v978
        %v981 = vunpack.c.l.s4 1983009808
        %v982 = vunpack.c.0.s8 %v981
        %v983 = vlaneseq
        %v984 = vshrl.u32 %v983, 7
        %v985 = vsub.s32 %v982, %v984
        %v986 = vrot.slane %v972, %v985
        %v987 = vcombine.low %v963, %v979
        %v988 = vcombine.high %v963, %v979
        %v990 = vunpack.c.l.s4 1934713408
        %v991 = vunpack.c.0.s8 %v990
        %v992 = vlaneseq
        %v993 = vshrl.u32 %v992, 7
        %v994 = vsub.s32 %v991, %v993
        %v995 = vrot.slane %v987, %v994
        %v997 = vunpack.c.l.s4 1934713408
        %v998 = vunpack.c.0.s8 %v997
        %v999 = vlaneseq
        %v1000 = vshrl.u32 %v999, 7
        %v1001 = vsub.s32 %v998, %v1000
        %v1002 = vrot.slane %v988, %v1001
        %v1003 = vcombine.low %v970, %v986
        %v1004 = vcombine.high %v970, %v986
        %v1006 = vunpack.c.l.s4 1934713408
        %v1007 = vunpack.c.0.s8 %v1006
        %v1008 = vlaneseq
        %v1009 = vshrl.u32 %v1008, 7
        %v1010 = vsub.s32 %v1007, %v1009
        %v1011 = vrot.slane %v1003, %v1010
        %v1013 = vunpack.c.l.s4 1934713408
        %v1014 = vunpack.c.0.s8 %v1013
        %v1015 = vlaneseq
        %v1016 = vshrl.u32 %v1015, 7
        %v1017 = vsub.s32 %v1014, %v1016
        %v1018 = vrot.slane %v1004, %v1017
        %v1019 = vcombine.high %v995, 0.0
        %v1020 = vcombine.high %v1002, 0.0
        %v1021 = vcombine.high %v1011, 0.0
        %v1022 = vcombine.high %v1018, 0.0
        %v1023 = vcombine.low %v632, %v946
        %v1024 = vcombine.high %v632, %v946
        %v1026 = vunpack.c.l.s4 1983009808
        %v1027 = vunpack.c.0.s8 %v1026
        %v1028 = vlaneseq
        %v1029 = vshrl.u32 %v1028, 7
        %v1030 = vsub.s32 %v1027, %v1029
        %v1031 = vrot.slane %v1023, %v1030
        %v1033 = vunpack.c.l.s4 1983009808
        %v1034 = vunpack.c.0.s8 %v1033
        %v1035 = vlaneseq
        %v1036 = vshrl.u32 %v1035, 7
        %v1037 = vsub.s32 %v1034, %v1036
        %v1038 = vrot.slane %v1024, %v1037
        %v1039 = vcombine.low %v940, %v952
        %v1040 = vcombine.high %v940, %v952
        %v1042 = vunpack.c.l.s4 1983009808
        %v1043 = vunpack.c.0.s8 %v1042
        %v1044 = vlaneseq
        %v1045 = vshrl.u32 %v1044, 7
        %v1046 = vsub.s32 %v1043, %v1045
        %v1047 = vrot.slane %v1039, %v1046
        %v1049 = vunpack.c.l.s4 1983009808
        %v1050 = vunpack.c.0.s8 %v1049
        %v1051 = vlaneseq
        %v1052 = vshrl.u32 %v1051, 7
        %v1053 = vsub.s32 %v1050, %v1052
        %v1054 = vrot.slane %v1040, %v1053
        %v1055 = vcombine.low %v1031, %v1047
        %v1056 = vcombine.high %v1031, %v1047
        %v1058 = vunpack.c.l.s4 1934713408
        %v1059 = vunpack.c.0.s8 %v1058
        %v1060 = vlaneseq
        %v1061 = vshrl.u32 %v1060, 7
        %v1062 = vsub.s32 %v1059, %v1061
        %v1063 = vrot.slane %v1055, %v1062
        %v1065 = vunpack.c.l.s4 1934713408
        %v1066 = vunpack.c.0.s8 %v1065
        %v1067 = vlaneseq
        %v1068 = vshrl.u32 %v1067, 7
        %v1069 = vsub.s32 %v1066, %v1068
        %v1070 = vrot.slane %v1056, %v1069
        %v1071 = vcombine.low %v1038, %v1054
        %v1072 = vcombine.high %v1038, %v1054
        %v1074 = vunpack.c.l.s4 1934713408
        %v1075 = vunpack.c.0.s8 %v1074
        %v1076 = vlaneseq
        %v1077 = vshrl.u32 %v1076, 7
        %v1078 = vsub.s32 %v1075, %v1077
        %v1079 = vrot.slane %v1071, %v1078
        %v1081 = vunpack.c.l.s4 1934713408
        %v1082 = vunpack.c.0.s8 %v1081
        %v1083 = vlaneseq
        %v1084 = vshrl.u32 %v1083, 7
        %v1085 = vsub.s32 %v1082, %v1084
        %v1086 = vrot.slane %v1072, %v1085
        %v1087 = vcombine.high %v1063, 0.0
        %v1088 = vcombine.high %v1070, 0.0
        %v1089 = vcombine.high %v1079, 0.0
        %v1090 = vcombine.high %v1086, 0.0
        %v1091 = vcombine.low %v995, %v1002
        %v1093 = vunpack.c.l.s4 1983009808
        %v1094 = vunpack.c.0.s8 %v1093
        %v1095 = vlaneseq
        %v1096 = vshrl.u32 %v1095, 7
        %v1097 = vsub.s32 %v1094, %v1096
        %v1098 = vrot.slane %v1091, %v1097
        %v1099 = vcombine.low %v1019, %v1020
        %v1101 = vunpack.c.l.s4 1983009808
        %v1102 = vunpack.c.0.s8 %v1101
        %v1103 = vlaneseq
        %v1104 = vshrl.u32 %v1103, 7
        %v1105 = vsub.s32 %v1102, %v1104
        %v1106 = vrot.slane %v1099, %v1105
        %v1107 = vcombine.low %v1011, %v1018
        %v1109 = vunpack.c.l.s4 1983009808
        %v1110 = vunpack.c.0.s8 %v1109
        %v1111 = vlaneseq
        %v1112 = vshrl.u32 %v1111, 7
        %v1113 = vsub.s32 %v1110, %v1112
        %v1114 = vrot.slane %v1107, %v1113
        %v1115 = vcombine.low %v1021, %v1022
        %v1117 = vunpack.c.l.s4 1983009808
        %v1118 = vunpack.c.0.s8 %v1117
        %v1119 = vlaneseq
        %v1120 = vshrl.u32 %v1119, 7
        %v1121 = vsub.s32 %v1118, %v1120
        %v1122 = vrot.slane %v1115, %v1121
        %v1123 = vcombine.low %v1098, %v1106
        %v1124 = vcombine.high %v1098, %v1106
        %v1126 = vunpack.c.l.s4 1934713408
        %v1127 = vunpack.c.0.s8 %v1126
        %v1128 = vlaneseq
        %v1129 = vshrl.u32 %v1128, 7
        %v1130 = vsub.s32 %v1127, %v1129
        %v1131 = vrot.slane %v1123, %v1130
        %v1133 = vunpack.c.l.s4 1934713408
        %v1134 = vunpack.c.0.s8 %v1133
        %v1135 = vlaneseq
        %v1136 = vshrl.u32 %v1135, 7
        %v1137 = vsub.s32 %v1134, %v1136
        %v1138 = vrot.slane %v1124, %v1137
        %v1139 = vcombine.low %v1114, %v1122
        %v1140 = vcombine.high %v1114, %v1122
        %v1142 = vunpack.c.l.s4 1934713408
        %v1143 = vunpack.c.0.s8 %v1142
        %v1144 = vlaneseq
        %v1145 = vshrl.u32 %v1144, 7
        %v1146 = vsub.s32 %v1143, %v1145
        %v1147 = vrot.slane %v1139, %v1146
        %v1149 = vunpack.c.l.s4 1934713408
        %v1150 = vunpack.c.0.s8 %v1149
        %v1151 = vlaneseq
        %v1152 = vshrl.u32 %v1151, 7
        %v1153 = vsub.s32 %v1150, %v1152
        %v1154 = vrot.slane %v1140, %v1153
        %v1155 = vcombine.low %v1131, %v1147
        %v1156 = vcombine.high %v1131, %v1147
        %v1157 = vcombine.low %v1138, %v1154
        %v1158 = vcombine.high %v1138, %v1154
        %v1159 = vcombine.low %v1063, %v1070
        %v1161 = vunpack.c.l.s4 1983009808
        %v1162 = vunpack.c.0.s8 %v1161
        %v1163 = vlaneseq
        %v1164 = vshrl.u32 %v1163, 7
        %v1165 = vsub.s32 %v1162, %v1164
        %v1166 = vrot.slane %v1159, %v1165
        %v1167 = vcombine.low %v1087, %v1088
        %v1169 = vunpack.c.l.s4 1983009808
        %v1170 = vunpack.c.0.s8 %v1169
        %v1171 = vlaneseq
        %v1172 = vshrl.u32 %v1171, 7
        %v1173 = vsub.s32 %v1170, %v1172
        %v1174 = vrot.slane %v1167, %v1173
        %v1175 = vcombine.low %v1079, %v1086
        %v1177 = vunpack.c.l.s4 1983009808
        %v1178 = vunpack.c.0.s8 %v1177
        %v1179 = vlaneseq
        %v1180 = vshrl.u32 %v1179, 7
        %v1181 = vsub.s32 %v1178, %v1180
        %v1182 = vrot.slane %v1175, %v1181
        %v1183 = vcombine.low %v1089, %v1090
        %v1185 = vunpack.c.l.s4 1983009808
        %v1186 = vunpack.c.0.s8 %v1185
        %v1187 = vlaneseq
        %v1188 = vshrl.u32 %v1187, 7
        %v1189 = vsub.s32 %v1186, %v1188
        %v1190 = vrot.slane %v1183, %v1189
        %v1191 = vcombine.low %v1166, %v1174
        %v1192 = vcombine.high %v1166, %v1174
        %v1194 = vunpack.c.l.s4 1934713408
        %v1195 = vunpack.c.0.s8 %v1194
        %v1196 = vlaneseq
        %v1197 = vshrl.u32 %v1196, 7
        %v1198 = vsub.s32 %v1195, %v1197
        %v1199 = vrot.slane %v1191, %v1198
        %v1201 = vunpack.c.l.s4 1934713408
        %v1202 = vunpack.c.0.s8 %v1201
        %v1203 = vlaneseq
        %v1204 = vshrl.u32 %v1203, 7
        %v1205 = vsub.s32 %v1202, %v1204
        %v1206 = vrot.slane %v1192, %v1205
        %v1207 = vcombine.low %v1182, %v1190
        %v1208 = vcombine.high %v1182, %v1190
        %v1210 = vunpack.c.l.s4 1934713408
        %v1211 = vunpack.c.0.s8 %v1210
        %v1212 = vlaneseq
        %v1213 = vshrl.u32 %v1212, 7
        %v1214 = vsub.s32 %v1211, %v1213
        %v1215 = vrot.slane %v1207, %v1214
        %v1217 = vunpack.c.l.s4 1934713408
        %v1218 = vunpack.c.0.s8 %v1217
        %v1219 = vlaneseq
        %v1220 = vshrl.u32 %v1219, 7
        %v1221 = vsub.s32 %v1218, %v1220
        %v1222 = vrot.slane %v1208, %v1221
        %v1223 = vcombine.low %v1199, %v1215
        %v1224 = vcombine.high %v1199, %v1215
        %v1225 = vcombine.low %v1206, %v1222
        %v1226 = vcombine.high %v1206, %v1222
        %v1227 = vpack.c.bf16 %v1155, %v1155
        %v1228 = vpack.c.bf16 %v1156, %v1156
        %v1229 = vpack.c.bf16 %v1157, %v1157
        %v1230 = vpack.c.bf16 %v1158, %v1158
        %v1231 = vpack.c.bf16 %v1223, %v1223
        %v1232 = vpack.c.bf16 %v1224, %v1224
        %v1233 = vpack.c.bf16 %v1225, %v1225
        %v1234 = vpack.c.bf16 %v1226, %v1226
        %1235 = vrot.lane.b32.xlu0 %v629, 96
        %v1236 = vpop.permute.xlu0 %1235
        %1237 = vrot.lane.b32.xlu0 %v632, 96
        %v1238 = vpop.permute.xlu0 %1237
        %1239 = vrot.lane.b32.xlu0 %v938, 96
        %v1240 = vpop.permute.xlu0 %1239
        %1241 = vrot.lane.b32.xlu0 %v940, 96
        %v1242 = vpop.permute.xlu0 %1241
        %1243 = vrot.lane.b32.xlu0 %v944, 96
        %v1244 = vpop.permute.xlu0 %1243
        %1245 = vrot.lane.b32.xlu0 %v946, 96
        %v1246 = vpop.permute.xlu0 %1245
        %1247 = vrot.lane.b32.xlu0 %v950, 96
        %v1248 = vpop.permute.xlu0 %1247
        %1249 = vrot.lane.b32.xlu0 %v952, 96
        %v1250 = vpop.permute.xlu0 %1249
        %v1259 = vcombine.low %v1236, %v1244
        %v1260 = vcombine.high %v1236, %v1244
        %v1262 = vunpack.c.l.s4 1983009808
        %v1263 = vunpack.c.0.s8 %v1262
        %v1264 = vlaneseq
        %v1265 = vshrl.u32 %v1264, 7
        %v1266 = vsub.s32 %v1263, %v1265
        %v1267 = vrot.slane %v1259, %v1266
        %v1269 = vunpack.c.l.s4 1983009808
        %v1270 = vunpack.c.0.s8 %v1269
        %v1271 = vlaneseq
        %v1272 = vshrl.u32 %v1271, 7
        %v1273 = vsub.s32 %v1270, %v1272
        %v1274 = vrot.slane %v1260, %v1273
        %v1275 = vcombine.low %v1240, %v1248
        %v1276 = vcombine.high %v1240, %v1248
        %v1278 = vunpack.c.l.s4 1983009808
        %v1279 = vunpack.c.0.s8 %v1278
        %v1280 = vlaneseq
        %v1281 = vshrl.u32 %v1280, 7
        %v1282 = vsub.s32 %v1279, %v1281
        %v1283 = vrot.slane %v1275, %v1282
        %v1285 = vunpack.c.l.s4 1983009808
        %v1286 = vunpack.c.0.s8 %v1285
        %v1287 = vlaneseq
        %v1288 = vshrl.u32 %v1287, 7
        %v1289 = vsub.s32 %v1286, %v1288
        %v1290 = vrot.slane %v1276, %v1289
        %v1291 = vcombine.low %v1267, %v1283
        %v1292 = vcombine.high %v1267, %v1283
        %v1294 = vunpack.c.l.s4 1934713408
        %v1295 = vunpack.c.0.s8 %v1294
        %v1296 = vlaneseq
        %v1297 = vshrl.u32 %v1296, 7
        %v1298 = vsub.s32 %v1295, %v1297
        %v1299 = vrot.slane %v1291, %v1298
        %v1301 = vunpack.c.l.s4 1934713408
        %v1302 = vunpack.c.0.s8 %v1301
        %v1303 = vlaneseq
        %v1304 = vshrl.u32 %v1303, 7
        %v1305 = vsub.s32 %v1302, %v1304
        %v1306 = vrot.slane %v1292, %v1305
        %v1307 = vcombine.low %v1274, %v1290
        %v1308 = vcombine.high %v1274, %v1290
        %v1310 = vunpack.c.l.s4 1934713408
        %v1311 = vunpack.c.0.s8 %v1310
        %v1312 = vlaneseq
        %v1313 = vshrl.u32 %v1312, 7
        %v1314 = vsub.s32 %v1311, %v1313
        %v1315 = vrot.slane %v1307, %v1314
        %v1317 = vunpack.c.l.s4 1934713408
        %v1318 = vunpack.c.0.s8 %v1317
        %v1319 = vlaneseq
        %v1320 = vshrl.u32 %v1319, 7
        %v1321 = vsub.s32 %v1318, %v1320
        %v1322 = vrot.slane %v1308, %v1321
        %v1323 = vcombine.high %v1299, 0.0
        %v1324 = vcombine.high %v1306, 0.0
        %v1325 = vcombine.high %v1315, 0.0
        %v1326 = vcombine.high %v1322, 0.0
        %v1327 = vcombine.low %v1238, %v1246
        %v1328 = vcombine.high %v1238, %v1246
        %v1330 = vunpack.c.l.s4 1983009808
        %v1331 = vunpack.c.0.s8 %v1330
        %v1332 = vlaneseq
        %v1333 = vshrl.u32 %v1332, 7
        %v1334 = vsub.s32 %v1331, %v1333
        %v1335 = vrot.slane %v1327, %v1334
        %v1337 = vunpack.c.l.s4 1983009808
        %v1338 = vunpack.c.0.s8 %v1337
        %v1339 = vlaneseq
        %v1340 = vshrl.u32 %v1339, 7
        %v1341 = vsub.s32 %v1338, %v1340
        %v1342 = vrot.slane %v1328, %v1341
        %v1343 = vcombine.low %v1242, %v1250
        %v1344 = vcombine.high %v1242, %v1250
        %v1346 = vunpack.c.l.s4 1983009808
        %v1347 = vunpack.c.0.s8 %v1346
        %v1348 = vlaneseq
        %v1349 = vshrl.u32 %v1348, 7
        %v1350 = vsub.s32 %v1347, %v1349
        %v1351 = vrot.slane %v1343, %v1350
        %v1353 = vunpack.c.l.s4 1983009808
        %v1354 = vunpack.c.0.s8 %v1353
        %v1355 = vlaneseq
        %v1356 = vshrl.u32 %v1355, 7
        %v1357 = vsub.s32 %v1354, %v1356
        %v1358 = vrot.slane %v1344, %v1357
        %v1359 = vcombine.low %v1335, %v1351
        %v1360 = vcombine.high %v1335, %v1351
        %v1362 = vunpack.c.l.s4 1934713408
        %v1363 = vunpack.c.0.s8 %v1362
        %v1364 = vlaneseq
        %v1365 = vshrl.u32 %v1364, 7
        %v1366 = vsub.s32 %v1363, %v1365
        %v1367 = vrot.slane %v1359, %v1366
        %v1369 = vunpack.c.l.s4 1934713408
        %v1370 = vunpack.c.0.s8 %v1369
        %v1371 = vlaneseq
        %v1372 = vshrl.u32 %v1371, 7
        %v1373 = vsub.s32 %v1370, %v1372
        %v1374 = vrot.slane %v1360, %v1373
        %v1375 = vcombine.low %v1342, %v1358
        %v1376 = vcombine.high %v1342, %v1358
        %v1378 = vunpack.c.l.s4 1934713408
        %v1379 = vunpack.c.0.s8 %v1378
        %v1380 = vlaneseq
        %v1381 = vshrl.u32 %v1380, 7
        %v1382 = vsub.s32 %v1379, %v1381
        %v1383 = vrot.slane %v1375, %v1382
        %v1385 = vunpack.c.l.s4 1934713408
        %v1386 = vunpack.c.0.s8 %v1385
        %v1387 = vlaneseq
        %v1388 = vshrl.u32 %v1387, 7
        %v1389 = vsub.s32 %v1386, %v1388
        %v1390 = vrot.slane %v1376, %v1389
        %v1391 = vcombine.high %v1367, 0.0
        %v1392 = vcombine.high %v1374, 0.0
        %v1393 = vcombine.high %v1383, 0.0
        %v1394 = vcombine.high %v1390, 0.0
        %v1395 = vcombine.low %v1299, %v1306
        %v1397 = vunpack.c.l.s4 1983009808
        %v1398 = vunpack.c.0.s8 %v1397
        %v1399 = vlaneseq
        %v1400 = vshrl.u32 %v1399, 7
        %v1401 = vsub.s32 %v1398, %v1400
        %v1402 = vrot.slane %v1395, %v1401
        %v1403 = vcombine.low %v1323, %v1324
        %v1405 = vunpack.c.l.s4 1983009808
        %v1406 = vunpack.c.0.s8 %v1405
        %v1407 = vlaneseq
        %v1408 = vshrl.u32 %v1407, 7
        %v1409 = vsub.s32 %v1406, %v1408
        %v1410 = vrot.slane %v1403, %v1409
        %v1411 = vcombine.low %v1315, %v1322
        %v1413 = vunpack.c.l.s4 1983009808
        %v1414 = vunpack.c.0.s8 %v1413
        %v1415 = vlaneseq
        %v1416 = vshrl.u32 %v1415, 7
        %v1417 = vsub.s32 %v1414, %v1416
        %v1418 = vrot.slane %v1411, %v1417
        %v1419 = vcombine.low %v1325, %v1326
        %v1421 = vunpack.c.l.s4 1983009808
        %v1422 = vunpack.c.0.s8 %v1421
        %v1423 = vlaneseq
        %v1424 = vshrl.u32 %v1423, 7
        %v1425 = vsub.s32 %v1422, %v1424
        %v1426 = vrot.slane %v1419, %v1425
        %v1427 = vcombine.low %v1402, %v1410
        %v1428 = vcombine.high %v1402, %v1410
        %v1430 = vunpack.c.l.s4 1934713408
        %v1431 = vunpack.c.0.s8 %v1430
        %v1432 = vlaneseq
        %v1433 = vshrl.u32 %v1432, 7
        %v1434 = vsub.s32 %v1431, %v1433
        %v1435 = vrot.slane %v1427, %v1434
        %v1437 = vunpack.c.l.s4 1934713408
        %v1438 = vunpack.c.0.s8 %v1437
        %v1439 = vlaneseq
        %v1440 = vshrl.u32 %v1439, 7
        %v1441 = vsub.s32 %v1438, %v1440
        %v1442 = vrot.slane %v1428, %v1441
        %v1443 = vcombine.low %v1418, %v1426
        %v1444 = vcombine.high %v1418, %v1426
        %v1446 = vunpack.c.l.s4 1934713408
        %v1447 = vunpack.c.0.s8 %v1446
        %v1448 = vlaneseq
        %v1449 = vshrl.u32 %v1448, 7
        %v1450 = vsub.s32 %v1447, %v1449
        %v1451 = vrot.slane %v1443, %v1450
        %v1453 = vunpack.c.l.s4 1934713408
        %v1454 = vunpack.c.0.s8 %v1453
        %v1455 = vlaneseq
        %v1456 = vshrl.u32 %v1455, 7
        %v1457 = vsub.s32 %v1454, %v1456
        %v1458 = vrot.slane %v1444, %v1457
        %v1459 = vcombine.low %v1435, %v1451
        %v1460 = vcombine.high %v1435, %v1451
        %v1461 = vcombine.low %v1442, %v1458
        %v1462 = vcombine.high %v1442, %v1458
        %v1463 = vcombine.low %v1367, %v1374
        %v1465 = vunpack.c.l.s4 1983009808
        %v1466 = vunpack.c.0.s8 %v1465
        %v1467 = vlaneseq
        %v1468 = vshrl.u32 %v1467, 7
        %v1469 = vsub.s32 %v1466, %v1468
        %v1470 = vrot.slane %v1463, %v1469
        %v1471 = vcombine.low %v1391, %v1392
        %v1473 = vunpack.c.l.s4 1983009808
        %v1474 = vunpack.c.0.s8 %v1473
        %v1475 = vlaneseq
        %v1476 = vshrl.u32 %v1475, 7
        %v1477 = vsub.s32 %v1474, %v1476
        %v1478 = vrot.slane %v1471, %v1477
        %v1479 = vcombine.low %v1383, %v1390
        %v1481 = vunpack.c.l.s4 1983009808
        %v1482 = vunpack.c.0.s8 %v1481
        %v1483 = vlaneseq
        %v1484 = vshrl.u32 %v1483, 7
        %v1485 = vsub.s32 %v1482, %v1484
        %v1486 = vrot.slane %v1479, %v1485
        %v1487 = vcombine.low %v1393, %v1394
        %v1489 = vunpack.c.l.s4 1983009808
        %v1490 = vunpack.c.0.s8 %v1489
        %v1491 = vlaneseq
        %v1492 = vshrl.u32 %v1491, 7
        %v1493 = vsub.s32 %v1490, %v1492
        %v1494 = vrot.slane %v1487, %v1493
        %v1495 = vcombine.low %v1470, %v1478
        %v1496 = vcombine.high %v1470, %v1478
        %v1498 = vunpack.c.l.s4 1934713408
        %v1499 = vunpack.c.0.s8 %v1498
        %v1500 = vlaneseq
        %v1501 = vshrl.u32 %v1500, 7
        %v1502 = vsub.s32 %v1499, %v1501
        %v1503 = vrot.slane %v1495, %v1502
        %v1505 = vunpack.c.l.s4 1934713408
        %v1506 = vunpack.c.0.s8 %v1505
        %v1507 = vlaneseq
        %v1508 = vshrl.u32 %v1507, 7
        %v1509 = vsub.s32 %v1506, %v1508
        %v1510 = vrot.slane %v1496, %v1509
        %v1511 = vcombine.low %v1486, %v1494
        %v1512 = vcombine.high %v1486, %v1494
        %v1514 = vunpack.c.l.s4 1934713408
        %v1515 = vunpack.c.0.s8 %v1514
        %v1516 = vlaneseq
        %v1517 = vshrl.u32 %v1516, 7
        %v1518 = vsub.s32 %v1515, %v1517
        %v1519 = vrot.slane %v1511, %v1518
        %v1521 = vunpack.c.l.s4 1934713408
        %v1522 = vunpack.c.0.s8 %v1521
        %v1523 = vlaneseq
        %v1524 = vshrl.u32 %v1523, 7
        %v1525 = vsub.s32 %v1522, %v1524
        %v1526 = vrot.slane %v1512, %v1525
        %v1527 = vcombine.low %v1503, %v1519
        %v1528 = vcombine.high %v1503, %v1519
        %v1529 = vcombine.low %v1510, %v1526
        %v1530 = vcombine.high %v1510, %v1526
        %v1531 = vpack.c.bf16 %v1459, %v1459
        %v1532 = vpack.c.bf16 %v1460, %v1460
        %v1533 = vpack.c.bf16 %v1461, %v1461
        %v1534 = vpack.c.bf16 %v1462, %v1462
        %v1535 = vpack.c.bf16 %v1527, %v1527
        %v1536 = vpack.c.bf16 %v1528, %v1528
        %v1537 = vpack.c.bf16 %v1529, %v1529
        %v1538 = vpack.c.bf16 %v1530, %v1530
        %vm1539 = vcmask 64512
        %v1541 = vsel %vm1539, %v927, 0
        %v1544 = vsel %vm1539, %v1227, 0
        %1546 = vmatprep.subr.bf16.mxu0 0
        %1547 = vmatpush1.bf16.xpose.msra.mxu0 0
        %1548 = vmatprep.subr.bf16.mxu0 0
        %1549 = vmatpush1.bf16.xpose.msra.mxu0 0
        %1550 = vmatprep.subr.bf16.mxu0 0
        %1551 = vmatpush1.bf16.xpose.msra.mxu0 0
        %1552 = vmatprep.subr.bf16.mxu0 0
        %1553 = vmatpush1.bf16.xpose.msra.mxu0 0
        %1554 = vmatprep.subr.bf16.mxu0 0
        %1555 = vmatpush1.bf16.xpose.msra.mxu0 0
        %1556 = vmatprep.subr.bf16.mxu0 0
        %1557 = vmatpush1.bf16.xpose.msra.mxu0 0
        %1558 = vmatprep.subr.bf16.mxu0 0
        %1559 = vmatpush1.bf16.xpose.msra.mxu0 0
        %1560 = vmatprep.subr.bf16.mxu0 0
        %1561 = vmatpush1.bf16.xpose.msra.mxu0 %v1544
        %1562 = vmatprep.subr.bf16.mxu0 0
        %1563 = vmatpush2.bf16.xpose.msra.mxu0 0
        %1564 = vmatprep.subr.bf16.mxu0 0
        %1565 = vmatpush2.bf16.xpose.msra.mxu0 0
        %1566 = vmatprep.subr.bf16.mxu0 0
        %1567 = vmatpush2.bf16.xpose.msra.mxu0 0
        %1568 = vmatprep.subr.bf16.mxu0 0
        %1569 = vmatpush2.bf16.xpose.msra.mxu0 0
        %1570 = vmatprep.subr.bf16.mxu0 0
        %1571 = vmatpush2.bf16.xpose.msra.mxu0 0
        %1572 = vmatprep.subr.bf16.mxu0 0
        %1573 = vmatpush2.bf16.xpose.msra.mxu0 0
        %1574 = vmatprep.subr.bf16.mxu0 0
        %1575 = vmatpush2.bf16.xpose.msra.mxu0 0
        %1576 = vmatprep.subr.bf16.mxu0 0
        %1577 = vmatpush2.bf16.xpose.msra.mxu0 0
        %1578 = vmatprep.mubr.bf16.mxu0 0
        %1579 = vmatmul.mubr.bf16.gmra.mxu0 %v1541
        %v1580 = vpop.f32.mrf.mxu0
        %v1581 = vadd.f32 0.0, %v1580
        %v1582 = vpop.f32.mrf.mxu0
        %v1583 = vpop.f32.mrf.mxu0
        %v1584 = vpop.f32.mrf.mxu0
        %1585 = vdwg.mxu0
        %v1587 = vsel %vm1539, %v928, 0
        %v1590 = vsel %vm1539, %v1228, 0
        %1592 = vmatprep.subr.bf16.mxu0 0
        %1593 = vmatpush1.bf16.xpose.msra.mxu0 0
        %1594 = vmatprep.subr.bf16.mxu0 0
        %1595 = vmatpush1.bf16.xpose.msra.mxu0 0
        %1596 = vmatprep.subr.bf16.mxu0 0
        %1597 = vmatpush1.bf16.xpose.msra.mxu0 0
        %1598 = vmatprep.subr.bf16.mxu0 0
        %1599 = vmatpush1.bf16.xpose.msra.mxu0 0
        %1600 = vmatprep.subr.bf16.mxu0 0
        %1601 = vmatpush1.bf16.xpose.msra.mxu0 0
        %1602 = vmatprep.subr.bf16.mxu0 0
        %1603 = vmatpush1.bf16.xpose.msra.mxu0 0
        %1604 = vmatprep.subr.bf16.mxu0 0
        %1605 = vmatpush1.bf16.xpose.msra.mxu0 0
        %1606 = vmatprep.subr.bf16.mxu0 0
        %1607 = vmatpush1.bf16.xpose.msra.mxu0 %v1590
        %1608 = vmatprep.subr.bf16.mxu0 0
        %1609 = vmatpush2.bf16.xpose.msra.mxu0 0
        %1610 = vmatprep.subr.bf16.mxu0 0
        %1611 = vmatpush2.bf16.xpose.msra.mxu0 0
        %1612 = vmatprep.subr.bf16.mxu0 0
        %1613 = vmatpush2.bf16.xpose.msra.mxu0 0
        %1614 = vmatprep.subr.bf16.mxu0 0
        %1615 = vmatpush2.bf16.xpose.msra.mxu0 0
        %1616 = vmatprep.subr.bf16.mxu0 0
        %1617 = vmatpush2.bf16.xpose.msra.mxu0 0
        %1618 = vmatprep.subr.bf16.mxu0 0
        %1619 = vmatpush2.bf16.xpose.msra.mxu0 0
        %1620 = vmatprep.subr.bf16.mxu0 0
        %1621 = vmatpush2.bf16.xpose.msra.mxu0 0
        %1622 = vmatprep.subr.bf16.mxu0 0
        %1623 = vmatpush2.bf16.xpose.msra.mxu0 0
        %1624 = vmatprep.mubr.bf16.mxu0 0
        %1625 = vmatmul.mubr.bf16.gmra.mxu0 %v1587
        %v1626 = vpop.f32.mrf.mxu0
        %v1627 = vadd.f32 0.0, %v1626
        %v1628 = vpop.f32.mrf.mxu0
        %v1629 = vpop.f32.mrf.mxu0
        %v1630 = vpop.f32.mrf.mxu0
        %1631 = vdwg.mxu0
        %v1633 = vsel %vm1539, %v929, 0
        %v1636 = vsel %vm1539, %v1229, 0
        %1638 = vmatprep.subr.bf16.mxu0 0
        %1639 = vmatpush1.bf16.xpose.msra.mxu0 0
        %1640 = vmatprep.subr.bf16.mxu0 0
        %1641 = vmatpush1.bf16.xpose.msra.mxu0 0
        %1642 = vmatprep.subr.bf16.mxu0 0
        %1643 = vmatpush1.bf16.xpose.msra.mxu0 0
        %1644 = vmatprep.subr.bf16.mxu0 0
        %1645 = vmatpush1.bf16.xpose.msra.mxu0 0
        %1646 = vmatprep.subr.bf16.mxu0 0
        %1647 = vmatpush1.bf16.xpose.msra.mxu0 0
        %1648 = vmatprep.subr.bf16.mxu0 0
        %1649 = vmatpush1.bf16.xpose.msra.mxu0 0
        %1650 = vmatprep.subr.bf16.mxu0 0
        %1651 = vmatpush1.bf16.xpose.msra.mxu0 0
        %1652 = vmatprep.subr.bf16.mxu0 0
        %1653 = vmatpush1.bf16.xpose.msra.mxu0 %v1636
        %1654 = vmatprep.subr.bf16.mxu0 0
        %1655 = vmatpush2.bf16.xpose.msra.mxu0 0
        %1656 = vmatprep.subr.bf16.mxu0 0
        %1657 = vmatpush2.bf16.xpose.msra.mxu0 0
        %1658 = vmatprep.subr.bf16.mxu0 0
        %1659 = vmatpush2.bf16.xpose.msra.mxu0 0
        %1660 = vmatprep.subr.bf16.mxu0 0
        %1661 = vmatpush2.bf16.xpose.msra.mxu0 0
        %1662 = vmatprep.subr.bf16.mxu0 0
        %1663 = vmatpush2.bf16.xpose.msra.mxu0 0
        %1664 = vmatprep.subr.bf16.mxu0 0
        %1665 = vmatpush2.bf16.xpose.msra.mxu0 0
        %1666 = vmatprep.subr.bf16.mxu0 0
        %1667 = vmatpush2.bf16.xpose.msra.mxu0 0
        %1668 = vmatprep.subr.bf16.mxu0 0
        %1669 = vmatpush2.bf16.xpose.msra.mxu0 0
        %1670 = vmatprep.mubr.bf16.mxu0 0
        %1671 = vmatmul.mubr.bf16.gmra.mxu0 %v1633
        %v1672 = vpop.f32.mrf.mxu0
        %v1673 = vadd.f32 0.0, %v1672
        %v1674 = vpop.f32.mrf.mxu0
        %v1675 = vpop.f32.mrf.mxu0
        %v1676 = vpop.f32.mrf.mxu0
        %1677 = vdwg.mxu0
        %v1679 = vsel %vm1539, %v930, 0
        %v1682 = vsel %vm1539, %v1230, 0
        %1684 = vmatprep.subr.bf16.mxu0 0
        %1685 = vmatpush1.bf16.xpose.msra.mxu0 0
        %1686 = vmatprep.subr.bf16.mxu0 0
        %1687 = vmatpush1.bf16.xpose.msra.mxu0 0
        %1688 = vmatprep.subr.bf16.mxu0 0
        %1689 = vmatpush1.bf16.xpose.msra.mxu0 0
        %1690 = vmatprep.subr.bf16.mxu0 0
        %1691 = vmatpush1.bf16.xpose.msra.mxu0 0
        %1692 = vmatprep.subr.bf16.mxu0 0
        %1693 = vmatpush1.bf16.xpose.msra.mxu0 0
        %1694 = vmatprep.subr.bf16.mxu0 0
        %1695 = vmatpush1.bf16.xpose.msra.mxu0 0
        %1696 = vmatprep.subr.bf16.mxu0 0
        %1697 = vmatpush1.bf16.xpose.msra.mxu0 0
        %1698 = vmatprep.subr.bf16.mxu0 0
        %1699 = vmatpush1.bf16.xpose.msra.mxu0 %v1682
        %1700 = vmatprep.subr.bf16.mxu0 0
        %1701 = vmatpush2.bf16.xpose.msra.mxu0 0
        %1702 = vmatprep.subr.bf16.mxu0 0
        %1703 = vmatpush2.bf16.xpose.msra.mxu0 0
        %1704 = vmatprep.subr.bf16.mxu0 0
        %1705 = vmatpush2.bf16.xpose.msra.mxu0 0
        %1706 = vmatprep.subr.bf16.mxu0 0
        %1707 = vmatpush2.bf16.xpose.msra.mxu0 0
        %1708 = vmatprep.subr.bf16.mxu0 0
        %1709 = vmatpush2.bf16.xpose.msra.mxu0 0
        %1710 = vmatprep.subr.bf16.mxu0 0
        %1711 = vmatpush2.bf16.xpose.msra.mxu0 0
        %1712 = vmatprep.subr.bf16.mxu0 0
        %1713 = vmatpush2.bf16.xpose.msra.mxu0 0
        %1714 = vmatprep.subr.bf16.mxu0 0
        %1715 = vmatpush2.bf16.xpose.msra.mxu0 0
        %1716 = vmatprep.mubr.bf16.mxu0 0
        %1717 = vmatmul.mubr.bf16.gmra.mxu0 %v1679
        %v1718 = vpop.f32.mrf.mxu0
        %v1719 = vadd.f32 0.0, %v1718
        %v1720 = vpop.f32.mrf.mxu0
        %v1721 = vpop.f32.mrf.mxu0
        %v1722 = vpop.f32.mrf.mxu0
        %1723 = vdwg.mxu0
        %v1725 = vsel %vm1539, %v931, 0
        %v1728 = vsel %vm1539, %v1231, 0
        %1730 = vmatprep.subr.bf16.mxu0 0
        %1731 = vmatpush1.bf16.xpose.msra.mxu0 0
        %1732 = vmatprep.subr.bf16.mxu0 0
        %1733 = vmatpush1.bf16.xpose.msra.mxu0 0
        %1734 = vmatprep.subr.bf16.mxu0 0
        %1735 = vmatpush1.bf16.xpose.msra.mxu0 0
        %1736 = vmatprep.subr.bf16.mxu0 0
        %1737 = vmatpush1.bf16.xpose.msra.mxu0 0
        %1738 = vmatprep.subr.bf16.mxu0 0
        %1739 = vmatpush1.bf16.xpose.msra.mxu0 0
        %1740 = vmatprep.subr.bf16.mxu0 0
        %1741 = vmatpush1.bf16.xpose.msra.mxu0 0
        %1742 = vmatprep.subr.bf16.mxu0 0
        %1743 = vmatpush1.bf16.xpose.msra.mxu0 0
        %1744 = vmatprep.subr.bf16.mxu0 0
        %1745 = vmatpush1.bf16.xpose.msra.mxu0 %v1728
        %1746 = vmatprep.subr.bf16.mxu0 0
        %1747 = vmatpush2.bf16.xpose.msra.mxu0 0
        %1748 = vmatprep.subr.bf16.mxu0 0
        %1749 = vmatpush2.bf16.xpose.msra.mxu0 0
        %1750 = vmatprep.subr.bf16.mxu0 0
        %1751 = vmatpush2.bf16.xpose.msra.mxu0 0
        %1752 = vmatprep.subr.bf16.mxu0 0
        %1753 = vmatpush2.bf16.xpose.msra.mxu0 0
        %1754 = vmatprep.subr.bf16.mxu0 0
        %1755 = vmatpush2.bf16.xpose.msra.mxu0 0
        %1756 = vmatprep.subr.bf16.mxu0 0
        %1757 = vmatpush2.bf16.xpose.msra.mxu0 0
        %1758 = vmatprep.subr.bf16.mxu0 0
        %1759 = vmatpush2.bf16.xpose.msra.mxu0 0
        %1760 = vmatprep.subr.bf16.mxu0 0
        %1761 = vmatpush2.bf16.xpose.msra.mxu0 0
        %1762 = vmatprep.mubr.bf16.mxu0 0
        %1763 = vmatmul.mubr.bf16.gmra.mxu0 %v1725
        %v1764 = vpop.f32.mrf.mxu0
        %v1765 = vadd.f32 0.0, %v1764
        %v1766 = vpop.f32.mrf.mxu0
        %v1767 = vpop.f32.mrf.mxu0
        %v1768 = vpop.f32.mrf.mxu0
        %1769 = vdwg.mxu0
        %v1771 = vsel %vm1539, %v932, 0
        %v1774 = vsel %vm1539, %v1232, 0
        %1776 = vmatprep.subr.bf16.mxu0 0
        %1777 = vmatpush1.bf16.xpose.msra.mxu0 0
        %1778 = vmatprep.subr.bf16.mxu0 0
        %1779 = vmatpush1.bf16.xpose.msra.mxu0 0
        %1780 = vmatprep.subr.bf16.mxu0 0
        %1781 = vmatpush1.bf16.xpose.msra.mxu0 0
        %1782 = vmatprep.subr.bf16.mxu0 0
        %1783 = vmatpush1.bf16.xpose.msra.mxu0 0
        %1784 = vmatprep.subr.bf16.mxu0 0
        %1785 = vmatpush1.bf16.xpose.msra.mxu0 0
        %1786 = vmatprep.subr.bf16.mxu0 0
        %1787 = vmatpush1.bf16.xpose.msra.mxu0 0
        %1788 = vmatprep.subr.bf16.mxu0 0
        %1789 = vmatpush1.bf16.xpose.msra.mxu0 0
        %1790 = vmatprep.subr.bf16.mxu0 0
        %1791 = vmatpush1.bf16.xpose.msra.mxu0 %v1774
        %1792 = vmatprep.subr.bf16.mxu0 0
        %1793 = vmatpush2.bf16.xpose.msra.mxu0 0
        %1794 = vmatprep.subr.bf16.mxu0 0
        %1795 = vmatpush2.bf16.xpose.msra.mxu0 0
        %1796 = vmatprep.subr.bf16.mxu0 0
        %1797 = vmatpush2.bf16.xpose.msra.mxu0 0
        %1798 = vmatprep.subr.bf16.mxu0 0
        %1799 = vmatpush2.bf16.xpose.msra.mxu0 0
        %1800 = vmatprep.subr.bf16.mxu0 0
        %1801 = vmatpush2.bf16.xpose.msra.mxu0 0
        %1802 = vmatprep.subr.bf16.mxu0 0
        %1803 = vmatpush2.bf16.xpose.msra.mxu0 0
        %1804 = vmatprep.subr.bf16.mxu0 0
        %1805 = vmatpush2.bf16.xpose.msra.mxu0 0
        %1806 = vmatprep.subr.bf16.mxu0 0
        %1807 = vmatpush2.bf16.xpose.msra.mxu0 0
        %1808 = vmatprep.mubr.bf16.mxu0 0
        %1809 = vmatmul.mubr.bf16.gmra.mxu0 %v1771
        %v1810 = vpop.f32.mrf.mxu0
        %v1811 = vadd.f32 0.0, %v1810
        %v1812 = vpop.f32.mrf.mxu0
        %v1813 = vpop.f32.mrf.mxu0
        %v1814 = vpop.f32.mrf.mxu0
        %1815 = vdwg.mxu0
        %v1817 = vsel %vm1539, %v933, 0
        %v1820 = vsel %vm1539, %v1233, 0
        %1822 = vmatprep.subr.bf16.mxu0 0
        %1823 = vmatpush1.bf16.xpose.msra.mxu0 0
        %1824 = vmatprep.subr.bf16.mxu0 0
        %1825 = vmatpush1.bf16.xpose.msra.mxu0 0
        %1826 = vmatprep.subr.bf16.mxu0 0
        %1827 = vmatpush1.bf16.xpose.msra.mxu0 0
        %1828 = vmatprep.subr.bf16.mxu0 0
        %1829 = vmatpush1.bf16.xpose.msra.mxu0 0
        %1830 = vmatprep.subr.bf16.mxu0 0
        %1831 = vmatpush1.bf16.xpose.msra.mxu0 0
        %1832 = vmatprep.subr.bf16.mxu0 0
        %1833 = vmatpush1.bf16.xpose.msra.mxu0 0
        %1834 = vmatprep.subr.bf16.mxu0 0
        %1835 = vmatpush1.bf16.xpose.msra.mxu0 0
        %1836 = vmatprep.subr.bf16.mxu0 0
        %1837 = vmatpush1.bf16.xpose.msra.mxu0 %v1820
        %1838 = vmatprep.subr.bf16.mxu0 0
        %1839 = vmatpush2.bf16.xpose.msra.mxu0 0
        %1840 = vmatprep.subr.bf16.mxu0 0
        %1841 = vmatpush2.bf16.xpose.msra.mxu0 0
        %1842 = vmatprep.subr.bf16.mxu0 0
        %1843 = vmatpush2.bf16.xpose.msra.mxu0 0
        %1844 = vmatprep.subr.bf16.mxu0 0
        %1845 = vmatpush2.bf16.xpose.msra.mxu0 0
        %1846 = vmatprep.subr.bf16.mxu0 0
        %1847 = vmatpush2.bf16.xpose.msra.mxu0 0
        %1848 = vmatprep.subr.bf16.mxu0 0
        %1849 = vmatpush2.bf16.xpose.msra.mxu0 0
        %1850 = vmatprep.subr.bf16.mxu0 0
        %1851 = vmatpush2.bf16.xpose.msra.mxu0 0
        %1852 = vmatprep.subr.bf16.mxu0 0
        %1853 = vmatpush2.bf16.xpose.msra.mxu0 0
        %1854 = vmatprep.mubr.bf16.mxu0 0
        %1855 = vmatmul.mubr.bf16.gmra.mxu0 %v1817
        %v1856 = vpop.f32.mrf.mxu0
        %v1857 = vadd.f32 0.0, %v1856
        %v1858 = vpop.f32.mrf.mxu0
        %v1859 = vpop.f32.mrf.mxu0
        %v1860 = vpop.f32.mrf.mxu0
        %1861 = vdwg.mxu0
        %v1863 = vsel %vm1539, %v934, 0
        %v1866 = vsel %vm1539, %v1234, 0
        %1868 = vmatprep.subr.bf16.mxu0 0
        %1869 = vmatpush1.bf16.xpose.msra.mxu0 0
        %1870 = vmatprep.subr.bf16.mxu0 0
        %1871 = vmatpush1.bf16.xpose.msra.mxu0 0
        %1872 = vmatprep.subr.bf16.mxu0 0
        %1873 = vmatpush1.bf16.xpose.msra.mxu0 0
        %1874 = vmatprep.subr.bf16.mxu0 0
        %1875 = vmatpush1.bf16.xpose.msra.mxu0 0
        %1876 = vmatprep.subr.bf16.mxu0 0
        %1877 = vmatpush1.bf16.xpose.msra.mxu0 0
        %1878 = vmatprep.subr.bf16.mxu0 0
        %1879 = vmatpush1.bf16.xpose.msra.mxu0 0
        %1880 = vmatprep.subr.bf16.mxu0 0
        %1881 = vmatpush1.bf16.xpose.msra.mxu0 0
        %1882 = vmatprep.subr.bf16.mxu0 0
        %1883 = vmatpush1.bf16.xpose.msra.mxu0 %v1866
        %1884 = vmatprep.subr.bf16.mxu0 0
        %1885 = vmatpush2.bf16.xpose.msra.mxu0 0
        %1886 = vmatprep.subr.bf16.mxu0 0
        %1887 = vmatpush2.bf16.xpose.msra.mxu0 0
        %1888 = vmatprep.subr.bf16.mxu0 0
        %1889 = vmatpush2.bf16.xpose.msra.mxu0 0
        %1890 = vmatprep.subr.bf16.mxu0 0
        %1891 = vmatpush2.bf16.xpose.msra.mxu0 0
        %1892 = vmatprep.subr.bf16.mxu0 0
        %1893 = vmatpush2.bf16.xpose.msra.mxu0 0
        %1894 = vmatprep.subr.bf16.mxu0 0
        %1895 = vmatpush2.bf16.xpose.msra.mxu0 0
        %1896 = vmatprep.subr.bf16.mxu0 0
        %1897 = vmatpush2.bf16.xpose.msra.mxu0 0
        %1898 = vmatprep.subr.bf16.mxu0 0
        %1899 = vmatpush2.bf16.xpose.msra.mxu0 0
        %1900 = vmatprep.mubr.bf16.mxu0 0
        %1901 = vmatmul.mubr.bf16.gmra.mxu0 %v1863
        %v1902 = vpop.f32.mrf.mxu0
        %v1903 = vadd.f32 0.0, %v1902
        %v1904 = vpop.f32.mrf.mxu0
        %v1905 = vpop.f32.mrf.mxu0
        %v1906 = vpop.f32.mrf.mxu0
        %1907 = vdwg.mxu0
        %v1908 = vsel %vm1539, %v1581, -inf
        %1909 = vmax.xlane.f32.xlu0 %v1908
        %v1910 = vpop.xlane.xlu0 %1909
        %v1911 = vsel %vm1539, %v1627, -inf
        %1912 = vmax.xlane.f32.xlu0 %v1911
        %v1913 = vpop.xlane.xlu0 %1912
        %v1914 = vsel %vm1539, %v1673, -inf
        %1915 = vmax.xlane.f32.xlu0 %v1914
        %v1916 = vpop.xlane.xlu0 %1915
        %v1917 = vsel %vm1539, %v1719, -inf
        %1918 = vmax.xlane.f32.xlu0 %v1917
        %v1919 = vpop.xlane.xlu0 %1918
        %v1920 = vsel %vm1539, %v1765, -inf
        %1921 = vmax.xlane.f32.xlu0 %v1920
        %v1922 = vpop.xlane.xlu0 %1921
        %v1923 = vsel %vm1539, %v1811, -inf
        %1924 = vmax.xlane.f32.xlu0 %v1923
        %v1925 = vpop.xlane.xlu0 %1924
        %v1926 = vsel %vm1539, %v1857, -inf
        %1927 = vmax.xlane.f32.xlu0 %v1926
        %v1928 = vpop.xlane.xlu0 %1927
        %v1929 = vsel %vm1539, %v1903, -inf
        %1930 = vmax.xlane.f32.xlu0 %v1929
        %v1931 = vpop.xlane.xlu0 %1930
        %v1932 = vsub.f32 %v1581, %v1910
        %v1933 = vsub.f32 %v1627, %v1913
        %v1934 = vsub.f32 %v1673, %v1916
        %v1935 = vsub.f32 %v1719, %v1919
        %v1936 = vsub.f32 %v1765, %v1922
        %v1937 = vsub.f32 %v1811, %v1925
        %v1938 = vsub.f32 %v1857, %v1928
        %v1939 = vsub.f32 %v1903, %v1931
        %v1940 = vmul.f32 %v1932, 1.442695
        %v1941 = vpow.pop %v1940
        %v1942 = vmul.f32 %v1933, 1.442695
        %v1943 = vpow.pop %v1942
        %v1944 = vmul.f32 %v1934, 1.442695
        %v1945 = vpow.pop %v1944
        %v1946 = vmul.f32 %v1935, 1.442695
        %v1947 = vpow.pop %v1946
        %v1948 = vmul.f32 %v1936, 1.442695
        %v1949 = vpow.pop %v1948
        %v1950 = vmul.f32 %v1937, 1.442695
        %v1951 = vpow.pop %v1950
        %v1952 = vmul.f32 %v1938, 1.442695
        %v1953 = vpow.pop %v1952
        %v1954 = vmul.f32 %v1939, 1.442695
        %v1955 = vpow.pop %v1954
        %v1956 = vsel %vm1539, %v1941, 0.0
        %1957 = vadd.xlane.f32.xlu0 %v1956
        %v1958 = vpop.xlane.xlu0 %1957
        %v1959 = vsel %vm1539, %v1943, 0.0
        %1960 = vadd.xlane.f32.xlu0 %v1959
        %v1961 = vpop.xlane.xlu0 %1960
        %v1962 = vsel %vm1539, %v1945, 0.0
        %1963 = vadd.xlane.f32.xlu0 %v1962
        %v1964 = vpop.xlane.xlu0 %1963
        %v1965 = vsel %vm1539, %v1947, 0.0
        %1966 = vadd.xlane.f32.xlu0 %v1965
        %v1967 = vpop.xlane.xlu0 %1966
        %v1968 = vsel %vm1539, %v1949, 0.0
        %1969 = vadd.xlane.f32.xlu0 %v1968
        %v1970 = vpop.xlane.xlu0 %1969
        %v1971 = vsel %vm1539, %v1951, 0.0
        %1972 = vadd.xlane.f32.xlu0 %v1971
        %v1973 = vpop.xlane.xlu0 %1972
        %v1974 = vsel %vm1539, %v1953, 0.0
        %1975 = vadd.xlane.f32.xlu0 %v1974
        %v1976 = vpop.xlane.xlu0 %1975
        %v1977 = vsel %vm1539, %v1955, 0.0
        %1978 = vadd.xlane.f32.xlu0 %v1977
        %v1979 = vpop.xlane.xlu0 %1978
        %v1980 = vrcp.pop %v1958
        %v1981 = vmul.f32 %v1941, %v1980
        %v1982 = vrcp.pop %v1961
        %v1983 = vmul.f32 %v1943, %v1982
        %v1984 = vrcp.pop %v1964
        %v1985 = vmul.f32 %v1945, %v1984
        %v1986 = vrcp.pop %v1967
        %v1987 = vmul.f32 %v1947, %v1986
        %v1988 = vrcp.pop %v1970
        %v1989 = vmul.f32 %v1949, %v1988
        %v1990 = vrcp.pop %v1973
        %v1991 = vmul.f32 %v1951, %v1990
        %v1992 = vrcp.pop %v1976
        %v1993 = vmul.f32 %v1953, %v1992
        %v1994 = vrcp.pop %v1979
        %v1995 = vmul.f32 %v1955, %v1994
        %v1996 = vpack.c.bf16 %v1981, %v1981
        %v1997 = vpack.c.bf16 %v1983, %v1983
        %v1998 = vpack.c.bf16 %v1985, %v1985
        %v1999 = vpack.c.bf16 %v1987, %v1987
        %v2000 = vpack.c.bf16 %v1989, %v1989
        %v2001 = vpack.c.bf16 %v1991, %v1991
        %v2002 = vpack.c.bf16 %v1993, %v1993
        %v2003 = vpack.c.bf16 %v1995, %v1995
        %v2005 = vsel %vm1539, %v1996, 0
        %vm2007 = vcmask 1043456
        %v2009 = vsel %vm2007, %v1531, 0
        %2011 = vmatprep.subr.bf16.mxu0 0
        %2012 = vmatpush1.bf16.msra.mxu0 0
        %2013 = vmatprep.subr.bf16.mxu0 0
        %2014 = vmatpush1.bf16.msra.mxu0 0
        %2015 = vmatprep.subr.bf16.mxu0 0
        %2016 = vmatpush1.bf16.msra.mxu0 0
        %2017 = vmatprep.subr.bf16.mxu0 0
        %2018 = vmatpush1.bf16.msra.mxu0 0
        %2019 = vmatprep.subr.bf16.mxu0 0
        %2020 = vmatpush1.bf16.msra.mxu0 0
        %2021 = vmatprep.subr.bf16.mxu0 0
        %2022 = vmatpush1.bf16.msra.mxu0 0
        %2023 = vmatprep.subr.bf16.mxu0 0
        %2024 = vmatpush1.bf16.msra.mxu0 0
        %2025 = vmatprep.subr.bf16.mxu0 0
        %2026 = vmatpush1.bf16.msra.mxu0 %v2009
        %2027 = vmatprep.subr.bf16.mxu0 0
        %2028 = vmatpush2.bf16.msra.mxu0 0
        %2029 = vmatprep.subr.bf16.mxu0 0
        %2030 = vmatpush2.bf16.msra.mxu0 0
        %2031 = vmatprep.subr.bf16.mxu0 0
        %2032 = vmatpush2.bf16.msra.mxu0 0
        %2033 = vmatprep.subr.bf16.mxu0 0
        %2034 = vmatpush2.bf16.msra.mxu0 0
        %2035 = vmatprep.subr.bf16.mxu0 0
        %2036 = vmatpush2.bf16.msra.mxu0 0
        %2037 = vmatprep.subr.bf16.mxu0 0
        %2038 = vmatpush2.bf16.msra.mxu0 0
        %2039 = vmatprep.subr.bf16.mxu0 0
        %2040 = vmatpush2.bf16.msra.mxu0 0
        %2041 = vmatprep.subr.bf16.mxu0 0
        %2042 = vmatpush2.bf16.msra.mxu0 0
        %2043 = vmatprep.mubr.bf16.mxu0 0
        %2044 = vmatmul.mubr.bf16.gmra.mxu0 %v2005
        %v2045 = vpop.f32.mrf.mxu0
        %v2046 = vadd.f32 0.0, %v2045
        %v2047 = vpop.f32.mrf.mxu0
        %v2048 = vpop.f32.mrf.mxu0
        %v2049 = vpop.f32.mrf.mxu0
        %2050 = vdwg.mxu0
        %v2052 = vsel %vm1539, %v1997, 0
        %v2055 = vsel %vm2007, %v1532, 0
        %2057 = vmatprep.subr.bf16.mxu0 0
        %2058 = vmatpush1.bf16.msra.mxu0 0
        %2059 = vmatprep.subr.bf16.mxu0 0
        %2060 = vmatpush1.bf16.msra.mxu0 0
        %2061 = vmatprep.subr.bf16.mxu0 0
        %2062 = vmatpush1.bf16.msra.mxu0 0
        %2063 = vmatprep.subr.bf16.mxu0 0
        %2064 = vmatpush1.bf16.msra.mxu0 0
        %2065 = vmatprep.subr.bf16.mxu0 0
        %2066 = vmatpush1.bf16.msra.mxu0 0
        %2067 = vmatprep.subr.bf16.mxu0 0
        %2068 = vmatpush1.bf16.msra.mxu0 0
        %2069 = vmatprep.subr.bf16.mxu0 0
        %2070 = vmatpush1.bf16.msra.mxu0 0
        %2071 = vmatprep.subr.bf16.mxu0 0
        %2072 = vmatpush1.bf16.msra.mxu0 %v2055
        %2073 = vmatprep.subr.bf16.mxu0 0
        %2074 = vmatpush2.bf16.msra.mxu0 0
        %2075 = vmatprep.subr.bf16.mxu0 0
        %2076 = vmatpush2.bf16.msra.mxu0 0
        %2077 = vmatprep.subr.bf16.mxu0 0
        %2078 = vmatpush2.bf16.msra.mxu0 0
        %2079 = vmatprep.subr.bf16.mxu0 0
        %2080 = vmatpush2.bf16.msra.mxu0 0
        %2081 = vmatprep.subr.bf16.mxu0 0
        %2082 = vmatpush2.bf16.msra.mxu0 0
        %2083 = vmatprep.subr.bf16.mxu0 0
        %2084 = vmatpush2.bf16.msra.mxu0 0
        %2085 = vmatprep.subr.bf16.mxu0 0
        %2086 = vmatpush2.bf16.msra.mxu0 0
        %2087 = vmatprep.subr.bf16.mxu0 0
        %2088 = vmatpush2.bf16.msra.mxu0 0
        %2089 = vmatprep.mubr.bf16.mxu0 0
        %2090 = vmatmul.mubr.bf16.gmra.mxu0 %v2052
        %v2091 = vpop.f32.mrf.mxu0
        %v2092 = vadd.f32 0.0, %v2091
        %v2093 = vpop.f32.mrf.mxu0
        %v2094 = vpop.f32.mrf.mxu0
        %v2095 = vpop.f32.mrf.mxu0
        %2096 = vdwg.mxu0
        %v2098 = vsel %vm1539, %v1998, 0
        %v2101 = vsel %vm2007, %v1533, 0
        %2103 = vmatprep.subr.bf16.mxu0 0
        %2104 = vmatpush1.bf16.msra.mxu0 0
        %2105 = vmatprep.subr.bf16.mxu0 0
        %2106 = vmatpush1.bf16.msra.mxu0 0
        %2107 = vmatprep.subr.bf16.mxu0 0
        %2108 = vmatpush1.bf16.msra.mxu0 0
        %2109 = vmatprep.subr.bf16.mxu0 0
        %2110 = vmatpush1.bf16.msra.mxu0 0
        %2111 = vmatprep.subr.bf16.mxu0 0
        %2112 = vmatpush1.bf16.msra.mxu0 0
        %2113 = vmatprep.subr.bf16.mxu0 0
        %2114 = vmatpush1.bf16.msra.mxu0 0
        %2115 = vmatprep.subr.bf16.mxu0 0
        %2116 = vmatpush1.bf16.msra.mxu0 0
        %2117 = vmatprep.subr.bf16.mxu0 0
        %2118 = vmatpush1.bf16.msra.mxu0 %v2101
        %2119 = vmatprep.subr.bf16.mxu0 0
        %2120 = vmatpush2.bf16.msra.mxu0 0
        %2121 = vmatprep.subr.bf16.mxu0 0
        %2122 = vmatpush2.bf16.msra.mxu0 0
        %2123 = vmatprep.subr.bf16.mxu0 0
        %2124 = vmatpush2.bf16.msra.mxu0 0
        %2125 = vmatprep.subr.bf16.mxu0 0
        %2126 = vmatpush2.bf16.msra.mxu0 0
        %2127 = vmatprep.subr.bf16.mxu0 0
        %2128 = vmatpush2.bf16.msra.mxu0 0
        %2129 = vmatprep.subr.bf16.mxu0 0
        %2130 = vmatpush2.bf16.msra.mxu0 0
        %2131 = vmatprep.subr.bf16.mxu0 0
        %2132 = vmatpush2.bf16.msra.mxu0 0
        %2133 = vmatprep.subr.bf16.mxu0 0
        %2134 = vmatpush2.bf16.msra.mxu0 0
        %2135 = vmatprep.mubr.bf16.mxu0 0
        %2136 = vmatmul.mubr.bf16.gmra.mxu0 %v2098
        %v2137 = vpop.f32.mrf.mxu0
        %v2138 = vadd.f32 0.0, %v2137
        %v2139 = vpop.f32.mrf.mxu0
        %v2140 = vpop.f32.mrf.mxu0
        %v2141 = vpop.f32.mrf.mxu0
        %2142 = vdwg.mxu0
        %v2144 = vsel %vm1539, %v1999, 0
        %v2147 = vsel %vm2007, %v1534, 0
        %2149 = vmatprep.subr.bf16.mxu0 0
        %2150 = vmatpush1.bf16.msra.mxu0 0
        %2151 = vmatprep.subr.bf16.mxu0 0
        %2152 = vmatpush1.bf16.msra.mxu0 0
        %2153 = vmatprep.subr.bf16.mxu0 0
        %2154 = vmatpush1.bf16.msra.mxu0 0
        %2155 = vmatprep.subr.bf16.mxu0 0
        %2156 = vmatpush1.bf16.msra.mxu0 0
        %2157 = vmatprep.subr.bf16.mxu0 0
        %2158 = vmatpush1.bf16.msra.mxu0 0
        %2159 = vmatprep.subr.bf16.mxu0 0
        %2160 = vmatpush1.bf16.msra.mxu0 0
        %2161 = vmatprep.subr.bf16.mxu0 0
        %2162 = vmatpush1.bf16.msra.mxu0 0
        %2163 = vmatprep.subr.bf16.mxu0 0
        %2164 = vmatpush1.bf16.msra.mxu0 %v2147
        %2165 = vmatprep.subr.bf16.mxu0 0
        %2166 = vmatpush2.bf16.msra.mxu0 0
        %2167 = vmatprep.subr.bf16.mxu0 0
        %2168 = vmatpush2.bf16.msra.mxu0 0
        %2169 = vmatprep.subr.bf16.mxu0 0
        %2170 = vmatpush2.bf16.msra.mxu0 0
        %2171 = vmatprep.subr.bf16.mxu0 0
        %2172 = vmatpush2.bf16.msra.mxu0 0
        %2173 = vmatprep.subr.bf16.mxu0 0
        %2174 = vmatpush2.bf16.msra.mxu0 0
        %2175 = vmatprep.subr.bf16.mxu0 0
        %2176 = vmatpush2.bf16.msra.mxu0 0
        %2177 = vmatprep.subr.bf16.mxu0 0
        %2178 = vmatpush2.bf16.msra.mxu0 0
        %2179 = vmatprep.subr.bf16.mxu0 0
        %2180 = vmatpush2.bf16.msra.mxu0 0
        %2181 = vmatprep.mubr.bf16.mxu0 0
        %2182 = vmatmul.mubr.bf16.gmra.mxu0 %v2144
        %v2183 = vpop.f32.mrf.mxu0
        %v2184 = vadd.f32 0.0, %v2183
        %v2185 = vpop.f32.mrf.mxu0
        %v2186 = vpop.f32.mrf.mxu0
        %v2187 = vpop.f32.mrf.mxu0
        %2188 = vdwg.mxu0
        %v2190 = vsel %vm1539, %v2000, 0
        %v2193 = vsel %vm2007, %v1535, 0
        %2195 = vmatprep.subr.bf16.mxu0 0
        %2196 = vmatpush1.bf16.msra.mxu0 0
        %2197 = vmatprep.subr.bf16.mxu0 0
        %2198 = vmatpush1.bf16.msra.mxu0 0
        %2199 = vmatprep.subr.bf16.mxu0 0
        %2200 = vmatpush1.bf16.msra.mxu0 0
        %2201 = vmatprep.subr.bf16.mxu0 0
        %2202 = vmatpush1.bf16.msra.mxu0 0
        %2203 = vmatprep.subr.bf16.mxu0 0
        %2204 = vmatpush1.bf16.msra.mxu0 0
        %2205 = vmatprep.subr.bf16.mxu0 0
        %2206 = vmatpush1.bf16.msra.mxu0 0
        %2207 = vmatprep.subr.bf16.mxu0 0
        %2208 = vmatpush1.bf16.msra.mxu0 0
        %2209 = vmatprep.subr.bf16.mxu0 0
        %2210 = vmatpush1.bf16.msra.mxu0 %v2193
        %2211 = vmatprep.subr.bf16.mxu0 0
        %2212 = vmatpush2.bf16.msra.mxu0 0
        %2213 = vmatprep.subr.bf16.mxu0 0
        %2214 = vmatpush2.bf16.msra.mxu0 0
        %2215 = vmatprep.subr.bf16.mxu0 0
        %2216 = vmatpush2.bf16.msra.mxu0 0
        %2217 = vmatprep.subr.bf16.mxu0 0
        %2218 = vmatpush2.bf16.msra.mxu0 0
        %2219 = vmatprep.subr.bf16.mxu0 0
        %2220 = vmatpush2.bf16.msra.mxu0 0
        %2221 = vmatprep.subr.bf16.mxu0 0
        %2222 = vmatpush2.bf16.msra.mxu0 0
        %2223 = vmatprep.subr.bf16.mxu0 0
        %2224 = vmatpush2.bf16.msra.mxu0 0
        %2225 = vmatprep.subr.bf16.mxu0 0
        %2226 = vmatpush2.bf16.msra.mxu0 0
        %2227 = vmatprep.mubr.bf16.mxu0 0
        %2228 = vmatmul.mubr.bf16.gmra.mxu0 %v2190
        %v2229 = vpop.f32.mrf.mxu0
        %v2230 = vadd.f32 0.0, %v2229
        %v2231 = vpop.f32.mrf.mxu0
        %v2232 = vpop.f32.mrf.mxu0
        %v2233 = vpop.f32.mrf.mxu0
        %2234 = vdwg.mxu0
        %v2236 = vsel %vm1539, %v2001, 0
        %v2239 = vsel %vm2007, %v1536, 0
        %2241 = vmatprep.subr.bf16.mxu0 0
        %2242 = vmatpush1.bf16.msra.mxu0 0
        %2243 = vmatprep.subr.bf16.mxu0 0
        %2244 = vmatpush1.bf16.msra.mxu0 0
        %2245 = vmatprep.subr.bf16.mxu0 0
        %2246 = vmatpush1.bf16.msra.mxu0 0
        %2247 = vmatprep.subr.bf16.mxu0 0
        %2248 = vmatpush1.bf16.msra.mxu0 0
        %2249 = vmatprep.subr.bf16.mxu0 0
        %2250 = vmatpush1.bf16.msra.mxu0 0
        %2251 = vmatprep.subr.bf16.mxu0 0
        %2252 = vmatpush1.bf16.msra.mxu0 0
        %2253 = vmatprep.subr.bf16.mxu0 0
        %2254 = vmatpush1.bf16.msra.mxu0 0
        %2255 = vmatprep.subr.bf16.mxu0 0
        %2256 = vmatpush1.bf16.msra.mxu0 %v2239
        %2257 = vmatprep.subr.bf16.mxu0 0
        %2258 = vmatpush2.bf16.msra.mxu0 0
        %2259 = vmatprep.subr.bf16.mxu0 0
        %2260 = vmatpush2.bf16.msra.mxu0 0
        %2261 = vmatprep.subr.bf16.mxu0 0
        %2262 = vmatpush2.bf16.msra.mxu0 0
        %2263 = vmatprep.subr.bf16.mxu0 0
        %2264 = vmatpush2.bf16.msra.mxu0 0
        %2265 = vmatprep.subr.bf16.mxu0 0
        %2266 = vmatpush2.bf16.msra.mxu0 0
        %2267 = vmatprep.subr.bf16.mxu0 0
        %2268 = vmatpush2.bf16.msra.mxu0 0
        %2269 = vmatprep.subr.bf16.mxu0 0
        %2270 = vmatpush2.bf16.msra.mxu0 0
        %2271 = vmatprep.subr.bf16.mxu0 0
        %2272 = vmatpush2.bf16.msra.mxu0 0
        %2273 = vmatprep.mubr.bf16.mxu0 0
        %2274 = vmatmul.mubr.bf16.gmra.mxu0 %v2236
        %v2275 = vpop.f32.mrf.mxu0
        %v2276 = vadd.f32 0.0, %v2275
        %v2277 = vpop.f32.mrf.mxu0
        %v2278 = vpop.f32.mrf.mxu0
        %v2279 = vpop.f32.mrf.mxu0
        %2280 = vdwg.mxu0
        %v2282 = vsel %vm1539, %v2002, 0
        %v2285 = vsel %vm2007, %v1537, 0
        %2287 = vmatprep.subr.bf16.mxu0 0
        %2288 = vmatpush1.bf16.msra.mxu0 0
        %2289 = vmatprep.subr.bf16.mxu0 0
        %2290 = vmatpush1.bf16.msra.mxu0 0
        %2291 = vmatprep.subr.bf16.mxu0 0
        %2292 = vmatpush1.bf16.msra.mxu0 0
        %2293 = vmatprep.subr.bf16.mxu0 0
        %2294 = vmatpush1.bf16.msra.mxu0 0
        %2295 = vmatprep.subr.bf16.mxu0 0
        %2296 = vmatpush1.bf16.msra.mxu0 0
        %2297 = vmatprep.subr.bf16.mxu0 0
        %2298 = vmatpush1.bf16.msra.mxu0 0
        %2299 = vmatprep.subr.bf16.mxu0 0
        %2300 = vmatpush1.bf16.msra.mxu0 0
        %2301 = vmatprep.subr.bf16.mxu0 0
        %2302 = vmatpush1.bf16.msra.mxu0 %v2285
        %2303 = vmatprep.subr.bf16.mxu0 0
        %2304 = vmatpush2.bf16.msra.mxu0 0
        %2305 = vmatprep.subr.bf16.mxu0 0
        %2306 = vmatpush2.bf16.msra.mxu0 0
        %2307 = vmatprep.subr.bf16.mxu0 0
        %2308 = vmatpush2.bf16.msra.mxu0 0
        %2309 = vmatprep.subr.bf16.mxu0 0
        %2310 = vmatpush2.bf16.msra.mxu0 0
        %2311 = vmatprep.subr.bf16.mxu0 0
        %2312 = vmatpush2.bf16.msra.mxu0 0
        %2313 = vmatprep.subr.bf16.mxu0 0
        %2314 = vmatpush2.bf16.msra.mxu0 0
        %2315 = vmatprep.subr.bf16.mxu0 0
        %2316 = vmatpush2.bf16.msra.mxu0 0
        %2317 = vmatprep.subr.bf16.mxu0 0
        %2318 = vmatpush2.bf16.msra.mxu0 0
        %2319 = vmatprep.mubr.bf16.mxu0 0
        %2320 = vmatmul.mubr.bf16.gmra.mxu0 %v2282
        %v2321 = vpop.f32.mrf.mxu0
        %v2322 = vadd.f32 0.0, %v2321
        %v2323 = vpop.f32.mrf.mxu0
        %v2324 = vpop.f32.mrf.mxu0
        %v2325 = vpop.f32.mrf.mxu0
        %2326 = vdwg.mxu0
        %v2328 = vsel %vm1539, %v2003, 0
        %v2331 = vsel %vm2007, %v1538, 0
        %2333 = vmatprep.subr.bf16.mxu0 0
        %2334 = vmatpush1.bf16.msra.mxu0 0
        %2335 = vmatprep.subr.bf16.mxu0 0
        %2336 = vmatpush1.bf16.msra.mxu0 0
        %2337 = vmatprep.subr.bf16.mxu0 0
        %2338 = vmatpush1.bf16.msra.mxu0 0
        %2339 = vmatprep.subr.bf16.mxu0 0
        %2340 = vmatpush1.bf16.msra.mxu0 0
        %2341 = vmatprep.subr.bf16.mxu0 0
        %2342 = vmatpush1.bf16.msra.mxu0 0
        %2343 = vmatprep.subr.bf16.mxu0 0
        %2344 = vmatpush1.bf16.msra.mxu0 0
        %2345 = vmatprep.subr.bf16.mxu0 0
        %2346 = vmatpush1.bf16.msra.mxu0 0
        %2347 = vmatprep.subr.bf16.mxu0 0
        %2348 = vmatpush1.bf16.msra.mxu0 %v2331
        %2349 = vmatprep.subr.bf16.mxu0 0
        %2350 = vmatpush2.bf16.msra.mxu0 0
        %2351 = vmatprep.subr.bf16.mxu0 0
        %2352 = vmatpush2.bf16.msra.mxu0 0
        %2353 = vmatprep.subr.bf16.mxu0 0
        %2354 = vmatpush2.bf16.msra.mxu0 0
        %2355 = vmatprep.subr.bf16.mxu0 0
        %2356 = vmatpush2.bf16.msra.mxu0 0
        %2357 = vmatprep.subr.bf16.mxu0 0
        %2358 = vmatpush2.bf16.msra.mxu0 0
        %2359 = vmatprep.subr.bf16.mxu0 0
        %2360 = vmatpush2.bf16.msra.mxu0 0
        %2361 = vmatprep.subr.bf16.mxu0 0
        %2362 = vmatpush2.bf16.msra.mxu0 0
        %2363 = vmatprep.subr.bf16.mxu0 0
        %2364 = vmatpush2.bf16.msra.mxu0 0
        %2365 = vmatprep.mubr.bf16.mxu0 0
        %2366 = vmatmul.mubr.bf16.gmra.mxu0 %v2328
        %v2367 = vpop.f32.mrf.mxu0
        %v2368 = vadd.f32 0.0, %v2367
        %v2369 = vpop.f32.mrf.mxu0
        %v2370 = vpop.f32.mrf.mxu0
        %v2371 = vpop.f32.mrf.mxu0
        %2372 = vdwg.mxu0
        %v2373 = vcombine.low %v2046, %v2138
        %v2374 = vcombine.high %v2046, %v2138
        %v2376 = vunpack.c.l.s4 1983009808
        %v2377 = vunpack.c.0.s8 %v2376
        %v2378 = vlaneseq
        %v2379 = vshrl.u32 %v2378, 7
        %v2380 = vsub.s32 %v2377, %v2379
        %v2381 = vrot.slane %v2373, %v2380
        %v2383 = vunpack.c.l.s4 1983009808
        %v2384 = vunpack.c.0.s8 %v2383
        %v2385 = vlaneseq
        %v2386 = vshrl.u32 %v2385, 7
        %v2387 = vsub.s32 %v2384, %v2386
        %v2388 = vrot.slane %v2374, %v2387
        %v2389 = vcombine.low %v2092, %v2184
        %v2390 = vcombine.high %v2092, %v2184
        %v2392 = vunpack.c.l.s4 1983009808
        %v2393 = vunpack.c.0.s8 %v2392
        %v2394 = vlaneseq
        %v2395 = vshrl.u32 %v2394, 7
        %v2396 = vsub.s32 %v2393, %v2395
        %v2397 = vrot.slane %v2389, %v2396
        %v2399 = vunpack.c.l.s4 1983009808
        %v2400 = vunpack.c.0.s8 %v2399
        %v2401 = vlaneseq
        %v2402 = vshrl.u32 %v2401, 7
        %v2403 = vsub.s32 %v2400, %v2402
        %v2404 = vrot.slane %v2390, %v2403
        %v2405 = vcombine.low %v2381, %v2397
        %v2406 = vcombine.high %v2381, %v2397
        %v2408 = vunpack.c.l.s4 1934713408
        %v2409 = vunpack.c.0.s8 %v2408
        %v2410 = vlaneseq
        %v2411 = vshrl.u32 %v2410, 7
        %v2412 = vsub.s32 %v2409, %v2411
        %v2413 = vrot.slane %v2405, %v2412
        %v2415 = vunpack.c.l.s4 1934713408
        %v2416 = vunpack.c.0.s8 %v2415
        %v2417 = vlaneseq
        %v2418 = vshrl.u32 %v2417, 7
        %v2419 = vsub.s32 %v2416, %v2418
        %v2420 = vrot.slane %v2406, %v2419
        %v2421 = vcombine.low %v2388, %v2404
        %v2422 = vcombine.high %v2388, %v2404
        %v2424 = vunpack.c.l.s4 1934713408
        %v2425 = vunpack.c.0.s8 %v2424
        %v2426 = vlaneseq
        %v2427 = vshrl.u32 %v2426, 7
        %v2428 = vsub.s32 %v2425, %v2427
        %v2429 = vrot.slane %v2421, %v2428
        %v2431 = vunpack.c.l.s4 1934713408
        %v2432 = vunpack.c.0.s8 %v2431
        %v2433 = vlaneseq
        %v2434 = vshrl.u32 %v2433, 7
        %v2435 = vsub.s32 %v2432, %v2434
        %v2436 = vrot.slane %v2422, %v2435
        %v2437 = vcombine.high %v2413, 0.0
        %v2438 = vcombine.high %v2420, 0.0
        %v2439 = vcombine.high %v2429, 0.0
        %v2440 = vcombine.high %v2436, 0.0
        %v2441 = vcombine.low %v2230, %v2322
        %v2442 = vcombine.high %v2230, %v2322
        %v2444 = vunpack.c.l.s4 1983009808
        %v2445 = vunpack.c.0.s8 %v2444
        %v2446 = vlaneseq
        %v2447 = vshrl.u32 %v2446, 7
        %v2448 = vsub.s32 %v2445, %v2447
        %v2449 = vrot.slane %v2441, %v2448
        %v2451 = vunpack.c.l.s4 1983009808
        %v2452 = vunpack.c.0.s8 %v2451
        %v2453 = vlaneseq
        %v2454 = vshrl.u32 %v2453, 7
        %v2455 = vsub.s32 %v2452, %v2454
        %v2456 = vrot.slane %v2442, %v2455
        %v2457 = vcombine.low %v2276, %v2368
        %v2458 = vcombine.high %v2276, %v2368
        %v2460 = vunpack.c.l.s4 1983009808
        %v2461 = vunpack.c.0.s8 %v2460
        %v2462 = vlaneseq
        %v2463 = vshrl.u32 %v2462, 7
        %v2464 = vsub.s32 %v2461, %v2463
        %v2465 = vrot.slane %v2457, %v2464
        %v2467 = vunpack.c.l.s4 1983009808
        %v2468 = vunpack.c.0.s8 %v2467
        %v2469 = vlaneseq
        %v2470 = vshrl.u32 %v2469, 7
        %v2471 = vsub.s32 %v2468, %v2470
        %v2472 = vrot.slane %v2458, %v2471
        %v2473 = vcombine.low %v2449, %v2465
        %v2474 = vcombine.high %v2449, %v2465
        %v2476 = vunpack.c.l.s4 1934713408
        %v2477 = vunpack.c.0.s8 %v2476
        %v2478 = vlaneseq
        %v2479 = vshrl.u32 %v2478, 7
        %v2480 = vsub.s32 %v2477, %v2479
        %v2481 = vrot.slane %v2473, %v2480
        %v2483 = vunpack.c.l.s4 1934713408
        %v2484 = vunpack.c.0.s8 %v2483
        %v2485 = vlaneseq
        %v2486 = vshrl.u32 %v2485, 7
        %v2487 = vsub.s32 %v2484, %v2486
        %v2488 = vrot.slane %v2474, %v2487
        %v2489 = vcombine.low %v2456, %v2472
        %v2490 = vcombine.high %v2456, %v2472
        %v2492 = vunpack.c.l.s4 1934713408
        %v2493 = vunpack.c.0.s8 %v2492
        %v2494 = vlaneseq
        %v2495 = vshrl.u32 %v2494, 7
        %v2496 = vsub.s32 %v2493, %v2495
        %v2497 = vrot.slane %v2489, %v2496
        %v2499 = vunpack.c.l.s4 1934713408
        %v2500 = vunpack.c.0.s8 %v2499
        %v2501 = vlaneseq
        %v2502 = vshrl.u32 %v2501, 7
        %v2503 = vsub.s32 %v2500, %v2502
        %v2504 = vrot.slane %v2490, %v2503
        %v2505 = vcombine.high %v2481, 0.0
        %v2506 = vcombine.high %v2488, 0.0
        %v2507 = vcombine.high %v2497, 0.0
        %v2508 = vcombine.high %v2504, 0.0
        %v2509 = vcombine.low %v2413, %v2420
        %v2511 = vunpack.c.l.s4 1983009808
        %v2512 = vunpack.c.0.s8 %v2511
        %v2513 = vlaneseq
        %v2514 = vshrl.u32 %v2513, 7
        %v2515 = vsub.s32 %v2512, %v2514
        %v2516 = vrot.slane %v2509, %v2515
        %v2517 = vcombine.low %v2437, %v2438
        %v2519 = vunpack.c.l.s4 1983009808
        %v2520 = vunpack.c.0.s8 %v2519
        %v2521 = vlaneseq
        %v2522 = vshrl.u32 %v2521, 7
        %v2523 = vsub.s32 %v2520, %v2522
        %v2524 = vrot.slane %v2517, %v2523
        %v2525 = vcombine.low %v2429, %v2436
        %v2527 = vunpack.c.l.s4 1983009808
        %v2528 = vunpack.c.0.s8 %v2527
        %v2529 = vlaneseq
        %v2530 = vshrl.u32 %v2529, 7
        %v2531 = vsub.s32 %v2528, %v2530
        %v2532 = vrot.slane %v2525, %v2531
        %v2533 = vcombine.low %v2439, %v2440
        %v2535 = vunpack.c.l.s4 1983009808
        %v2536 = vunpack.c.0.s8 %v2535
        %v2537 = vlaneseq
        %v2538 = vshrl.u32 %v2537, 7
        %v2539 = vsub.s32 %v2536, %v2538
        %v2540 = vrot.slane %v2533, %v2539
        %v2541 = vcombine.low %v2516, %v2524
        %v2542 = vcombine.high %v2516, %v2524
        %v2544 = vunpack.c.l.s4 1934713408
        %v2545 = vunpack.c.0.s8 %v2544
        %v2546 = vlaneseq
        %v2547 = vshrl.u32 %v2546, 7
        %v2548 = vsub.s32 %v2545, %v2547
        %v2549 = vrot.slane %v2541, %v2548
        %v2551 = vunpack.c.l.s4 1934713408
        %v2552 = vunpack.c.0.s8 %v2551
        %v2553 = vlaneseq
        %v2554 = vshrl.u32 %v2553, 7
        %v2555 = vsub.s32 %v2552, %v2554
        %v2556 = vrot.slane %v2542, %v2555
        %v2557 = vcombine.low %v2532, %v2540
        %v2558 = vcombine.high %v2532, %v2540
        %v2560 = vunpack.c.l.s4 1934713408
        %v2561 = vunpack.c.0.s8 %v2560
        %v2562 = vlaneseq
        %v2563 = vshrl.u32 %v2562, 7
        %v2564 = vsub.s32 %v2561, %v2563
        %v2565 = vrot.slane %v2557, %v2564
        %v2567 = vunpack.c.l.s4 1934713408
        %v2568 = vunpack.c.0.s8 %v2567
        %v2569 = vlaneseq
        %v2570 = vshrl.u32 %v2569, 7
        %v2571 = vsub.s32 %v2568, %v2570
        %v2572 = vrot.slane %v2558, %v2571
        %v2573 = vcombine.low %v2549, %v2565
        %v2574 = vcombine.high %v2549, %v2565
        %v2575 = vcombine.low %v2556, %v2572
        %v2576 = vcombine.high %v2556, %v2572
        %v2577 = vcombine.low %v2481, %v2488
        %v2579 = vunpack.c.l.s4 1983009808
        %v2580 = vunpack.c.0.s8 %v2579
        %v2581 = vlaneseq
        %v2582 = vshrl.u32 %v2581, 7
        %v2583 = vsub.s32 %v2580, %v2582
        %v2584 = vrot.slane %v2577, %v2583
        %v2585 = vcombine.low %v2505, %v2506
        %v2587 = vunpack.c.l.s4 1983009808
        %v2588 = vunpack.c.0.s8 %v2587
        %v2589 = vlaneseq
        %v2590 = vshrl.u32 %v2589, 7
        %v2591 = vsub.s32 %v2588, %v2590
        %v2592 = vrot.slane %v2585, %v2591
        %v2593 = vcombine.low %v2497, %v2504
        %v2595 = vunpack.c.l.s4 1983009808
        %v2596 = vunpack.c.0.s8 %v2595
        %v2597 = vlaneseq
        %v2598 = vshrl.u32 %v2597, 7
        %v2599 = vsub.s32 %v2596, %v2598
        %v2600 = vrot.slane %v2593, %v2599
        %v2601 = vcombine.low %v2507, %v2508
        %v2603 = vunpack.c.l.s4 1983009808
        %v2604 = vunpack.c.0.s8 %v2603
        %v2605 = vlaneseq
        %v2606 = vshrl.u32 %v2605, 7
        %v2607 = vsub.s32 %v2604, %v2606
        %v2608 = vrot.slane %v2601, %v2607
        %v2609 = vcombine.low %v2584, %v2592
        %v2610 = vcombine.high %v2584, %v2592
        %v2612 = vunpack.c.l.s4 1934713408
        %v2613 = vunpack.c.0.s8 %v2612
        %v2614 = vlaneseq
        %v2615 = vshrl.u32 %v2614, 7
        %v2616 = vsub.s32 %v2613, %v2615
        %v2617 = vrot.slane %v2609, %v2616
        %v2619 = vunpack.c.l.s4 1934713408
        %v2620 = vunpack.c.0.s8 %v2619
        %v2621 = vlaneseq
        %v2622 = vshrl.u32 %v2621, 7
        %v2623 = vsub.s32 %v2620, %v2622
        %v2624 = vrot.slane %v2610, %v2623
        %v2625 = vcombine.low %v2600, %v2608
        %v2626 = vcombine.high %v2600, %v2608
        %v2628 = vunpack.c.l.s4 1934713408
        %v2629 = vunpack.c.0.s8 %v2628
        %v2630 = vlaneseq
        %v2631 = vshrl.u32 %v2630, 7
        %v2632 = vsub.s32 %v2629, %v2631
        %v2633 = vrot.slane %v2625, %v2632
        %v2635 = vunpack.c.l.s4 1934713408
        %v2636 = vunpack.c.0.s8 %v2635
        %v2637 = vlaneseq
        %v2638 = vshrl.u32 %v2637, 7
        %v2639 = vsub.s32 %v2636, %v2638
        %v2640 = vrot.slane %v2626, %v2639
        %v2641 = vcombine.low %v2617, %v2633
        %v2642 = vcombine.high %v2617, %v2633
        %v2643 = vcombine.low %v2624, %v2640
        %v2644 = vcombine.high %v2624, %v2640
        %2647 = vrot.lane.b32.xlu0 %v2574, 8
        %v2648 = vpop.permute.xlu0 %2647
        %2649 = vrot.lane.b32.xlu0 %v2642, 8
        %v2650 = vpop.permute.xlu0 %2649
        %2655 = vrot.lane.b32.xlu0 %v2575, 16
        %v2656 = vpop.permute.xlu0 %2655
        %2657 = vrot.lane.b32.xlu0 %v2643, 16
        %v2658 = vpop.permute.xlu0 %2657
        %2663 = vrot.lane.b32.xlu0 %v2576, 24
        %v2664 = vpop.permute.xlu0 %2663
        %2665 = vrot.lane.b32.xlu0 %v2644, 24
        %v2666 = vpop.permute.xlu0 %2665
        %v2669 = vsel %vm1539, %v2573, %v2648
        %v2670 = vsel %vm1539, %v2641, %v2650
        %vm2671 = vcmask 130048
        %v2672 = vsel %vm2671, %v2669, %v2656
        %v2673 = vsel %vm2671, %v2670, %v2658
        %vm2674 = vcmask 195584
        %v2675 = vsel %vm2674, %v2672, %v2664
        %v2676 = vsel %vm2674, %v2673, %v2666
        %v2677 = vpack.c.bf16 %v2676, %v2675
        %v2678 = vld [vmem:[%s470] sm:$0xf]
        %v2679 = vld [vmem:[%s470 + $0x4] sm:$0xf]
        %v2680 = vld [vmem:[%s470 + $0x8] sm:$0xf]
        %v2681 = vld [vmem:[%s470 + $0xc] sm:$0xf]
        %v2682 = vlaneseq
        %v2683 = vshrl.u32 %v2682, 7
        %v2684 = vsub.s32 2, %v2683
        %v2685 = vrot.slane %v503, %v2684
        %v2690 = vunpack.c.l.b16 %v2678
        %v2691 = vunpack.c.l.b16 %v2679
        %v2692 = vunpack.c.l.b16 %v2680
        %v2693 = vunpack.c.l.b16 %v2681
        %v2694 = vpack.c.b16 %v2691, %v2690
        %v2695 = vpack.c.b16 %v2693, %v2692
        %v2699 = vsel %vm526, %v2677, 0
        %2701 = vmatprep.subr.bf16.mxu0 0
        %2702 = vmatpush1.bf16.msra.mxu0 0
        %2703 = vmatprep.subr.bf16.mxu0 0
        %2704 = vmatpush1.bf16.msra.mxu0 0
        %2705 = vmatprep.subr.bf16.mxu0 0
        %2706 = vmatpush1.bf16.msra.mxu0 0
        %2707 = vmatprep.subr.bf16.mxu0 0
        %2708 = vmatpush1.bf16.msra.mxu0 0
        %2709 = vmatprep.subr.bf16.mxu0 0
        %2710 = vmatpush1.bf16.msra.mxu0 0
        %2711 = vmatprep.subr.bf16.mxu0 0
        %2712 = vmatpush1.bf16.msra.mxu0 0
        %2713 = vmatprep.subr.bf16.mxu0 0
        %2714 = vmatpush1.bf16.msra.mxu0 %v2695
        %2715 = vmatprep.subr.bf16.mxu0 0
        %2716 = vmatpush1.bf16.msra.mxu0 %v2694
        %2717 = vmatprep.subr.bf16.mxu0 0
        %2718 = vmatpush2.bf16.msra.mxu0 0
        %2719 = vmatprep.subr.bf16.mxu0 0
        %2720 = vmatpush2.bf16.msra.mxu0 0
        %2721 = vmatprep.subr.bf16.mxu0 0
        %2722 = vmatpush2.bf16.msra.mxu0 0
        %2723 = vmatprep.subr.bf16.mxu0 0
        %2724 = vmatpush2.bf16.msra.mxu0 0
        %2725 = vmatprep.subr.bf16.mxu0 0
        %2726 = vmatpush2.bf16.msra.mxu0 0
        %2727 = vmatprep.subr.bf16.mxu0 0
        %2728 = vmatpush2.bf16.msra.mxu0 0
        %2729 = vmatprep.subr.bf16.mxu0 0
        %2730 = vmatpush2.bf16.msra.mxu0 0
        %2731 = vmatprep.subr.bf16.mxu0 0
        %2732 = vmatpush2.bf16.msra.mxu0 0
        %2733 = vmatprep.mubr.bf16.mxu0 0
        %2734 = vmatmul.mubr.bf16.gmra.mxu0 %v2699
        %v2735 = vpop.f32.mrf.mxu0
        %v2736 = vadd.f32 %v2685, %v2735
        %v2737 = vpop.f32.mrf.mxu0
        %v2738 = vpop.f32.mrf.mxu0
        %v2739 = vadd.f32 %v2685, %v2738
        %v2740 = vpop.f32.mrf.mxu0
        %2741 = vdwg.mxu0
        %v2742 = vadd.f32 %v2736, %v498
        %v2743 = vadd.f32 %v2739, %v499
        %v2744 = vsel %vm526, %v2742, 0.0
        %2745 = vadd.xlane.f32.xlu0 %v2744
        %v2746 = vpop.xlane.xlu0 %2745
        %v2747 = vsel %vm526, %v2743, 0.0
        %2748 = vadd.xlane.f32.xlu0 %v2747
        %v2749 = vpop.xlane.xlu0 %2748
        %v2750 = vrcp.pop 32.0
        %v2751 = vmul.f32 %v2746, %v2750
        %v2752 = vmul.f32 %v2749, %v2750
        %v2753 = vsub.f32 %v2742, %v2751
        %v2754 = vsub.f32 %v2743, %v2752
        %v2755 = vmul.f32 %v2753, %v2753
        %v2756 = vmul.f32 %v2754, %v2754
        %v2757 = vsel %vm526, %v2755, 0.0
        %2758 = vadd.xlane.f32.xlu0 %v2757
        %v2759 = vpop.xlane.xlu0 %2758
        %v2760 = vsel %vm526, %v2756, 0.0
        %2761 = vadd.xlane.f32.xlu0 %v2760
        %v2762 = vpop.xlane.xlu0 %2761
        %v2763 = vmul.f32 %v2759, %v2750
        %v2764 = vmul.f32 %v2762, %v2750
        %v2765 = vadd.f32 %v2763, 1e-05
        %v2766 = vadd.f32 %v2764, 1e-05
        %v2767 = vrsqrt.pop %v2765
        %v2768 = vrsqrt.pop %v2766
        %v2769 = vmul.f32 %v2753, %v2767
        %v2770 = vmul.f32 %v2754, %v2768
        %v2771 = vlaneseq
        %v2772 = vshrl.u32 %v2771, 7
        %v2773 = vsub.s32 3, %v2772
        %v2774 = vrot.slane %v503, %v2773
        %v2775 = vmul.f32 %v2769, %v2774
        %v2776 = vmul.f32 %v2770, %v2774
        %v2777 = vlaneseq
        %v2778 = vshrl.u32 %v2777, 7
        %v2779 = vsub.s32 4, %v2778
        %v2780 = vrot.slane %v503, %v2779
        %v2781 = vadd.f32 %v2775, %v2780
        %v2782 = vadd.f32 %v2776, %v2780
        %v2783 = vpack.c.bf16 %v2782, %v2781
        %v2784 = vld [vmem:[%s475] sm:$0xf]
        %v2785 = vld [vmem:[%s475 + $0x4] sm:$0xf]
        %v2786 = vld [vmem:[%s475 + $0x8] sm:$0xf]
        %v2787 = vld [vmem:[%s475 + $0xc] sm:$0xf]
        %v2788 = vlaneseq
        %v2789 = vshrl.u32 %v2788, 7
        %v2790 = vsub.s32 7, %v2789
        %v2791 = vrot.slane %v503, %v2790
        %v2796 = vunpack.c.l.b16 %v2784
        %v2797 = vunpack.c.l.b16 %v2785
        %v2798 = vunpack.c.l.b16 %v2786
        %v2799 = vunpack.c.l.b16 %v2787
        %v2800 = vpack.c.b16 %v2797, %v2796
        %v2801 = vpack.c.b16 %v2799, %v2798
        %v2805 = vsel %vm526, %v2783, 0
        %2807 = vmatprep.subr.bf16.mxu0 0
        %2808 = vmatpush1.bf16.msra.mxu0 0
        %2809 = vmatprep.subr.bf16.mxu0 0
        %2810 = vmatpush1.bf16.msra.mxu0 0
        %2811 = vmatprep.subr.bf16.mxu0 0
        %2812 = vmatpush1.bf16.msra.mxu0 0
        %2813 = vmatprep.subr.bf16.mxu0 0
        %2814 = vmatpush1.bf16.msra.mxu0 0
        %2815 = vmatprep.subr.bf16.mxu0 0
        %2816 = vmatpush1.bf16.msra.mxu0 0
        %2817 = vmatprep.subr.bf16.mxu0 0
        %2818 = vmatpush1.bf16.msra.mxu0 0
        %2819 = vmatprep.subr.bf16.mxu0 0
        %2820 = vmatpush1.bf16.msra.mxu0 %v2801
        %2821 = vmatprep.subr.bf16.mxu0 0
        %2822 = vmatpush1.bf16.msra.mxu0 %v2800
        %2823 = vmatprep.subr.bf16.mxu0 0
        %2824 = vmatpush2.bf16.msra.mxu0 0
        %2825 = vmatprep.subr.bf16.mxu0 0
        %2826 = vmatpush2.bf16.msra.mxu0 0
        %2827 = vmatprep.subr.bf16.mxu0 0
        %2828 = vmatpush2.bf16.msra.mxu0 0
        %2829 = vmatprep.subr.bf16.mxu0 0
        %2830 = vmatpush2.bf16.msra.mxu0 0
        %2831 = vmatprep.subr.bf16.mxu0 0
        %2832 = vmatpush2.bf16.msra.mxu0 0
        %2833 = vmatprep.subr.bf16.mxu0 0
        %2834 = vmatpush2.bf16.msra.mxu0 0
        %2835 = vmatprep.subr.bf16.mxu0 0
        %2836 = vmatpush2.bf16.msra.mxu0 0
        %2837 = vmatprep.subr.bf16.mxu0 0
        %2838 = vmatpush2.bf16.msra.mxu0 0
        %2839 = vmatprep.mubr.bf16.mxu0 0
        %2840 = vmatmul.mubr.bf16.gmra.mxu0 %v2805
        %v2841 = vpop.f32.mrf.mxu0
        %v2842 = vadd.f32 %v2791, %v2841
        %v2843 = vpop.f32.mrf.mxu0
        %v2844 = vpop.f32.mrf.mxu0
        %v2845 = vadd.f32 %v2791, %v2844
        %v2846 = vpop.f32.mrf.mxu0
        %2847 = vdwg.mxu0
        %v2848 = vmax.f32 %v2842, 0.0
        %v2849 = vmax.f32 %v2845, 0.0
        %v2850 = vpack.c.bf16 %v2849, %v2848
        %v2851 = vld [vmem:[%s480] sm:$0xf]
        %v2852 = vld [vmem:[%s480 + $0x4] sm:$0xf]
        %v2853 = vld [vmem:[%s480 + $0x8] sm:$0xf]
        %v2854 = vld [vmem:[%s480 + $0xc] sm:$0xf]
        %v2855 = vld [vmem:[%s480 + $0x10] sm:$0xf]
        %v2856 = vld [vmem:[%s480 + $0x14] sm:$0xf]
        %v2857 = vld [vmem:[%s480 + $0x18] sm:$0xf]
        %v2858 = vld [vmem:[%s480 + $0x1c] sm:$0xf]
        %v2859 = vlaneseq
        %v2860 = vshrl.u32 %v2859, 7
        %v2861 = vsub.s32 0, %v2860
        %v2862 = vrot.slane %v504, %v2861
        %v2871 = vunpack.c.l.b16 %v2851
        %v2872 = vunpack.c.l.b16 %v2852
        %v2873 = vunpack.c.l.b16 %v2853
        %v2874 = vunpack.c.l.b16 %v2854
        %v2875 = vunpack.c.l.b16 %v2855
        %v2876 = vunpack.c.l.b16 %v2856
        %v2877 = vunpack.c.l.b16 %v2857
        %v2878 = vunpack.c.l.b16 %v2858
        %v2879 = vpack.c.b16 %v2872, %v2871
        %v2880 = vpack.c.b16 %v2874, %v2873
        %v2881 = vpack.c.b16 %v2876, %v2875
        %v2882 = vpack.c.b16 %v2878, %v2877
        %vm2887 = vcmask 523264
        %v2889 = vsel %vm2887, %v2850, 0
        %2891 = vmatprep.subr.bf16.mxu0 0
        %2892 = vmatpush1.bf16.msra.mxu0 0
        %2893 = vmatprep.subr.bf16.mxu0 0
        %2894 = vmatpush1.bf16.msra.mxu0 0
        %2895 = vmatprep.subr.bf16.mxu0 0
        %2896 = vmatpush1.bf16.msra.mxu0 0
        %2897 = vmatprep.subr.bf16.mxu0 0
        %2898 = vmatpush1.bf16.msra.mxu0 0
        %2899 = vmatprep.subr.bf16.mxu0 0
        %2900 = vmatpush1.bf16.msra.mxu0 %v2882
        %2901 = vmatprep.subr.bf16.mxu0 0
        %2902 = vmatpush1.bf16.msra.mxu0 %v2881
        %2903 = vmatprep.subr.bf16.mxu0 0
        %2904 = vmatpush1.bf16.msra.mxu0 %v2880
        %2905 = vmatprep.subr.bf16.mxu0 0
        %2906 = vmatpush1.bf16.msra.mxu0 %v2879
        %2907 = vmatprep.subr.bf16.mxu0 0
        %2908 = vmatpush2.bf16.msra.mxu0 0
        %2909 = vmatprep.subr.bf16.mxu0 0
        %2910 = vmatpush2.bf16.msra.mxu0 0
        %2911 = vmatprep.subr.bf16.mxu0 0
        %2912 = vmatpush2.bf16.msra.mxu0 0
        %2913 = vmatprep.subr.bf16.mxu0 0
        %2914 = vmatpush2.bf16.msra.mxu0 0
        %2915 = vmatprep.subr.bf16.mxu0 0
        %2916 = vmatpush2.bf16.msra.mxu0 0
        %2917 = vmatprep.subr.bf16.mxu0 0
        %2918 = vmatpush2.bf16.msra.mxu0 0
        %2919 = vmatprep.subr.bf16.mxu0 0
        %2920 = vmatpush2.bf16.msra.mxu0 0
        %2921 = vmatprep.subr.bf16.mxu0 0
        %2922 = vmatpush2.bf16.msra.mxu0 0
        %2923 = vmatprep.mubr.bf16.mxu0 0
        %2924 = vmatmul.mubr.bf16.gmra.mxu0 %v2889
        %v2925 = vpop.f32.mrf.mxu0
        %v2926 = vadd.f32 %v2862, %v2925
        %v2927 = vpop.f32.mrf.mxu0
        %v2928 = vpop.f32.mrf.mxu0
        %v2929 = vadd.f32 %v2862, %v2928
        %v2930 = vpop.f32.mrf.mxu0
        %2931 = vdwg.mxu0
        %v2932 = vadd.f32 %v2926, %v2781
        %v2933 = vadd.f32 %v2929, %v2782
        %v2934 = vsel %vm526, %v2932, 0.0
        %2935 = vadd.xlane.f32.xlu0 %v2934
        %v2936 = vpop.xlane.xlu0 %2935
        %v2937 = vsel %vm526, %v2933, 0.0
        %2938 = vadd.xlane.f32.xlu0 %v2937
        %v2939 = vpop.xlane.xlu0 %2938
        %v2940 = vmul.f32 %v2936, %v2750
        %v2941 = vmul.f32 %v2939, %v2750
        %v2942 = vsub.f32 %v2932, %v2940
        %v2943 = vsub.f32 %v2933, %v2941
        %v2944 = vmul.f32 %v2942, %v2942
        %v2945 = vmul.f32 %v2943, %v2943
        %v2946 = vsel %vm526, %v2944, 0.0
        %2947 = vadd.xlane.f32.xlu0 %v2946
        %v2948 = vpop.xlane.xlu0 %2947
        %v2949 = vsel %vm526, %v2945, 0.0
        %2950 = vadd.xlane.f32.xlu0 %v2949
        %v2951 = vpop.xlane.xlu0 %2950
        %v2952 = vmul.f32 %v2948, %v2750
        %v2953 = vmul.f32 %v2951, %v2750
        %v2954 = vadd.f32 %v2952, 1e-05
        %v2955 = vadd.f32 %v2953, 1e-05
        %v2956 = vrsqrt.pop %v2954
        %v2957 = vrsqrt.pop %v2955
        %v2958 = vmul.f32 %v2942, %v2956
        %v2959 = vmul.f32 %v2943, %v2957
        %v2960 = vlaneseq
        %v2961 = vshrl.u32 %v2960, 7
        %v2962 = vsub.s32 5, %v2961
        %v2963 = vrot.slane %v503, %v2962
        %v2964 = vmul.f32 %v2958, %v2963
        %v2965 = vmul.f32 %v2959, %v2963
        %v2966 = vlaneseq
        %v2967 = vshrl.u32 %v2966, 7
        %v2968 = vsub.s32 6, %v2967
        %v2969 = vrot.slane %v503, %v2968
        %v2970 = vadd.f32 %v2964, %v2969
        %v2971 = vadd.f32 %v2965, %v2969
        %2972 = vst.msk [vmem:[#allocation2] sm:$0xff] %vm526, %v2970
        %2973 = vst.msk [vmem:[#allocation2 + $0x8] sm:$0xff] %vm526, %v2971
        %p2974 = scmp.eq.s32.totalorder %s29, 1
        // Predicated region
        $region61: #{tpu_custom_call.1} parent=51 // pred_check
          %p2975 = pneg %p2974
        $region62: #{tpu_custom_call.1} parent=51 // pred_check_branch
          %2977 = sbr.rel (%p2975) target = $region64
        $region63: #{tpu_custom_call.1} parent=51 // pred_region
          %2978 = vst.msk [vmem:[#allocation6] sm:$0xff] %vm526, %v2970
          %2979 = vst.msk [vmem:[#allocation6 + $0x8] sm:$0xff] %vm526, %v2971
          %v2980 = vsel %vm1539, %v1981, 0.0
          %v2981 = vsel %vm1539, %v1983, 0.0
          %v2982 = vadd.f32 %v2980, %v2981
          %v2983 = vsel %vm1539, %v1985, 0.0
          %v2984 = vadd.f32 %v2982, %v2983
          %v2985 = vsel %vm1539, %v1987, 0.0
          %v2986 = vadd.f32 %v2984, %v2985
          %v2987 = vsel %vm1539, %v1989, 0.0
          %v2988 = vsel %vm1539, %v1991, 0.0
          %v2989 = vadd.f32 %v2987, %v2988
          %v2990 = vsel %vm1539, %v1993, 0.0
          %v2991 = vadd.f32 %v2989, %v2990
          %v2992 = vsel %vm1539, %v1995, 0.0
          %v2993 = vadd.f32 %v2991, %v2992
          %v2994 = vrcp.pop 4.0
          %v2995 = vmul.f32 %v2986, %v2994
          %v2996 = vmul.f32 %v2993, %v2994
          %2997 = vst.msk [vmem:[#allocation7] sm:$0xff] %vm1539, %v2995
          %2998 = vst.msk [vmem:[#allocation7 + $0x8] sm:$0xff] %vm1539, %v2996
        $region64: #{tpu_custom_call.1} parent=51 // pred_fallthru
          _
        // Predicated region
        $region65: #{tpu_custom_call.1} parent=51 // pred_check
          %p2999 = pneg %p262
        $region66: #{tpu_custom_call.1} parent=51 // pred_check_branch
          %3001 = sbr.rel (%p2999) target = $region68
        $region67: #{tpu_custom_call.1} parent=51 // pred_region
          %s3002 = smul.u32 2, %s28
          %s3004 = ssub.s32 256, 256
          %3005 = vsyncadd [#allocation5], %s3004
          %s3006 = smul.addr %s3002, 128
          %s3007 = scalar_lea.hbm %s8, %s3006
          %s3008 = sshll.u32 [#allocation6], 4
          %s3009 = int_to_ptr.vmem [resolvable:$true] %s3008
          %3014 = dma.vmem_to_hbm [thread:$0]  %s3009, 256, %s3007, [#allocation5], 128, 128, 8
        $region68: #{tpu_custom_call.1} parent=51 // pred_fallthru
          _
        // Predicated region
        $region69: #{tpu_custom_call.1} parent=51 // pred_check
          %p3015 = pneg %p288
        $region70: #{tpu_custom_call.1} parent=51 // pred_check_branch
          %3017 = sbr.rel (%p3015) target = $region72
        $region71: #{tpu_custom_call.1} parent=51 // pred_region
          %s3018 = smul.u32 2, %s28
          %s3020 = ssub.s32 256, 256
          %3021 = vsyncadd [#allocation8], %s3020
          %s3022 = smul.addr %s3018, 128
          %s3023 = scalar_lea.hbm %s9, %s3022
          %s3024 = sshll.u32 [#allocation7], 4
          %s3025 = int_to_ptr.vmem [resolvable:$true] %s3024
          %3030 = dma.vmem_to_hbm [thread:$0]  %s3025, 256, %s3023, [#allocation8], 128, 128, 8
        $region72: #{tpu_custom_call.1} parent=51 // pred_fallthru
          _
        // Predicated region
        $region73: #{tpu_custom_call.1} parent=51 // pred_check
          %p3031 = pneg %p262
        $region74: #{tpu_custom_call.1} parent=51 // pred_check_branch
          %3033 = sbr.rel (%p3031) target = $region76
        $region75: #{tpu_custom_call.1} parent=51 // pred_region
          %3034 = dma.done [#allocation5], 256
        $region76: #{tpu_custom_call.1} parent=51 // pred_fallthru
          _
        // Predicated region
        $region77: #{tpu_custom_call.1} parent=51 // pred_check
          %p3035 = pneg %p288
        $region78: #{tpu_custom_call.1} parent=51 // pred_check_branch
          %3037 = sbr.rel (%p3035) target = $region80
        $region79: #{tpu_custom_call.1} parent=51 // pred_region
          %3038 = dma.done [#allocation8], 256
        $region80: #{tpu_custom_call.1} parent=51 // pred_fallthru
          _
      $region52: #{tpu_custom_call.1} parent=5 // pred_fallthru
        _
      %p3039 = scmp.le.s32.totalorder 2, %s19
      // Predicated region
      $region81: #{tpu_custom_call.1} parent=5 // pred_check
        %p3040 = pneg %p3039
      $region82: #{tpu_custom_call.1} parent=5 // pred_check_branch
        %3042 = sbr.rel (%p3040) target = $region84
      $region83: #{tpu_custom_call.1} parent=5 // pred_region
        %s3043 = ssub.s32 %s19, 2
      $region84: #{tpu_custom_call.1} parent=5 // pred_fallthru
        _
    $region6: #{tpu_custom_call.1} parent=1 // loop_footer
      %s23 = sadd.s32 1, %s19
    $region7: #{tpu_custom_call.1} parent=1 // loop_footer_branch
      %18 = sbr.rel target = $region3
    $region8: #{tpu_custom_call.1} parent=1 // loop_exit
      _
    %3044 = vsyncpa [#allocation4], 1
    %s3045 = scalar_lea.sflag [#allocation4], 1
    %3046 = vsyncpa %s3045, 1
    %3047 = vsyncpa [#allocation5], 1
    %s3048 = scalar_lea.sflag [#allocation5], 1
    %3049 = vsyncpa %s3048, 1
    %3050 = vsyncpa [#allocation8], 1

</llo_original>
